<compile_context>
chip_gen: v6e
topology: v6e:2x2x1
jax: 0.10.0
libtpu: 0.0.40
codegen_flags: <defaults>
</compile_context>

<pallas_src>
import functools

import jax
import jax.numpy as jnp
from jax import lax
from jax.experimental import pallas as pl
from jax.experimental.pallas import tpu as pltpu


# ----------------------------- Pallas kernel --------------------------------
def _up_fused_kernel(x1_ref, x2p_ref, mh_ref, mwt_ref, w_ref, b_ref, o_ref,
                     *, matmul_dtype):
    """Fused upsample(x1) + pad + concat([x2, x1]) + 3x3 conv + bias + ReLU.

    x1_ref : (1, C1, H1, W1)      raw NCHW deep features (half resolution)
    x2p_ref: (1, H2+2, W2+2, C2)  skip features, NHWC, zero-padded by 1 (conv halo)
    mh_ref : (H2+2, H1)           fused (bilinear-up + F.pad + conv-halo) row matrix
    mwt_ref: (W1, W2+2)           transposed fused column matrix
    w_ref  : (9*Cin, Cout)        im2col conv weights (tap-major, channel-minor)
    b_ref  : (Cout, 1)            bias
    o_ref  : (1, Cout, H2*W2)     output, NCHW-flat (lane-dense store)
    """
    C1 = x1_ref.shape[1]
    Hp, Wp, C2 = x2p_ref.shape[1], x2p_ref.shape[2], x2p_ref.shape[3]
    H2, W2 = Hp - 2, Wp - 2
    cin = C1 + C2

    mh = mh_ref[...]            # (Hp, H1)
    mwt = mwt_ref[...]          # (W1, Wp)

    # ---- bilinear upsample + pad of x1, one channel plane at a time (C1 is tiny, the
    #      Python loop is statically unrolled; each plane is 2 small MXU matmuls):
    #      x1_up_pad[:, :, c] = Mh_pad @ x1[c] @ Mw_pad^T  -> (Hp, Wp) with zero halo.
    planes = []
    for c in range(C1):
        xc = x1_ref[0, c]                                                   # (H1, W1)
        uc = jnp.dot(mh, xc, preferred_element_type=jnp.float32)            # (Hp, W1)
        planes.append(jnp.dot(uc, mwt, preferred_element_type=jnp.float32))  # (Hp, Wp)

    # ---- channel concat in VMEM (no HBM materialization): [x2 channels, x1 channels]
    x_all = jnp.concatenate(
        [x2p_ref[0].astype(jnp.float32)] + [p[:, :, None] for p in planes],
        axis=-1)                                                            # (Hp, Wp, Cin)

    # ---- im2col: 9 shifted patches -> one (H2*W2, 9*Cin) matrix -> single MXU matmul.
    cols = []
    for kh in range(3):
        for kw in range(3):
            cols.append(x_all[kh:kh + H2, kw:kw + W2, :].reshape(H2 * W2, cin))
    patches = jnp.concatenate(cols, axis=-1)                                # (H2*W2, 9*Cin)

    acc = jnp.dot(patches.astype(matmul_dtype), w_ref[...].astype(matmul_dtype),
                  preferred_element_type=jnp.float32)                       # (H2*W2, Cout)

    # ---- epilogue in f32; transpose so the store is lane-dense (H2*W2 lanes) and the
    #      layout is already NCHW (Cout, H*W).
    out = jnp.maximum(acc.T + b_ref[...], 0.0)                              # (Cout, H2*W2)
    o_ref[0] = out.astype(o_ref.dtype)


# ------------------------------ host-side glue -------------------------------
def _bilinear_matrix(n_in, n_out):
    """(n_out, n_in) interpolation matrix matching PyTorch bilinear, align_corners=True.

    Always built in f32 regardless of activation dtype.
    """
    if n_in == 1:
        return jnp.ones((n_out, 1), jnp.float32)
    src = jnp.arange(n_out, dtype=jnp.float32) * (n_in - 1) / (n_out - 1)
    lo = jnp.clip(jnp.floor(src).astype(jnp.int32), 0, n_in - 2)
    frac = src - lo.astype(jnp.float32)
    rows = jnp.arange(n_out)
    m = jnp.zeros((n_out, n_in), jnp.float32)
    m = m.at[rows, lo].add(1.0 - frac)
    m = m.at[rows, lo + 1].add(frac)
    return m


def up_forward(x1_nchw, x2_nchw, weight_hwio, bias, *, matmul_dtype=jnp.float32):
    """Equivalent of Up.forward: conv(cat([x2, pad(upsample(x1))])) + ReLU, NCHW in/out.

    matmul_dtype: set to jnp.bfloat16 on v6e/v7x for ~2x MXU throughput and half the
    DMA bytes (accumulation stays f32).  Default f32 matches PyTorch numerics exactly.
    """
    N, C1, H1, W1 = x1_nchw.shape
    N2, C2, H2, W2 = x2_nchw.shape
    assert N == N2
    cin = C1 + C2
    cout = weight_hwio.shape[-1]
    diffy = H2 - 2 * H1
    diffx = W2 - 2 * W1
    assert diffy >= 0 and diffx >= 0, "x2 must be at least as large as upsampled x1"
    Hp, Wp = H2 + 2, W2 + 2

    # Fused (bilinear 2x upsample) + (F.pad centering) + (conv 'same' halo) matrices.
    mh = jnp.zeros((Hp, H1), jnp.float32)
    mh = mh.at[1 + diffy // 2: 1 + diffy // 2 + 2 * H1, :].set(_bilinear_matrix(H1, 2 * H1))
    mw = jnp.zeros((Wp, W1), jnp.float32)
    mw = mw.at[1 + diffx // 2: 1 + diffx // 2 + 2 * W1, :].set(_bilinear_matrix(W1, 2 * W1))
    mwt = mw.T                                                   # (W1, Wp)

    # x2: NCHW -> NHWC + 1px zero halo (single small pass; XLA fuses transpose+pad).
    x2p = jnp.pad(jnp.transpose(x2_nchw, (0, 2, 3, 1)),
                  ((0, 0), (1, 1), (1, 1), (0, 0)))              # (N, Hp, Wp, C2)

    w_mat = weight_hwio.reshape(9 * cin, cout)                   # tap-major, channel-minor
    b_col = bias.reshape(cout, 1)

    out_flat = pl.pallas_call(
        functools.partial(_up_fused_kernel, matmul_dtype=matmul_dtype),
        out_shape=jax.ShapeDtypeStruct((N, cout, H2 * W2), x2_nchw.dtype),
        grid_spec=pltpu.PrefetchScalarGridSpec(
            num_scalar_prefetch=0,
            grid=(N,),
            in_specs=[
                pl.BlockSpec((1, C1, H1, W1), lambda n: (n, 0, 0, 0)),
                pl.BlockSpec((1, Hp, Wp, C2), lambda n: (n, 0, 0, 0)),
                pl.BlockSpec((Hp, H1), lambda n: (0, 0)),
                pl.BlockSpec((W1, Wp), lambda n: (0, 0)),
                pl.BlockSpec((9 * cin, cout), lambda n: (0, 0)),
                pl.BlockSpec((cout, 1), lambda n: (0, 0)),
            ],
            out_specs=pl.BlockSpec((1, cout, H2 * W2), lambda n: (n, 0, 0)),
        ),
        compiler_params=pltpu.CompilerParams(
            dimension_semantics=("parallel",)),
    )(x1_nchw, x2p, mh, mwt, w_mat, b_col)

    # Free reshape: the kernel already wrote NCHW-ordered rows.
    return out_flat.reshape(N, cout, H2, W2)


# ------------------------------- Up module -----------------------------------
class UpPallas:
    """Equivalent of models/SCC_Model/Smaller.py::Up (NCHW in, NCHW out)."""

    def __init__(self, in_channels, out_channels, key, matmul_dtype=jnp.float32):
        kw, kb = jax.random.split(key)
        fan_in = in_channels * 3 * 3
        bound = 1.0 / (fan_in ** 0.5)
        # Weights stored in HWIO for the channels-last kernel math.
        self.weight = jax.random.uniform(
            kw, (3, 3, in_channels, out_channels), jnp.float32, -bound, bound)
        self.bias = jax.random.uniform(
            kb, (out_channels,), jnp.float32, -bound, bound)
        self.in_channels = in_channels
        self.out_channels = out_channels
        self.matmul_dtype = matmul_dtype

    def __call__(self, x1_nchw, x2_nchw):
        assert x1_nchw.shape[1] + x2_nchw.shape[1] == self.in_channels
        return up_forward(x1_nchw, x2_nchw, self.weight, self.bias,
                          matmul_dtype=self.matmul_dtype)


# --------------------------------- main ---------------------------------------
if __name__ == "__main__":
    key = jax.random.PRNGKey(0)
    k1, k2, kp = jax.random.split(key, 3)

    # x1 comes from a deeper layer (half spatial res), x2 is the skip connection.
    N, C1, H1, W1 = 2, 4, 8, 8
    C2, H2, W2 = 4, 16, 16
    in_channels = C1 + C2      # 8
    out_channels = 4

    x1 = jax.random.normal(k1, (N, C1, H1, W1), jnp.float32)   # NCHW
    x2 = jax.random.normal(k2, (N, C2, H2, W2), jnp.float32)   # NCHW

    up = UpPallas(in_channels, out_channels, kp)
    out = jax.block_until_ready(up(x1, x2))
    assert out.shape == (N, out_channels, H2, W2)

    # ---- independent reference path (high-precision XLA ops), same PyTorch semantics ----
    hi = lax.Precision.HIGHEST
    x1_nhwc = jnp.transpose(x1, (0, 2, 3, 1))
    x2_nhwc = jnp.transpose(x2, (0, 2, 3, 1))
    Mh = _bilinear_matrix(H1, 2 * H1)
    Mw = _bilinear_matrix(W1, 2 * W1)
    x1_up = jnp.einsum("oh,nhwc->nowc", Mh, x1_nhwc, precision=hi)
    x1_up = jnp.einsum("pw,nowc->nopc", Mw, x1_up, precision=hi)
    dy, dx = H2 - 2 * H1, W2 - 2 * W1
    x1_up = jnp.pad(x1_up, ((0, 0), (dy // 2, dy - dy // 2),
                            (dx // 2, dx - dx // 2), (0, 0)))
    x_cat = jnp.concatenate([x2_nhwc, x1_up], axis=-1)
    ref = lax.conv_general_dilated(
        x_cat, up.weight, window_strides=(1, 1), padding="SAME",
        dimension_numbers=("NHWC", "HWIO", "NHWC"), precision=hi)
    ref = jnp.maximum(ref + up.bias[None, None, None, :], 0.0)
    ref = jnp.transpose(ref, (0, 3, 1, 2))

    assert jnp.allclose(out, ref, atol=1e-4, rtol=1e-4), (
        "max abs diff = %e" % float(jnp.max(jnp.abs(out - ref))))

    print("KERNEL_OK")
</pallas_src>

<mosaic_0001>
module attributes {stable_mosaic.version = 11 : i64} {
  func.func @_up_fused_kernel(%arg0: i32, %arg1: memref<1x4x8x8xf32, #tpu.memory_space<vmem>>, %arg2: memref<1x18x18x4xf32, #tpu.memory_space<vmem>>, %arg3: memref<18x8xf32, #tpu.memory_space<vmem>>, %arg4: memref<8x18xf32, #tpu.memory_space<vmem>>, %arg5: memref<72x4xf32, #tpu.memory_space<vmem>>, %arg6: memref<4x1xf32, #tpu.memory_space<vmem>>, %arg7: memref<1x4x256xf32, #tpu.memory_space<vmem>>) attributes {dimension_semantics = [#tpu.dimension_semantics<parallel>], iteration_bounds = array<i64: 2>, scalar_prefetch = 0 : i64, scratch_operands = 0 : i64, tpu.core_type = #tpu.core_type<tc>, window_params = [{transform_indices = @transform_0, window_bounds = array<i64: 1, 4, 8, 8>}, {transform_indices = @transform_1, window_bounds = array<i64: 1, 18, 18, 4>}, {pipeline_mode = #tpu.pipeline_mode<synchronous>, transform_indices = @transform_2, window_bounds = array<i64: 18, 8>}, {pipeline_mode = #tpu.pipeline_mode<synchronous>, transform_indices = @transform_3, window_bounds = array<i64: 8, 18>}, {pipeline_mode = #tpu.pipeline_mode<synchronous>, transform_indices = @transform_4, window_bounds = array<i64: 72, 4>}, {pipeline_mode = #tpu.pipeline_mode<synchronous>, transform_indices = @transform_5, window_bounds = array<i64: 4, 1>}, {transform_indices = @transform_6, window_bounds = array<i64: 1, 4, 256>}]} {
    %c0 = arith.constant 0 : index
    %c0_0 = arith.constant 0 : index
    %0 = vector.load %arg3[%c0, %c0_0] : memref<18x8xf32, #tpu.memory_space<vmem>>, vector<18x8xf32>
    %c0_1 = arith.constant 0 : index
    %c0_2 = arith.constant 0 : index
    %1 = vector.load %arg4[%c0_1, %c0_2] : memref<8x18xf32, #tpu.memory_space<vmem>>, vector<8x18xf32>
    %c0_3 = arith.constant 0 : index
    %c0_4 = arith.constant 0 : index
    %c0_5 = arith.constant 0 : index
    %c0_6 = arith.constant 0 : index
    %2 = vector.load %arg1[%c0_3, %c0_4, %c0_5, %c0_6] : memref<1x4x8x8xf32, #tpu.memory_space<vmem>>, vector<1x1x8x8xf32>
    %3 = vector.shape_cast %2 : vector<1x1x8x8xf32> to vector<8x8xf32>
    %cst = arith.constant dense<0.000000e+00> : vector<18x8xf32>
    %4 = tpu.matmul %0, %3, %cst {dimension_numbers = #tpu.dot_dimension_numbers<[1], [0], [0], [1], [0, 0, 1, 1], [], []>} : vector<18x8xf32>, vector<8x8xf32>, vector<18x8xf32> -> vector<18x8xf32>
    %cst_7 = arith.constant dense<0.000000e+00> : vector<18x18xf32>
    %5 = tpu.matmul %4, %1, %cst_7 {dimension_numbers = #tpu.dot_dimension_numbers<[1], [0], [0], [1], [0, 0, 1, 1], [], []>} : vector<18x8xf32>, vector<8x18xf32>, vector<18x18xf32> -> vector<18x18xf32>
    %c0_8 = arith.constant 0 : index
    %c1 = arith.constant 1 : index
    %c0_9 = arith.constant 0 : index
    %c0_10 = arith.constant 0 : index
    %6 = vector.load %arg1[%c0_8, %c1, %c0_9, %c0_10] : memref<1x4x8x8xf32, #tpu.memory_space<vmem>>, vector<1x1x8x8xf32>
    %7 = vector.shape_cast %6 : vector<1x1x8x8xf32> to vector<8x8xf32>
    %cst_11 = arith.constant dense<0.000000e+00> : vector<18x8xf32>
    %8 = tpu.matmul %0, %7, %cst_11 {dimension_numbers = #tpu.dot_dimension_numbers<[1], [0], [0], [1], [0, 0, 1, 1], [], []>} : vector<18x8xf32>, vector<8x8xf32>, vector<18x8xf32> -> vector<18x8xf32>
    %cst_12 = arith.constant dense<0.000000e+00> : vector<18x18xf32>
    %9 = tpu.matmul %8, %1, %cst_12 {dimension_numbers = #tpu.dot_dimension_numbers<[1], [0], [0], [1], [0, 0, 1, 1], [], []>} : vector<18x8xf32>, vector<8x18xf32>, vector<18x18xf32> -> vector<18x18xf32>
    %c0_13 = arith.constant 0 : index
    %c2 = arith.constant 2 : index
    %c0_14 = arith.constant 0 : index
    %c0_15 = arith.constant 0 : index
    %10 = vector.load %arg1[%c0_13, %c2, %c0_14, %c0_15] : memref<1x4x8x8xf32, #tpu.memory_space<vmem>>, vector<1x1x8x8xf32>
    %11 = vector.shape_cast %10 : vector<1x1x8x8xf32> to vector<8x8xf32>
    %cst_16 = arith.constant dense<0.000000e+00> : vector<18x8xf32>
    %12 = tpu.matmul %0, %11, %cst_16 {dimension_numbers = #tpu.dot_dimension_numbers<[1], [0], [0], [1], [0, 0, 1, 1], [], []>} : vector<18x8xf32>, vector<8x8xf32>, vector<18x8xf32> -> vector<18x8xf32>
    %cst_17 = arith.constant dense<0.000000e+00> : vector<18x18xf32>
    %13 = tpu.matmul %12, %1, %cst_17 {dimension_numbers = #tpu.dot_dimension_numbers<[1], [0], [0], [1], [0, 0, 1, 1], [], []>} : vector<18x8xf32>, vector<8x18xf32>, vector<18x18xf32> -> vector<18x18xf32>
    %c0_18 = arith.constant 0 : index
    %c3 = arith.constant 3 : index
    %c0_19 = arith.constant 0 : index
    %c0_20 = arith.constant 0 : index
    %14 = vector.load %arg1[%c0_18, %c3, %c0_19, %c0_20] : memref<1x4x8x8xf32, #tpu.memory_space<vmem>>, vector<1x1x8x8xf32>
    %15 = vector.shape_cast %14 : vector<1x1x8x8xf32> to vector<8x8xf32>
    %cst_21 = arith.constant dense<0.000000e+00> : vector<18x8xf32>
    %16 = tpu.matmul %0, %15, %cst_21 {dimension_numbers = #tpu.dot_dimension_numbers<[1], [0], [0], [1], [0, 0, 1, 1], [], []>} : vector<18x8xf32>, vector<8x8xf32>, vector<18x8xf32> -> vector<18x8xf32>
    %cst_22 = arith.constant dense<0.000000e+00> : vector<18x18xf32>
    %17 = tpu.matmul %16, %1, %cst_22 {dimension_numbers = #tpu.dot_dimension_numbers<[1], [0], [0], [1], [0, 0, 1, 1], [], []>} : vector<18x8xf32>, vector<8x18xf32>, vector<18x18xf32> -> vector<18x18xf32>
    %c0_23 = arith.constant 0 : index
    %c0_24 = arith.constant 0 : index
    %c0_25 = arith.constant 0 : index
    %c0_26 = arith.constant 0 : index
    %18 = vector.load %arg2[%c0_23, %c0_24, %c0_25, %c0_26] : memref<1x18x18x4xf32, #tpu.memory_space<vmem>>, vector<1x18x18x4xf32>
    %19 = vector.shape_cast %18 : vector<1x18x18x4xf32> to vector<18x18x4xf32>
    %20 = vector.shape_cast %5 : vector<18x18xf32> to vector<18x18x1xf32>
    %21 = vector.shape_cast %9 : vector<18x18xf32> to vector<18x18x1xf32>
    %22 = vector.shape_cast %13 : vector<18x18xf32> to vector<18x18x1xf32>
    %23 = vector.shape_cast %17 : vector<18x18xf32> to vector<18x18x1xf32>
    %24 = tpu.concatenate %19, %20, %21, %22, %23 in 2 : vector<18x18x4xf32>, vector<18x18x1xf32>, vector<18x18x1xf32>, vector<18x18x1xf32>, vector<18x18x1xf32> -> vector<18x18x8xf32>
    %25 = vector.extract_strided_slice %24 {offsets = [0, 0, 0], sizes = [16, 16, 8], strides = [1, 1, 1]} : vector<18x18x8xf32> to vector<16x16x8xf32>
    %26 = vector.shape_cast %25 : vector<16x16x8xf32> to vector<256x8xf32>
    %27 = vector.extract_strided_slice %24 {offsets = [0, 1, 0], sizes = [16, 16, 8], strides = [1, 1, 1]} : vector<18x18x8xf32> to vector<16x16x8xf32>
    %28 = vector.shape_cast %27 : vector<16x16x8xf32> to vector<256x8xf32>
    %29 = vector.extract_strided_slice %24 {offsets = [0, 2, 0], sizes = [16, 16, 8], strides = [1, 1, 1]} : vector<18x18x8xf32> to vector<16x16x8xf32>
    %30 = vector.shape_cast %29 : vector<16x16x8xf32> to vector<256x8xf32>
    %31 = vector.extract_strided_slice %24 {offsets = [1, 0, 0], sizes = [16, 16, 8], strides = [1, 1, 1]} : vector<18x18x8xf32> to vector<16x16x8xf32>
    %32 = vector.shape_cast %31 : vector<16x16x8xf32> to vector<256x8xf32>
    %33 = vector.extract_strided_slice %24 {offsets = [1, 1, 0], sizes = [16, 16, 8], strides = [1, 1, 1]} : vector<18x18x8xf32> to vector<16x16x8xf32>
    %34 = vector.shape_cast %33 : vector<16x16x8xf32> to vector<256x8xf32>
    %35 = vector.extract_strided_slice %24 {offsets = [1, 2, 0], sizes = [16, 16, 8], strides = [1, 1, 1]} : vector<18x18x8xf32> to vector<16x16x8xf32>
    %36 = vector.shape_cast %35 : vector<16x16x8xf32> to vector<256x8xf32>
    %37 = vector.extract_strided_slice %24 {offsets = [2, 0, 0], sizes = [16, 16, 8], strides = [1, 1, 1]} : vector<18x18x8xf32> to vector<16x16x8xf32>
    %38 = vector.shape_cast %37 : vector<16x16x8xf32> to vector<256x8xf32>
    %39 = vector.extract_strided_slice %24 {offsets = [2, 1, 0], sizes = [16, 16, 8], strides = [1, 1, 1]} : vector<18x18x8xf32> to vector<16x16x8xf32>
    %40 = vector.shape_cast %39 : vector<16x16x8xf32> to vector<256x8xf32>
    %41 = vector.extract_strided_slice %24 {offsets = [2, 2, 0], sizes = [16, 16, 8], strides = [1, 1, 1]} : vector<18x18x8xf32> to vector<16x16x8xf32>
    %42 = vector.shape_cast %41 : vector<16x16x8xf32> to vector<256x8xf32>
    %43 = tpu.concatenate %26, %28, %30, %32, %34, %36, %38, %40, %42 in 1 : vector<256x8xf32>, vector<256x8xf32>, vector<256x8xf32>, vector<256x8xf32>, vector<256x8xf32>, vector<256x8xf32>, vector<256x8xf32>, vector<256x8xf32>, vector<256x8xf32> -> vector<256x72xf32>
    %c0_27 = arith.constant 0 : index
    %c0_28 = arith.constant 0 : index
    %44 = vector.load %arg5[%c0_27, %c0_28] : memref<72x4xf32, #tpu.memory_space<vmem>>, vector<72x4xf32>
    %cst_29 = arith.constant dense<0.000000e+00> : vector<256x4xf32>
    %45 = tpu.matmul %43, %44, %cst_29 {dimension_numbers = #tpu.dot_dimension_numbers<[1], [0], [0], [1], [0, 0, 1, 1], [], []>} : vector<256x72xf32>, vector<72x4xf32>, vector<256x4xf32> -> vector<256x4xf32>
    %46 = tpu.transpose %45, [1, 0] : vector<256x4xf32> -> vector<4x256xf32>
    %c0_30 = arith.constant 0 : index
    %c0_31 = arith.constant 0 : index
    %47 = vector.load %arg6[%c0_30, %c0_31] : memref<4x1xf32, #tpu.memory_space<vmem>>, vector<4x1xf32>
    %48 = vector.broadcast %47 : vector<4x1xf32> to vector<4x256xf32>
    %49 = arith.addf %46, %48 : vector<4x256xf32>
    %cst_32 = arith.constant 0.000000e+00 : f32
    %50 = vector.broadcast %cst_32 : f32 to vector<4x256xf32>
    %51 = arith.maximumf %49, %50 : vector<4x256xf32>
    %c0_33 = arith.constant 0 : index
    %c0_34 = arith.constant 0 : index
    %c0_35 = arith.constant 0 : index
    %52 = vector.load %arg7[%c0_33, %c0_34, %c0_35] : memref<1x4x256xf32, #tpu.memory_space<vmem>>, vector<1x4x256xf32>
    %53 = vector.shape_cast %52 : vector<1x4x256xf32> to vector<4x256xf32>
    %54 = vector.shape_cast %51 : vector<4x256xf32> to vector<1x4x256xf32>
    tpu.vector_store %arg7[%c0_33, %c0_34, %c0_35], %54 {strides = array<i32>} : memref<1x4x256xf32, #tpu.memory_space<vmem>>, vector<1x4x256xf32>,
    return
  }
  func.func @transform_0(%arg0: i32) -> (i32, i32, i32, i32) {
    %c0_i32 = arith.constant 0 : i32
    %c0_i32_0 = arith.constant 0 : i32
    %c0_i32_1 = arith.constant 0 : i32
    %c0_i32_2 = arith.constant 0 : i32
    return %arg0, %c0_i32, %c0_i32_0, %c0_i32_1 : i32, i32, i32, i32
  }
  func.func @transform_1(%arg0: i32) -> (i32, i32, i32, i32) {
    %c0_i32 = arith.constant 0 : i32
    %c0_i32_0 = arith.constant 0 : i32
    %c0_i32_1 = arith.constant 0 : i32
    %c0_i32_2 = arith.constant 0 : i32
    return %arg0, %c0_i32, %c0_i32_0, %c0_i32_1 : i32, i32, i32, i32
  }
  func.func @transform_2(%arg0: i32) -> (i32, i32) {
    %c0_i32 = arith.constant 0 : i32
    %c0_i32_0 = arith.constant 0 : i32
    %c0_i32_1 = arith.constant 0 : i32
    return %c0_i32, %c0_i32_0 : i32, i32
  }
  func.func @transform_3(%arg0: i32) -> (i32, i32) {
    %c0_i32 = arith.constant 0 : i32
    %c0_i32_0 = arith.constant 0 : i32
    %c0_i32_1 = arith.constant 0 : i32
    return %c0_i32, %c0_i32_0 : i32, i32
  }
  func.func @transform_4(%arg0: i32) -> (i32, i32) {
    %c0_i32 = arith.constant 0 : i32
    %c0_i32_0 = arith.constant 0 : i32
    %c0_i32_1 = arith.constant 0 : i32
    return %c0_i32, %c0_i32_0 : i32, i32
  }
  func.func @transform_5(%arg0: i32) -> (i32, i32) {
    %c0_i32 = arith.constant 0 : i32
    %c0_i32_0 = arith.constant 0 : i32
    %c0_i32_1 = arith.constant 0 : i32
    return %c0_i32, %c0_i32_0 : i32, i32
  }
  func.func @transform_6(%arg0: i32) -> (i32, i32, i32) {
    %c0_i32 = arith.constant 0 : i32
    %c0_i32_0 = arith.constant 0 : i32
    %c0_i32_1 = arith.constant 0 : i32
    return %arg0, %c0_i32, %c0_i32_0 : i32, i32, i32
  }
}

</mosaic_0001>

<llo_original>
// kernel: tpu_custom_call.1
$region0: #{tpu_custom_call.1}
  #allocation0 [shape = 'u32[]', space=smem, size = 0x4, offset = 0x4, fixed_abs, tag = 'smem constant byte address 0x4 - core index']
  #allocation1 [shape = 'u32[144,128]{1,0:T(1,128)}', space=vmem, size = 0x12000, scoped, tag = 'internal scratch']
  %s0 = inlined_call_operand.vmem [shape: f32[2,4,8,8], index: 0, kind: input, shape index: {}]
  %s1 = inlined_call_operand.vmem [shape: f32[2,18,18,4], index: 1, kind: input, shape index: {}]
  %s2 = inlined_call_operand.vmem [shape: f32[18,8], index: 2, kind: input, shape index: {}]
  %s3 = inlined_call_operand.vmem [shape: f32[8,18], index: 3, kind: input, shape index: {}]
  %s4 = inlined_call_operand.vmem [shape: f32[72,4], index: 4, kind: input, shape index: {}]
  %s5 = inlined_call_operand.vmem [shape: f32[4,1], index: 5, kind: input, shape index: {}]
  %s6 = inlined_call_operand.hbm [shape: f32[2,4,256], index: 6, kind: output, shape index: {}]
  %s7 = sld [smem:[#allocation0]]
  $region57: #{tpu_custom_call.1} parent=0
    _
  %s9 = ssub.s32 1, %s7
  %s10 = scalar_select 0, %s9, %s7
  $region1: #{tpu_custom_call.1} parent=0
    #allocation2 [shape = 'u8[8192]{0}', space=vmem, size = 0x2000, scoped, tag = 'output window, operand 0']
    #allocation3 [shape = 's32[2]{0}', space=sflag, size = 0x8, scoped, tag = 'scoped memory for tpu_custom_call.1']
    %11 = vsyncpa [#allocation3], 0
    %s12 = scalar_lea.sflag [#allocation3], 1
    %13 = vsyncpa %s12, 0
    loop: start=0, step=1, limit=4
    $region2: #{tpu_custom_call.1} parent=1 // loop_pre_header
      _
    $region3: #{tpu_custom_call.1} parent=1 // loop_header
      %s15 = sphi 0, %s19
      %p16 = scmp.ge.s32.totalorder %s15, 4
      %s25 = sphi 0, %s27
      %s28 = sphi 0, %s25
      %s29 = sphi 0, %s28
      %s45 = sphi 0, %s29
      %s51 = sphi 0, %s53
      %s54 = sphi 0, %s51
      %s55 = sphi 0, %s54
      %s71 = sphi 0, %s55
      %s75 = sphi 0, %s75
      %s77 = sphi 0, %s75
      %s78 = sphi 0, %s77
      %s92 = sphi 0, %s78
      %s96 = sphi 0, %s96
      %s98 = sphi 0, %s96
      %s99 = sphi 0, %s98
      %s113 = sphi 0, %s99
      %s117 = sphi 0, %s117
      %s119 = sphi 0, %s117
      %s120 = sphi 0, %s119
      %s134 = sphi 0, %s120
      %s138 = sphi 0, %s138
      %s140 = sphi 0, %s138
      %s141 = sphi 0, %s140
      %s155 = sphi 0, %s141
      %s161 = sphi 0, %s163
      %s164 = sphi 0, %s161
      %s165 = sphi 0, %s164
      %s181 = sphi 0, %s165
    $region4: #{tpu_custom_call.1} parent=1 // loop_header_branch
      %18 = sbr.rel (%p16) target = $region8
    $region5: #{tpu_custom_call.1} parent=1 // loop_body
      %s20 = ssub.s32 %s15, 1
      %s21 = ssub.s32 %s15, 2
      %s22 = sadd.s32 %s15, 1
      %s23 = ssub.s32 %s15, %s22
      %p24 = scmp.eq.s32.totalorder %s23, 0
      %s26 = sadd.s32 %s25, 1
      %s27 = scalar_select %p24, %s25, %s26
      %p30 = pneg %p24
      %p31 = scmp.eq.s32.totalorder %s15, 1
      %p32 = por %p30, %p31
      %p33 = scmp.ne.s32.totalorder %s25, %s28
      %p34 = scmp.eq.s32.totalorder %s15, 0
      %p35 = por %p33, %p34
      %p36 = scmp.ne.s32.totalorder %s25, %s28
      %p37 = scmp.eq.s32.totalorder %s20, 1
      %p38 = por %p36, %p37
      %p39 = scmp.ne.s32.totalorder %s28, %s29
      %p40 = scmp.eq.s32.totalorder %s20, 0
      %p41 = por %p39, %p40
      %p42 = scmp.ne.s32.totalorder %s28, %s29
      %p43 = scmp.eq.s32.totalorder %s21, 1
      %p44 = por %p42, %p43
      %p46 = scmp.ne.s32.totalorder %s29, %s45
      %p47 = scmp.eq.s32.totalorder %s21, 0
      %p48 = por %p46, %p47
      %s49 = ssub.s32 %s15, %s22
      %p50 = scmp.eq.s32.totalorder %s49, 0
      %s52 = sadd.s32 %s51, 1
      %s53 = scalar_select %p50, %s51, %s52
      %p56 = pneg %p50
      %p57 = scmp.eq.s32.totalorder %s15, 1
      %p58 = por %p56, %p57
      %p59 = scmp.ne.s32.totalorder %s51, %s54
      %p60 = scmp.eq.s32.totalorder %s15, 0
      %p61 = por %p59, %p60
      %p62 = scmp.ne.s32.totalorder %s51, %s54
      %p63 = scmp.eq.s32.totalorder %s20, 1
      %p64 = por %p62, %p63
      %p65 = scmp.ne.s32.totalorder %s54, %s55
      %p66 = scmp.eq.s32.totalorder %s20, 0
      %p67 = por %p65, %p66
      %p68 = scmp.ne.s32.totalorder %s54, %s55
      %p69 = scmp.eq.s32.totalorder %s21, 1
      %p70 = por %p68, %p69
      %p72 = scmp.ne.s32.totalorder %s55, %s71
      %p73 = scmp.eq.s32.totalorder %s21, 0
      %p74 = por %p72, %p73
      %s76 = sadd.s32 %s75, 1
      %p79 = scmp.eq.s32.totalorder %s15, 1
      %p80 = scmp.ne.s32.totalorder %s75, %s77
      %p81 = scmp.eq.s32.totalorder %s15, 0
      %p82 = por %p80, %p81
      %p83 = scmp.ne.s32.totalorder %s75, %s77
      %p84 = scmp.eq.s32.totalorder %s20, 1
      %p85 = por %p83, %p84
      %p86 = scmp.ne.s32.totalorder %s77, %s78
      %p87 = scmp.eq.s32.totalorder %s20, 0
      %p88 = por %p86, %p87
      %p89 = scmp.ne.s32.totalorder %s77, %s78
      %p90 = scmp.eq.s32.totalorder %s21, 1
      %p91 = por %p89, %p90
      %p93 = scmp.ne.s32.totalorder %s78, %s92
      %p94 = scmp.eq.s32.totalorder %s21, 0
      %p95 = por %p93, %p94
      %s97 = sadd.s32 %s96, 1
      %p100 = scmp.eq.s32.totalorder %s15, 1
      %p101 = scmp.ne.s32.totalorder %s96, %s98
      %p102 = scmp.eq.s32.totalorder %s15, 0
      %p103 = por %p101, %p102
      %p104 = scmp.ne.s32.totalorder %s96, %s98
      %p105 = scmp.eq.s32.totalorder %s20, 1
      %p106 = por %p104, %p105
      %p107 = scmp.ne.s32.totalorder %s98, %s99
      %p108 = scmp.eq.s32.totalorder %s20, 0
      %p109 = por %p107, %p108
      %p110 = scmp.ne.s32.totalorder %s98, %s99
      %p111 = scmp.eq.s32.totalorder %s21, 1
      %p112 = por %p110, %p111
      %p114 = scmp.ne.s32.totalorder %s99, %s113
      %p115 = scmp.eq.s32.totalorder %s21, 0
      %p116 = por %p114, %p115
      %s118 = sadd.s32 %s117, 1
      %p121 = scmp.eq.s32.totalorder %s15, 1
      %p122 = scmp.ne.s32.totalorder %s117, %s119
      %p123 = scmp.eq.s32.totalorder %s15, 0
      %p124 = por %p122, %p123
      %p125 = scmp.ne.s32.totalorder %s117, %s119
      %p126 = scmp.eq.s32.totalorder %s20, 1
      %p127 = por %p125, %p126
      %p128 = scmp.ne.s32.totalorder %s119, %s120
      %p129 = scmp.eq.s32.totalorder %s20, 0
      %p130 = por %p128, %p129
      %p131 = scmp.ne.s32.totalorder %s119, %s120
      %p132 = scmp.eq.s32.totalorder %s21, 1
      %p133 = por %p131, %p132
      %p135 = scmp.ne.s32.totalorder %s120, %s134
      %p136 = scmp.eq.s32.totalorder %s21, 0
      %p137 = por %p135, %p136
      %s139 = sadd.s32 %s138, 1
      %p142 = scmp.eq.s32.totalorder %s15, 1
      %p143 = scmp.ne.s32.totalorder %s138, %s140
      %p144 = scmp.eq.s32.totalorder %s15, 0
      %p145 = por %p143, %p144
      %p146 = scmp.ne.s32.totalorder %s138, %s140
      %p147 = scmp.eq.s32.totalorder %s20, 1
      %p148 = por %p146, %p147
      %p149 = scmp.ne.s32.totalorder %s140, %s141
      %p150 = scmp.eq.s32.totalorder %s20, 0
      %p151 = por %p149, %p150
      %p152 = scmp.ne.s32.totalorder %s140, %s141
      %p153 = scmp.eq.s32.totalorder %s21, 1
      %p154 = por %p152, %p153
      %p156 = scmp.ne.s32.totalorder %s141, %s155
      %p157 = scmp.eq.s32.totalorder %s21, 0
      %p158 = por %p156, %p157
      %s159 = ssub.s32 %s15, %s22
      %p160 = scmp.eq.s32.totalorder %s159, 0
      %s162 = sadd.s32 %s161, 1
      %s163 = scalar_select %p160, %s161, %s162
      %p166 = pneg %p160
      %p167 = scmp.eq.s32.totalorder %s15, 1
      %p168 = por %p166, %p167
      %p169 = scmp.ne.s32.totalorder %s161, %s164
      %p170 = scmp.eq.s32.totalorder %s15, 0
      %p171 = por %p169, %p170
      %p172 = scmp.ne.s32.totalorder %s161, %s164
      %p173 = scmp.eq.s32.totalorder %s20, 1
      %p174 = por %p172, %p173
      %p175 = scmp.ne.s32.totalorder %s164, %s165
      %p176 = scmp.eq.s32.totalorder %s20, 0
      %p177 = por %p175, %p176
      %p178 = scmp.ne.s32.totalorder %s164, %s165
      %p179 = scmp.eq.s32.totalorder %s21, 1
      %p180 = por %p178, %p179
      %p182 = scmp.ne.s32.totalorder %s165, %s181
      %p183 = scmp.eq.s32.totalorder %s21, 0
      %p184 = por %p182, %p183
      %p185 = scmp.le.s32.totalorder 1, %s15
      %p186 = scmp.lt.s32.totalorder %s15, 3
      %p187 = pnand %p185, %p186
      %p188 = pneg %p187
      // Predicated region
      $region9: #{tpu_custom_call.1} parent=5 // pred_check
        _
      $region10: #{tpu_custom_call.1} parent=5 // pred_check_branch
        %190 = sbr.rel (%p187) target = $region12
      $region11: #{tpu_custom_call.1} parent=5 // pred_region
        %s191 = ssub.s32 %s15, 1
        // Predicated region
        $region13: #{tpu_custom_call.1} parent=11 // pred_check
          %p192 = pneg %p88
        $region14: #{tpu_custom_call.1} parent=11 // pred_check_branch
          %194 = sbr.rel (%p192) target = $region16
        $region15: #{tpu_custom_call.1} parent=11 // pred_region
          _
        $region16: #{tpu_custom_call.1} parent=11 // pred_fallthru
          _
        // Predicated region
        $region17: #{tpu_custom_call.1} parent=11 // pred_check
          %p195 = pneg %p109
        $region18: #{tpu_custom_call.1} parent=11 // pred_check_branch
          %197 = sbr.rel (%p195) target = $region20
        $region19: #{tpu_custom_call.1} parent=11 // pred_region
          _
        $region20: #{tpu_custom_call.1} parent=11 // pred_fallthru
          _
        // Predicated region
        $region21: #{tpu_custom_call.1} parent=11 // pred_check
          %p198 = pneg %p130
        $region22: #{tpu_custom_call.1} parent=11 // pred_check_branch
          %200 = sbr.rel (%p198) target = $region24
        $region23: #{tpu_custom_call.1} parent=11 // pred_region
          _
        $region24: #{tpu_custom_call.1} parent=11 // pred_fallthru
          _
        // Predicated region
        $region25: #{tpu_custom_call.1} parent=11 // pred_check
          %p201 = pneg %p151
        $region26: #{tpu_custom_call.1} parent=11 // pred_check_branch
          %203 = sbr.rel (%p201) target = $region28
        $region27: #{tpu_custom_call.1} parent=11 // pred_region
          _
        $region28: #{tpu_custom_call.1} parent=11 // pred_fallthru
          _
      $region12: #{tpu_custom_call.1} parent=5 // pred_fallthru
        _
      %p204 = scmp.lt.s32.totalorder %s15, 2
      // Predicated region
      $region29: #{tpu_custom_call.1} parent=5 // pred_check
        %p205 = pneg %p204
      $region30: #{tpu_custom_call.1} parent=5 // pred_check_branch
        %207 = sbr.rel (%p205) target = $region32
      $region31: #{tpu_custom_call.1} parent=5 // pred_region
        // Predicated region
        $region33: #{tpu_custom_call.1} parent=31 // pred_check
          %p208 = pneg %p35
        $region34: #{tpu_custom_call.1} parent=31 // pred_check_branch
          %210 = sbr.rel (%p208) target = $region36
        $region35: #{tpu_custom_call.1} parent=31 // pred_region
          %p211 = scmp.lt.s32.totalorder %s15, 1
          %s212 = scalar_select %p211, %s15, 1
          %s213 = smul.addr %s212, 4
          %s214 = smul.addr %s213, 8
          %s215 = scalar_lea.vmem %s0, %s214
        $region36: #{tpu_custom_call.1} parent=31 // pred_fallthru
          _
        // Predicated region
        $region37: #{tpu_custom_call.1} parent=31 // pred_check
          %p216 = pneg %p61
        $region38: #{tpu_custom_call.1} parent=31 // pred_check_branch
          %218 = sbr.rel (%p216) target = $region40
        $region39: #{tpu_custom_call.1} parent=31 // pred_region
          %p219 = scmp.lt.s32.totalorder %s15, 1
          %s220 = scalar_select %p219, %s15, 1
          %s221 = smul.addr %s220, 54
          %s222 = smul.addr %s221, 8
          %s223 = scalar_lea.vmem %s1, %s222
        $region40: #{tpu_custom_call.1} parent=31 // pred_fallthru
          _
      $region32: #{tpu_custom_call.1} parent=5 // pred_fallthru
        _
      %p224 = scmp.le.s32.totalorder 1, %s15
      %p225 = scmp.lt.s32.totalorder %s15, 3
      %p226 = pnand %p224, %p225
      %p227 = pneg %p226
      // Predicated region
      $region41: #{tpu_custom_call.1} parent=5 // pred_check
        _
      $region42: #{tpu_custom_call.1} parent=5 // pred_check_branch
        %229 = sbr.rel (%p226) target = $region44
      $region43: #{tpu_custom_call.1} parent=5 // pred_region
        %s230 = ssub.s32 %s15, 1
        %p231 = scmp.lt.s32.totalorder %s20, 1
        %s232 = scalar_select %p231, %s20, 1
        %s233 = smul.addr %s232, 4
        %s234 = smul.addr %s233, 8
        %s235 = scalar_lea.vmem %s0, %s234
        %p236 = pneg %p41
        %p237 = pneg %p38
        %p238 = scmp.lt.s32.totalorder %s20, 1
        %s239 = scalar_select %p238, %s20, 1
        %s240 = smul.addr %s239, 54
        %s241 = smul.addr %s240, 8
        %s242 = scalar_lea.vmem %s1, %s241
        %p243 = pneg %p67
        %p244 = pneg %p64
        %p245 = pneg %p88
        %p246 = pneg %p85
        %p247 = pneg %p109
        %p248 = pneg %p106
        %p249 = pneg %p130
        %p250 = pneg %p127
        %p251 = pneg %p151
        %p252 = pneg %p148
        %p253 = pneg %p177
        %p254 = pneg %p174
        %s255 = sand.u32 %s164, 1
        %s256 = scalar_lea.sflag [#allocation3], %s255
        %s257 = sand.u32 %s164, 1
        %s258 = smul.addr %s257, 8
        %s259 = scalar_lea.vmem [#allocation2], %s258
        %p260 = scmp.lt.s32.totalorder %s20, 1
        %s261 = scalar_select %p260, %s20, 1
        %s262 = smul.addr %s261, 4
        %s263 = smul.addr %s262, 8
        %s264 = scalar_lea.vmem %s0, %s263
        %p265 = scmp.lt.s32.totalorder %s20, 1
        %s266 = scalar_select %p265, %s20, 1
        %s267 = smul.addr %s266, 54
        %s268 = smul.addr %s267, 8
        %s269 = scalar_lea.vmem %s1, %s268
        %v270 = vld [vmem:[%s2] sm:$0xff]
        %v271 = vld [vmem:[%s2 + $0x8] sm:$0xff]
        %v272 = vld [vmem:[%s2 + $0x10] sm:$0x3]
        %v273 = vld [vmem:[%s3] sm:$0xff]
        %v274 = vld [vmem:[%s264] sm:$0xff]
        %vm275 = vcmask 64512
        %v277 = vsel %vm275, %v270, 0
        %v280 = vsel %vm275, %v271, 0
        %v283 = vsel %vm275, %v272, 0
        %285 = vmatprep.subr.mxu0 0.0
        %286 = vmatpush1.msra.mxu0 0.0
        %287 = vmatprep.subr.mxu0 0.0
        %288 = vmatpush1.msra.mxu0 0.0
        %289 = vmatprep.subr.mxu0 0.0
        %290 = vmatpush1.msra.mxu0 0.0
        %291 = vmatprep.subr.mxu0 0.0
        %292 = vmatpush1.msra.mxu0 0.0
        %293 = vmatprep.subr.mxu0 0.0
        %294 = vmatpush1.msra.mxu0 0.0
        %295 = vmatprep.subr.mxu0 0.0
        %296 = vmatpush1.msra.mxu0 0.0
        %297 = vmatprep.subr.mxu0 0.0
        %298 = vmatpush1.msra.mxu0 0.0
        %299 = vmatprep.subr.mxu0 0.0
        %300 = vmatpush1.msra.mxu0 0.0
        %301 = vmatprep.subr.mxu0 0.0
        %302 = vmatpush1.msra.mxu0 0.0
        %303 = vmatprep.subr.mxu0 0.0
        %304 = vmatpush1.msra.mxu0 0.0
        %305 = vmatprep.subr.mxu0 0.0
        %306 = vmatpush1.msra.mxu0 0.0
        %307 = vmatprep.subr.mxu0 0.0
        %308 = vmatpush1.msra.mxu0 0.0
        %309 = vmatprep.subr.mxu0 0.0
        %310 = vmatpush1.msra.mxu0 0.0
        %311 = vmatprep.subr.mxu0 0.0
        %312 = vmatpush1.msra.mxu0 0.0
        %313 = vmatprep.subr.mxu0 0.0
        %314 = vmatpush1.msra.mxu0 0.0
        %315 = vmatprep.subr.mxu0 0.0
        %316 = vmatpush1.msra.mxu0 %v274
        %317 = vmatprep.subr.mxu0 0.0
        %318 = vmatpush2.msra.mxu0 0.0
        %319 = vmatprep.subr.mxu0 0.0
        %320 = vmatpush2.msra.mxu0 0.0
        %321 = vmatprep.subr.mxu0 0.0
        %322 = vmatpush2.msra.mxu0 0.0
        %323 = vmatprep.subr.mxu0 0.0
        %324 = vmatpush2.msra.mxu0 0.0
        %325 = vmatprep.subr.mxu0 0.0
        %326 = vmatpush2.msra.mxu0 0.0
        %327 = vmatprep.subr.mxu0 0.0
        %328 = vmatpush2.msra.mxu0 0.0
        %329 = vmatprep.subr.mxu0 0.0
        %330 = vmatpush2.msra.mxu0 0.0
        %331 = vmatprep.subr.mxu0 0.0
        %332 = vmatpush2.msra.mxu0 0.0
        %333 = vmatprep.subr.mxu0 0.0
        %334 = vmatpush2.msra.mxu0 0.0
        %335 = vmatprep.subr.mxu0 0.0
        %336 = vmatpush2.msra.mxu0 0.0
        %337 = vmatprep.subr.mxu0 0.0
        %338 = vmatpush2.msra.mxu0 0.0
        %339 = vmatprep.subr.mxu0 0.0
        %340 = vmatpush2.msra.mxu0 0.0
        %341 = vmatprep.subr.mxu0 0.0
        %342 = vmatpush2.msra.mxu0 0.0
        %343 = vmatprep.subr.mxu0 0.0
        %344 = vmatpush2.msra.mxu0 0.0
        %345 = vmatprep.subr.mxu0 0.0
        %346 = vmatpush2.msra.mxu0 0.0
        %347 = vmatprep.subr.mxu0 0.0
        %348 = vmatpush2.msra.mxu0 0.0
        %349 = vmatprep.mubr.f32.mxu0 0.0
        %350 = vmatmul.mubr.f32.gmra.mxu0 %v277
        %v351 = vpop.f32.mrf.mxu0
        %v352 = vadd.f32 0.0, %v351
        %v353 = vpop.f32.mrf.mxu0
        %354 = vmatprep.mubr.f32.mxu0 0.0
        %355 = vmatmul.mubr.f32.gmra.mxu0 %v280
        %v356 = vpop.f32.mrf.mxu0
        %v357 = vadd.f32 0.0, %v356
        %v358 = vpop.f32.mrf.mxu0
        %359 = vmatprep.mubr.f32.mxu0 0.0
        %360 = vmatmul.mubr.f32.gmra.mxu0 %v283
        %v361 = vpop.f32.mrf.mxu0
        %v362 = vadd.f32 0.0, %v361
        %v363 = vpop.f32.mrf.mxu0
        %364 = vdwg.mxu0
        %v366 = vsel %vm275, %v352, 0
        %v369 = vsel %vm275, %v357, 0
        %v372 = vsel %vm275, %v362, 0
        %374 = vmatprep.subr.mxu0 0.0
        %375 = vmatpush1.msra.mxu0 0.0
        %376 = vmatprep.subr.mxu0 0.0
        %377 = vmatpush1.msra.mxu0 0.0
        %378 = vmatprep.subr.mxu0 0.0
        %379 = vmatpush1.msra.mxu0 0.0
        %380 = vmatprep.subr.mxu0 0.0
        %381 = vmatpush1.msra.mxu0 0.0
        %382 = vmatprep.subr.mxu0 0.0
        %383 = vmatpush1.msra.mxu0 0.0
        %384 = vmatprep.subr.mxu0 0.0
        %385 = vmatpush1.msra.mxu0 0.0
        %386 = vmatprep.subr.mxu0 0.0
        %387 = vmatpush1.msra.mxu0 0.0
        %388 = vmatprep.subr.mxu0 0.0
        %389 = vmatpush1.msra.mxu0 0.0
        %390 = vmatprep.subr.mxu0 0.0
        %391 = vmatpush1.msra.mxu0 0.0
        %392 = vmatprep.subr.mxu0 0.0
        %393 = vmatpush1.msra.mxu0 0.0
        %394 = vmatprep.subr.mxu0 0.0
        %395 = vmatpush1.msra.mxu0 0.0
        %396 = vmatprep.subr.mxu0 0.0
        %397 = vmatpush1.msra.mxu0 0.0
        %398 = vmatprep.subr.mxu0 0.0
        %399 = vmatpush1.msra.mxu0 0.0
        %400 = vmatprep.subr.mxu0 0.0
        %401 = vmatpush1.msra.mxu0 0.0
        %402 = vmatprep.subr.mxu0 0.0
        %403 = vmatpush1.msra.mxu0 0.0
        %404 = vmatprep.subr.mxu0 0.0
        %405 = vmatpush1.msra.mxu0 %v273
        %406 = vmatprep.subr.mxu0 0.0
        %407 = vmatpush2.msra.mxu0 0.0
        %408 = vmatprep.subr.mxu0 0.0
        %409 = vmatpush2.msra.mxu0 0.0
        %410 = vmatprep.subr.mxu0 0.0
        %411 = vmatpush2.msra.mxu0 0.0
        %412 = vmatprep.subr.mxu0 0.0
        %413 = vmatpush2.msra.mxu0 0.0
        %414 = vmatprep.subr.mxu0 0.0
        %415 = vmatpush2.msra.mxu0 0.0
        %416 = vmatprep.subr.mxu0 0.0
        %417 = vmatpush2.msra.mxu0 0.0
        %418 = vmatprep.subr.mxu0 0.0
        %419 = vmatpush2.msra.mxu0 0.0
        %420 = vmatprep.subr.mxu0 0.0
        %421 = vmatpush2.msra.mxu0 0.0
        %422 = vmatprep.subr.mxu0 0.0
        %423 = vmatpush2.msra.mxu0 0.0
        %424 = vmatprep.subr.mxu0 0.0
        %425 = vmatpush2.msra.mxu0 0.0
        %426 = vmatprep.subr.mxu0 0.0
        %427 = vmatpush2.msra.mxu0 0.0
        %428 = vmatprep.subr.mxu0 0.0
        %429 = vmatpush2.msra.mxu0 0.0
        %430 = vmatprep.subr.mxu0 0.0
        %431 = vmatpush2.msra.mxu0 0.0
        %432 = vmatprep.subr.mxu0 0.0
        %433 = vmatpush2.msra.mxu0 0.0
        %434 = vmatprep.subr.mxu0 0.0
        %435 = vmatpush2.msra.mxu0 0.0
        %436 = vmatprep.subr.mxu0 0.0
        %437 = vmatpush2.msra.mxu0 0.0
        %438 = vmatprep.mubr.f32.mxu0 0.0
        %439 = vmatmul.mubr.f32.gmra.mxu0 %v366
        %v440 = vpop.f32.mrf.mxu0
        %v441 = vadd.f32 0.0, %v440
        %v442 = vpop.f32.mrf.mxu0
        %443 = vmatprep.mubr.f32.mxu0 0.0
        %444 = vmatmul.mubr.f32.gmra.mxu0 %v369
        %v445 = vpop.f32.mrf.mxu0
        %v446 = vadd.f32 0.0, %v445
        %v447 = vpop.f32.mrf.mxu0
        %448 = vmatprep.mubr.f32.mxu0 0.0
        %449 = vmatmul.mubr.f32.gmra.mxu0 %v372
        %v450 = vpop.f32.mrf.mxu0
        %v451 = vadd.f32 0.0, %v450
        %v452 = vpop.f32.mrf.mxu0
        %453 = vdwg.mxu0
        %s454 = scalar_lea.vmem %s264, 8
        %v455 = vld [vmem:[%s454] sm:$0xff]
        %456 = vmatprep.subr.mxu0 0.0
        %457 = vmatpush1.msra.mxu0 0.0
        %458 = vmatprep.subr.mxu0 0.0
        %459 = vmatpush1.msra.mxu0 0.0
        %460 = vmatprep.subr.mxu0 0.0
        %461 = vmatpush1.msra.mxu0 0.0
        %462 = vmatprep.subr.mxu0 0.0
        %463 = vmatpush1.msra.mxu0 0.0
        %464 = vmatprep.subr.mxu0 0.0
        %465 = vmatpush1.msra.mxu0 0.0
        %466 = vmatprep.subr.mxu0 0.0
        %467 = vmatpush1.msra.mxu0 0.0
        %468 = vmatprep.subr.mxu0 0.0
        %469 = vmatpush1.msra.mxu0 0.0
        %470 = vmatprep.subr.mxu0 0.0
        %471 = vmatpush1.msra.mxu0 0.0
        %472 = vmatprep.subr.mxu0 0.0
        %473 = vmatpush1.msra.mxu0 0.0
        %474 = vmatprep.subr.mxu0 0.0
        %475 = vmatpush1.msra.mxu0 0.0
        %476 = vmatprep.subr.mxu0 0.0
        %477 = vmatpush1.msra.mxu0 0.0
        %478 = vmatprep.subr.mxu0 0.0
        %479 = vmatpush1.msra.mxu0 0.0
        %480 = vmatprep.subr.mxu0 0.0
        %481 = vmatpush1.msra.mxu0 0.0
        %482 = vmatprep.subr.mxu0 0.0
        %483 = vmatpush1.msra.mxu0 0.0
        %484 = vmatprep.subr.mxu0 0.0
        %485 = vmatpush1.msra.mxu0 0.0
        %486 = vmatprep.subr.mxu0 0.0
        %487 = vmatpush1.msra.mxu0 %v455
        %488 = vmatprep.subr.mxu0 0.0
        %489 = vmatpush2.msra.mxu0 0.0
        %490 = vmatprep.subr.mxu0 0.0
        %491 = vmatpush2.msra.mxu0 0.0
        %492 = vmatprep.subr.mxu0 0.0
        %493 = vmatpush2.msra.mxu0 0.0
        %494 = vmatprep.subr.mxu0 0.0
        %495 = vmatpush2.msra.mxu0 0.0
        %496 = vmatprep.subr.mxu0 0.0
        %497 = vmatpush2.msra.mxu0 0.0
        %498 = vmatprep.subr.mxu0 0.0
        %499 = vmatpush2.msra.mxu0 0.0
        %500 = vmatprep.subr.mxu0 0.0
        %501 = vmatpush2.msra.mxu0 0.0
        %502 = vmatprep.subr.mxu0 0.0
        %503 = vmatpush2.msra.mxu0 0.0
        %504 = vmatprep.subr.mxu0 0.0
        %505 = vmatpush2.msra.mxu0 0.0
        %506 = vmatprep.subr.mxu0 0.0
        %507 = vmatpush2.msra.mxu0 0.0
        %508 = vmatprep.subr.mxu0 0.0
        %509 = vmatpush2.msra.mxu0 0.0
        %510 = vmatprep.subr.mxu0 0.0
        %511 = vmatpush2.msra.mxu0 0.0
        %512 = vmatprep.subr.mxu0 0.0
        %513 = vmatpush2.msra.mxu0 0.0
        %514 = vmatprep.subr.mxu0 0.0
        %515 = vmatpush2.msra.mxu0 0.0
        %516 = vmatprep.subr.mxu0 0.0
        %517 = vmatpush2.msra.mxu0 0.0
        %518 = vmatprep.subr.mxu0 0.0
        %519 = vmatpush2.msra.mxu0 0.0
        %520 = vmatprep.mubr.f32.mxu0 0.0
        %521 = vmatmul.mubr.f32.gmra.mxu0 %v277
        %v522 = vpop.f32.mrf.mxu0
        %v523 = vadd.f32 0.0, %v522
        %v524 = vpop.f32.mrf.mxu0
        %525 = vmatprep.mubr.f32.mxu0 0.0
        %526 = vmatmul.mubr.f32.gmra.mxu0 %v280
        %v527 = vpop.f32.mrf.mxu0
        %v528 = vadd.f32 0.0, %v527
        %v529 = vpop.f32.mrf.mxu0
        %530 = vmatprep.mubr.f32.mxu0 0.0
        %531 = vmatmul.mubr.f32.gmra.mxu0 %v283
        %v532 = vpop.f32.mrf.mxu0
        %v533 = vadd.f32 0.0, %v532
        %v534 = vpop.f32.mrf.mxu0
        %535 = vdwg.mxu0
        %v537 = vsel %vm275, %v523, 0
        %v540 = vsel %vm275, %v528, 0
        %v543 = vsel %vm275, %v533, 0
        %545 = vmatprep.subr.mxu0 0.0
        %546 = vmatpush1.msra.mxu0 0.0
        %547 = vmatprep.subr.mxu0 0.0
        %548 = vmatpush1.msra.mxu0 0.0
        %549 = vmatprep.subr.mxu0 0.0
        %550 = vmatpush1.msra.mxu0 0.0
        %551 = vmatprep.subr.mxu0 0.0
        %552 = vmatpush1.msra.mxu0 0.0
        %553 = vmatprep.subr.mxu0 0.0
        %554 = vmatpush1.msra.mxu0 0.0
        %555 = vmatprep.subr.mxu0 0.0
        %556 = vmatpush1.msra.mxu0 0.0
        %557 = vmatprep.subr.mxu0 0.0
        %558 = vmatpush1.msra.mxu0 0.0
        %559 = vmatprep.subr.mxu0 0.0
        %560 = vmatpush1.msra.mxu0 0.0
        %561 = vmatprep.subr.mxu0 0.0
        %562 = vmatpush1.msra.mxu0 0.0
        %563 = vmatprep.subr.mxu0 0.0
        %564 = vmatpush1.msra.mxu0 0.0
        %565 = vmatprep.subr.mxu0 0.0
        %566 = vmatpush1.msra.mxu0 0.0
        %567 = vmatprep.subr.mxu0 0.0
        %568 = vmatpush1.msra.mxu0 0.0
        %569 = vmatprep.subr.mxu0 0.0
        %570 = vmatpush1.msra.mxu0 0.0
        %571 = vmatprep.subr.mxu0 0.0
        %572 = vmatpush1.msra.mxu0 0.0
        %573 = vmatprep.subr.mxu0 0.0
        %574 = vmatpush1.msra.mxu0 0.0
        %575 = vmatprep.subr.mxu0 0.0
        %576 = vmatpush1.msra.mxu0 %v273
        %577 = vmatprep.subr.mxu0 0.0
        %578 = vmatpush2.msra.mxu0 0.0
        %579 = vmatprep.subr.mxu0 0.0
        %580 = vmatpush2.msra.mxu0 0.0
        %581 = vmatprep.subr.mxu0 0.0
        %582 = vmatpush2.msra.mxu0 0.0
        %583 = vmatprep.subr.mxu0 0.0
        %584 = vmatpush2.msra.mxu0 0.0
        %585 = vmatprep.subr.mxu0 0.0
        %586 = vmatpush2.msra.mxu0 0.0
        %587 = vmatprep.subr.mxu0 0.0
        %588 = vmatpush2.msra.mxu0 0.0
        %589 = vmatprep.subr.mxu0 0.0
        %590 = vmatpush2.msra.mxu0 0.0
        %591 = vmatprep.subr.mxu0 0.0
        %592 = vmatpush2.msra.mxu0 0.0
        %593 = vmatprep.subr.mxu0 0.0
        %594 = vmatpush2.msra.mxu0 0.0
        %595 = vmatprep.subr.mxu0 0.0
        %596 = vmatpush2.msra.mxu0 0.0
        %597 = vmatprep.subr.mxu0 0.0
        %598 = vmatpush2.msra.mxu0 0.0
        %599 = vmatprep.subr.mxu0 0.0
        %600 = vmatpush2.msra.mxu0 0.0
        %601 = vmatprep.subr.mxu0 0.0
        %602 = vmatpush2.msra.mxu0 0.0
        %603 = vmatprep.subr.mxu0 0.0
        %604 = vmatpush2.msra.mxu0 0.0
        %605 = vmatprep.subr.mxu0 0.0
        %606 = vmatpush2.msra.mxu0 0.0
        %607 = vmatprep.subr.mxu0 0.0
        %608 = vmatpush2.msra.mxu0 0.0
        %609 = vmatprep.mubr.f32.mxu0 0.0
        %610 = vmatmul.mubr.f32.gmra.mxu0 %v537
        %v611 = vpop.f32.mrf.mxu0
        %v612 = vadd.f32 0.0, %v611
        %v613 = vpop.f32.mrf.mxu0
        %614 = vmatprep.mubr.f32.mxu0 0.0
        %615 = vmatmul.mubr.f32.gmra.mxu0 %v540
        %v616 = vpop.f32.mrf.mxu0
        %v617 = vadd.f32 0.0, %v616
        %v618 = vpop.f32.mrf.mxu0
        %619 = vmatprep.mubr.f32.mxu0 0.0
        %620 = vmatmul.mubr.f32.gmra.mxu0 %v543
        %v621 = vpop.f32.mrf.mxu0
        %v622 = vadd.f32 0.0, %v621
        %v623 = vpop.f32.mrf.mxu0
        %624 = vdwg.mxu0
        %s625 = scalar_lea.vmem %s264, 16
        %v626 = vld [vmem:[%s625] sm:$0xff]
        %627 = vmatprep.subr.mxu0 0.0
        %628 = vmatpush1.msra.mxu0 0.0
        %629 = vmatprep.subr.mxu0 0.0
        %630 = vmatpush1.msra.mxu0 0.0
        %631 = vmatprep.subr.mxu0 0.0
        %632 = vmatpush1.msra.mxu0 0.0
        %633 = vmatprep.subr.mxu0 0.0
        %634 = vmatpush1.msra.mxu0 0.0
        %635 = vmatprep.subr.mxu0 0.0
        %636 = vmatpush1.msra.mxu0 0.0
        %637 = vmatprep.subr.mxu0 0.0
        %638 = vmatpush1.msra.mxu0 0.0
        %639 = vmatprep.subr.mxu0 0.0
        %640 = vmatpush1.msra.mxu0 0.0
        %641 = vmatprep.subr.mxu0 0.0
        %642 = vmatpush1.msra.mxu0 0.0
        %643 = vmatprep.subr.mxu0 0.0
        %644 = vmatpush1.msra.mxu0 0.0
        %645 = vmatprep.subr.mxu0 0.0
        %646 = vmatpush1.msra.mxu0 0.0
        %647 = vmatprep.subr.mxu0 0.0
        %648 = vmatpush1.msra.mxu0 0.0
        %649 = vmatprep.subr.mxu0 0.0
        %650 = vmatpush1.msra.mxu0 0.0
        %651 = vmatprep.subr.mxu0 0.0
        %652 = vmatpush1.msra.mxu0 0.0
        %653 = vmatprep.subr.mxu0 0.0
        %654 = vmatpush1.msra.mxu0 0.0
        %655 = vmatprep.subr.mxu0 0.0
        %656 = vmatpush1.msra.mxu0 0.0
        %657 = vmatprep.subr.mxu0 0.0
        %658 = vmatpush1.msra.mxu0 %v626
        %659 = vmatprep.subr.mxu0 0.0
        %660 = vmatpush2.msra.mxu0 0.0
        %661 = vmatprep.subr.mxu0 0.0
        %662 = vmatpush2.msra.mxu0 0.0
        %663 = vmatprep.subr.mxu0 0.0
        %664 = vmatpush2.msra.mxu0 0.0
        %665 = vmatprep.subr.mxu0 0.0
        %666 = vmatpush2.msra.mxu0 0.0
        %667 = vmatprep.subr.mxu0 0.0
        %668 = vmatpush2.msra.mxu0 0.0
        %669 = vmatprep.subr.mxu0 0.0
        %670 = vmatpush2.msra.mxu0 0.0
        %671 = vmatprep.subr.mxu0 0.0
        %672 = vmatpush2.msra.mxu0 0.0
        %673 = vmatprep.subr.mxu0 0.0
        %674 = vmatpush2.msra.mxu0 0.0
        %675 = vmatprep.subr.mxu0 0.0
        %676 = vmatpush2.msra.mxu0 0.0
        %677 = vmatprep.subr.mxu0 0.0
        %678 = vmatpush2.msra.mxu0 0.0
        %679 = vmatprep.subr.mxu0 0.0
        %680 = vmatpush2.msra.mxu0 0.0
        %681 = vmatprep.subr.mxu0 0.0
        %682 = vmatpush2.msra.mxu0 0.0
        %683 = vmatprep.subr.mxu0 0.0
        %684 = vmatpush2.msra.mxu0 0.0
        %685 = vmatprep.subr.mxu0 0.0
        %686 = vmatpush2.msra.mxu0 0.0
        %687 = vmatprep.subr.mxu0 0.0
        %688 = vmatpush2.msra.mxu0 0.0
        %689 = vmatprep.subr.mxu0 0.0
        %690 = vmatpush2.msra.mxu0 0.0
        %691 = vmatprep.mubr.f32.mxu0 0.0
        %692 = vmatmul.mubr.f32.gmra.mxu0 %v277
        %v693 = vpop.f32.mrf.mxu0
        %v694 = vadd.f32 0.0, %v693
        %v695 = vpop.f32.mrf.mxu0
        %696 = vmatprep.mubr.f32.mxu0 0.0
        %697 = vmatmul.mubr.f32.gmra.mxu0 %v280
        %v698 = vpop.f32.mrf.mxu0
        %v699 = vadd.f32 0.0, %v698
        %v700 = vpop.f32.mrf.mxu0
        %701 = vmatprep.mubr.f32.mxu0 0.0
        %702 = vmatmul.mubr.f32.gmra.mxu0 %v283
        %v703 = vpop.f32.mrf.mxu0
        %v704 = vadd.f32 0.0, %v703
        %v705 = vpop.f32.mrf.mxu0
        %706 = vdwg.mxu0
        %v708 = vsel %vm275, %v694, 0
        %v711 = vsel %vm275, %v699, 0
        %v714 = vsel %vm275, %v704, 0
        %716 = vmatprep.subr.mxu0 0.0
        %717 = vmatpush1.msra.mxu0 0.0
        %718 = vmatprep.subr.mxu0 0.0
        %719 = vmatpush1.msra.mxu0 0.0
        %720 = vmatprep.subr.mxu0 0.0
        %721 = vmatpush1.msra.mxu0 0.0
        %722 = vmatprep.subr.mxu0 0.0
        %723 = vmatpush1.msra.mxu0 0.0
        %724 = vmatprep.subr.mxu0 0.0
        %725 = vmatpush1.msra.mxu0 0.0
        %726 = vmatprep.subr.mxu0 0.0
        %727 = vmatpush1.msra.mxu0 0.0
        %728 = vmatprep.subr.mxu0 0.0
        %729 = vmatpush1.msra.mxu0 0.0
        %730 = vmatprep.subr.mxu0 0.0
        %731 = vmatpush1.msra.mxu0 0.0
        %732 = vmatprep.subr.mxu0 0.0
        %733 = vmatpush1.msra.mxu0 0.0
        %734 = vmatprep.subr.mxu0 0.0
        %735 = vmatpush1.msra.mxu0 0.0
        %736 = vmatprep.subr.mxu0 0.0
        %737 = vmatpush1.msra.mxu0 0.0
        %738 = vmatprep.subr.mxu0 0.0
        %739 = vmatpush1.msra.mxu0 0.0
        %740 = vmatprep.subr.mxu0 0.0
        %741 = vmatpush1.msra.mxu0 0.0
        %742 = vmatprep.subr.mxu0 0.0
        %743 = vmatpush1.msra.mxu0 0.0
        %744 = vmatprep.subr.mxu0 0.0
        %745 = vmatpush1.msra.mxu0 0.0
        %746 = vmatprep.subr.mxu0 0.0
        %747 = vmatpush1.msra.mxu0 %v273
        %748 = vmatprep.subr.mxu0 0.0
        %749 = vmatpush2.msra.mxu0 0.0
        %750 = vmatprep.subr.mxu0 0.0
        %751 = vmatpush2.msra.mxu0 0.0
        %752 = vmatprep.subr.mxu0 0.0
        %753 = vmatpush2.msra.mxu0 0.0
        %754 = vmatprep.subr.mxu0 0.0
        %755 = vmatpush2.msra.mxu0 0.0
        %756 = vmatprep.subr.mxu0 0.0
        %757 = vmatpush2.msra.mxu0 0.0
        %758 = vmatprep.subr.mxu0 0.0
        %759 = vmatpush2.msra.mxu0 0.0
        %760 = vmatprep.subr.mxu0 0.0
        %761 = vmatpush2.msra.mxu0 0.0
        %762 = vmatprep.subr.mxu0 0.0
        %763 = vmatpush2.msra.mxu0 0.0
        %764 = vmatprep.subr.mxu0 0.0
        %765 = vmatpush2.msra.mxu0 0.0
        %766 = vmatprep.subr.mxu0 0.0
        %767 = vmatpush2.msra.mxu0 0.0
        %768 = vmatprep.subr.mxu0 0.0
        %769 = vmatpush2.msra.mxu0 0.0
        %770 = vmatprep.subr.mxu0 0.0
        %771 = vmatpush2.msra.mxu0 0.0
        %772 = vmatprep.subr.mxu0 0.0
        %773 = vmatpush2.msra.mxu0 0.0
        %774 = vmatprep.subr.mxu0 0.0
        %775 = vmatpush2.msra.mxu0 0.0
        %776 = vmatprep.subr.mxu0 0.0
        %777 = vmatpush2.msra.mxu0 0.0
        %778 = vmatprep.subr.mxu0 0.0
        %779 = vmatpush2.msra.mxu0 0.0
        %780 = vmatprep.mubr.f32.mxu0 0.0
        %781 = vmatmul.mubr.f32.gmra.mxu0 %v708
        %v782 = vpop.f32.mrf.mxu0
        %v783 = vadd.f32 0.0, %v782
        %v784 = vpop.f32.mrf.mxu0
        %785 = vmatprep.mubr.f32.mxu0 0.0
        %786 = vmatmul.mubr.f32.gmra.mxu0 %v711
        %v787 = vpop.f32.mrf.mxu0
        %v788 = vadd.f32 0.0, %v787
        %v789 = vpop.f32.mrf.mxu0
        %790 = vmatprep.mubr.f32.mxu0 0.0
        %791 = vmatmul.mubr.f32.gmra.mxu0 %v714
        %v792 = vpop.f32.mrf.mxu0
        %v793 = vadd.f32 0.0, %v792
        %v794 = vpop.f32.mrf.mxu0
        %795 = vdwg.mxu0
        %s796 = scalar_lea.vmem %s264, 24
        %v797 = vld [vmem:[%s796] sm:$0xff]
        %798 = vmatprep.subr.mxu0 0.0
        %799 = vmatpush1.msra.mxu0 0.0
        %800 = vmatprep.subr.mxu0 0.0
        %801 = vmatpush1.msra.mxu0 0.0
        %802 = vmatprep.subr.mxu0 0.0
        %803 = vmatpush1.msra.mxu0 0.0
        %804 = vmatprep.subr.mxu0 0.0
        %805 = vmatpush1.msra.mxu0 0.0
        %806 = vmatprep.subr.mxu0 0.0
        %807 = vmatpush1.msra.mxu0 0.0
        %808 = vmatprep.subr.mxu0 0.0
        %809 = vmatpush1.msra.mxu0 0.0
        %810 = vmatprep.subr.mxu0 0.0
        %811 = vmatpush1.msra.mxu0 0.0
        %812 = vmatprep.subr.mxu0 0.0
        %813 = vmatpush1.msra.mxu0 0.0
        %814 = vmatprep.subr.mxu0 0.0
        %815 = vmatpush1.msra.mxu0 0.0
        %816 = vmatprep.subr.mxu0 0.0
        %817 = vmatpush1.msra.mxu0 0.0
        %818 = vmatprep.subr.mxu0 0.0
        %819 = vmatpush1.msra.mxu0 0.0
        %820 = vmatprep.subr.mxu0 0.0
        %821 = vmatpush1.msra.mxu0 0.0
        %822 = vmatprep.subr.mxu0 0.0
        %823 = vmatpush1.msra.mxu0 0.0
        %824 = vmatprep.subr.mxu0 0.0
        %825 = vmatpush1.msra.mxu0 0.0
        %826 = vmatprep.subr.mxu0 0.0
        %827 = vmatpush1.msra.mxu0 0.0
        %828 = vmatprep.subr.mxu0 0.0
        %829 = vmatpush1.msra.mxu0 %v797
        %830 = vmatprep.subr.mxu0 0.0
        %831 = vmatpush2.msra.mxu0 0.0
        %832 = vmatprep.subr.mxu0 0.0
        %833 = vmatpush2.msra.mxu0 0.0
        %834 = vmatprep.subr.mxu0 0.0
        %835 = vmatpush2.msra.mxu0 0.0
        %836 = vmatprep.subr.mxu0 0.0
        %837 = vmatpush2.msra.mxu0 0.0
        %838 = vmatprep.subr.mxu0 0.0
        %839 = vmatpush2.msra.mxu0 0.0
        %840 = vmatprep.subr.mxu0 0.0
        %841 = vmatpush2.msra.mxu0 0.0
        %842 = vmatprep.subr.mxu0 0.0
        %843 = vmatpush2.msra.mxu0 0.0
        %844 = vmatprep.subr.mxu0 0.0
        %845 = vmatpush2.msra.mxu0 0.0
        %846 = vmatprep.subr.mxu0 0.0
        %847 = vmatpush2.msra.mxu0 0.0
        %848 = vmatprep.subr.mxu0 0.0
        %849 = vmatpush2.msra.mxu0 0.0
        %850 = vmatprep.subr.mxu0 0.0
        %851 = vmatpush2.msra.mxu0 0.0
        %852 = vmatprep.subr.mxu0 0.0
        %853 = vmatpush2.msra.mxu0 0.0
        %854 = vmatprep.subr.mxu0 0.0
        %855 = vmatpush2.msra.mxu0 0.0
        %856 = vmatprep.subr.mxu0 0.0
        %857 = vmatpush2.msra.mxu0 0.0
        %858 = vmatprep.subr.mxu0 0.0
        %859 = vmatpush2.msra.mxu0 0.0
        %860 = vmatprep.subr.mxu0 0.0
        %861 = vmatpush2.msra.mxu0 0.0
        %862 = vmatprep.mubr.f32.mxu0 0.0
        %863 = vmatmul.mubr.f32.gmra.mxu0 %v277
        %v864 = vpop.f32.mrf.mxu0
        %v865 = vadd.f32 0.0, %v864
        %v866 = vpop.f32.mrf.mxu0
        %867 = vmatprep.mubr.f32.mxu0 0.0
        %868 = vmatmul.mubr.f32.gmra.mxu0 %v280
        %v869 = vpop.f32.mrf.mxu0
        %v870 = vadd.f32 0.0, %v869
        %v871 = vpop.f32.mrf.mxu0
        %872 = vmatprep.mubr.f32.mxu0 0.0
        %873 = vmatmul.mubr.f32.gmra.mxu0 %v283
        %v874 = vpop.f32.mrf.mxu0
        %v875 = vadd.f32 0.0, %v874
        %v876 = vpop.f32.mrf.mxu0
        %877 = vdwg.mxu0
        %v879 = vsel %vm275, %v865, 0
        %v882 = vsel %vm275, %v870, 0
        %v885 = vsel %vm275, %v875, 0
        %887 = vmatprep.subr.mxu0 0.0
        %888 = vmatpush1.msra.mxu0 0.0
        %889 = vmatprep.subr.mxu0 0.0
        %890 = vmatpush1.msra.mxu0 0.0
        %891 = vmatprep.subr.mxu0 0.0
        %892 = vmatpush1.msra.mxu0 0.0
        %893 = vmatprep.subr.mxu0 0.0
        %894 = vmatpush1.msra.mxu0 0.0
        %895 = vmatprep.subr.mxu0 0.0
        %896 = vmatpush1.msra.mxu0 0.0
        %897 = vmatprep.subr.mxu0 0.0
        %898 = vmatpush1.msra.mxu0 0.0
        %899 = vmatprep.subr.mxu0 0.0
        %900 = vmatpush1.msra.mxu0 0.0
        %901 = vmatprep.subr.mxu0 0.0
        %902 = vmatpush1.msra.mxu0 0.0
        %903 = vmatprep.subr.mxu0 0.0
        %904 = vmatpush1.msra.mxu0 0.0
        %905 = vmatprep.subr.mxu0 0.0
        %906 = vmatpush1.msra.mxu0 0.0
        %907 = vmatprep.subr.mxu0 0.0
        %908 = vmatpush1.msra.mxu0 0.0
        %909 = vmatprep.subr.mxu0 0.0
        %910 = vmatpush1.msra.mxu0 0.0
        %911 = vmatprep.subr.mxu0 0.0
        %912 = vmatpush1.msra.mxu0 0.0
        %913 = vmatprep.subr.mxu0 0.0
        %914 = vmatpush1.msra.mxu0 0.0
        %915 = vmatprep.subr.mxu0 0.0
        %916 = vmatpush1.msra.mxu0 0.0
        %917 = vmatprep.subr.mxu0 0.0
        %918 = vmatpush1.msra.mxu0 %v273
        %919 = vmatprep.subr.mxu0 0.0
        %920 = vmatpush2.msra.mxu0 0.0
        %921 = vmatprep.subr.mxu0 0.0
        %922 = vmatpush2.msra.mxu0 0.0
        %923 = vmatprep.subr.mxu0 0.0
        %924 = vmatpush2.msra.mxu0 0.0
        %925 = vmatprep.subr.mxu0 0.0
        %926 = vmatpush2.msra.mxu0 0.0
        %927 = vmatprep.subr.mxu0 0.0
        %928 = vmatpush2.msra.mxu0 0.0
        %929 = vmatprep.subr.mxu0 0.0
        %930 = vmatpush2.msra.mxu0 0.0
        %931 = vmatprep.subr.mxu0 0.0
        %932 = vmatpush2.msra.mxu0 0.0
        %933 = vmatprep.subr.mxu0 0.0
        %934 = vmatpush2.msra.mxu0 0.0
        %935 = vmatprep.subr.mxu0 0.0
        %936 = vmatpush2.msra.mxu0 0.0
        %937 = vmatprep.subr.mxu0 0.0
        %938 = vmatpush2.msra.mxu0 0.0
        %939 = vmatprep.subr.mxu0 0.0
        %940 = vmatpush2.msra.mxu0 0.0
        %941 = vmatprep.subr.mxu0 0.0
        %942 = vmatpush2.msra.mxu0 0.0
        %943 = vmatprep.subr.mxu0 0.0
        %944 = vmatpush2.msra.mxu0 0.0
        %945 = vmatprep.subr.mxu0 0.0
        %946 = vmatpush2.msra.mxu0 0.0
        %947 = vmatprep.subr.mxu0 0.0
        %948 = vmatpush2.msra.mxu0 0.0
        %949 = vmatprep.subr.mxu0 0.0
        %950 = vmatpush2.msra.mxu0 0.0
        %951 = vmatprep.mubr.f32.mxu0 0.0
        %952 = vmatmul.mubr.f32.gmra.mxu0 %v879
        %v953 = vpop.f32.mrf.mxu0
        %v954 = vadd.f32 0.0, %v953
        %v955 = vpop.f32.mrf.mxu0
        %956 = vmatprep.mubr.f32.mxu0 0.0
        %957 = vmatmul.mubr.f32.gmra.mxu0 %v882
        %v958 = vpop.f32.mrf.mxu0
        %v959 = vadd.f32 0.0, %v958
        %v960 = vpop.f32.mrf.mxu0
        %961 = vmatprep.mubr.f32.mxu0 0.0
        %962 = vmatmul.mubr.f32.gmra.mxu0 %v885
        %v963 = vpop.f32.mrf.mxu0
        %v964 = vadd.f32 0.0, %v963
        %v965 = vpop.f32.mrf.mxu0
        %966 = vdwg.mxu0
        %v967 = vld [vmem:[%s269] sm:$0xff]
        %v968 = vld [vmem:[%s269 + $0x8] sm:$0xff]
        %v969 = vld [vmem:[%s269 + $0x10] sm:$0x3]
        %v970 = vld [vmem:[%s269 + $0x18] sm:$0xff]
        %v971 = vld [vmem:[%s269 + $0x20] sm:$0xff]
        %v972 = vld [vmem:[%s269 + $0x28] sm:$0x3]
        %v973 = vld [vmem:[%s269 + $0x30] sm:$0xff]
        %v974 = vld [vmem:[%s269 + $0x38] sm:$0xff]
        %v975 = vld [vmem:[%s269 + $0x40] sm:$0x3]
        %v976 = vld [vmem:[%s269 + $0x48] sm:$0xff]
        %v977 = vld [vmem:[%s269 + $0x50] sm:$0xff]
        %v978 = vld [vmem:[%s269 + $0x58] sm:$0x3]
        %v979 = vld [vmem:[%s269 + $0x60] sm:$0xff]
        %v980 = vld [vmem:[%s269 + $0x68] sm:$0xff]
        %v981 = vld [vmem:[%s269 + $0x70] sm:$0x3]
        %v982 = vld [vmem:[%s269 + $0x78] sm:$0xff]
        %v983 = vld [vmem:[%s269 + $0x80] sm:$0xff]
        %v984 = vld [vmem:[%s269 + $0x88] sm:$0x3]
        %v985 = vld [vmem:[%s269 + $0x90] sm:$0xff]
        %v986 = vld [vmem:[%s269 + $0x98] sm:$0xff]
        %v987 = vld [vmem:[%s269 + $0xa0] sm:$0x3]
        %v988 = vld [vmem:[%s269 + $0xa8] sm:$0xff]
        %v989 = vld [vmem:[%s269 + $0xb0] sm:$0xff]
        %v990 = vld [vmem:[%s269 + $0xb8] sm:$0x3]
        %v991 = vld [vmem:[%s269 + $0xc0] sm:$0xff]
        %v992 = vld [vmem:[%s269 + $0xc8] sm:$0xff]
        %v993 = vld [vmem:[%s269 + $0xd0] sm:$0x3]
        %v994 = vld [vmem:[%s269 + $0xd8] sm:$0xff]
        %v995 = vld [vmem:[%s269 + $0xe0] sm:$0xff]
        %v996 = vld [vmem:[%s269 + $0xe8] sm:$0x3]
        %v997 = vld [vmem:[%s269 + $0xf0] sm:$0xff]
        %v998 = vld [vmem:[%s269 + $0xf8] sm:$0xff]
        %v999 = vld [vmem:[%s269 + $0x100] sm:$0x3]
        %v1000 = vld [vmem:[%s269 + $0x108] sm:$0xff]
        %v1001 = vld [vmem:[%s269 + $0x110] sm:$0xff]
        %v1002 = vld [vmem:[%s269 + $0x118] sm:$0x3]
        %v1003 = vld [vmem:[%s269 + $0x120] sm:$0xff]
        %v1004 = vld [vmem:[%s269 + $0x128] sm:$0xff]
        %v1005 = vld [vmem:[%s269 + $0x130] sm:$0x3]
        %v1006 = vld [vmem:[%s269 + $0x138] sm:$0xff]
        %v1007 = vld [vmem:[%s269 + $0x140] sm:$0xff]
        %v1008 = vld [vmem:[%s269 + $0x148] sm:$0x3]
        %v1009 = vld [vmem:[%s269 + $0x150] sm:$0xff]
        %v1010 = vld [vmem:[%s269 + $0x158] sm:$0xff]
        %v1011 = vld [vmem:[%s269 + $0x160] sm:$0x3]
        %v1012 = vld [vmem:[%s269 + $0x168] sm:$0xff]
        %v1013 = vld [vmem:[%s269 + $0x170] sm:$0xff]
        %v1014 = vld [vmem:[%s269 + $0x178] sm:$0x3]
        %v1015 = vld [vmem:[%s269 + $0x180] sm:$0xff]
        %v1016 = vld [vmem:[%s269 + $0x188] sm:$0xff]
        %v1017 = vld [vmem:[%s269 + $0x190] sm:$0x3]
        %v1018 = vld [vmem:[%s269 + $0x198] sm:$0xff]
        %v1019 = vld [vmem:[%s269 + $0x1a0] sm:$0xff]
        %v1020 = vld [vmem:[%s269 + $0x1a8] sm:$0x3]
        %v1021 = vlaneseq
        %v1022 = vshrl.u32 %v1021, 7
        %v1023 = vsub.s32 0, %v1022
        %v1024 = vrot.slane %v441, %v1023
        %1026 = vbcast.lane.b32.xlu0 %v1024, 256
        %v1027 = vpop.permute.xlu0 %1026
        %s1029 = sor.u32 256, 8
        %1030 = vbcast.lane.b32.xlu0 %v1024, %s1029
        %v1031 = vpop.permute.xlu0 %1030
        %s1033 = sor.u32 256, 16
        %1034 = vbcast.lane.b32.xlu0 %v1024, %s1033
        %v1035 = vpop.permute.xlu0 %1034
        %v1036 = vlaneseq
        %v1037 = vshrl.u32 %v1036, 7
        %v1038 = vsub.s32 1, %v1037
        %v1039 = vrot.slane %v441, %v1038
        %1041 = vbcast.lane.b32.xlu0 %v1039, 256
        %v1042 = vpop.permute.xlu0 %1041
        %s1044 = sor.u32 256, 8
        %1045 = vbcast.lane.b32.xlu0 %v1039, %s1044
        %v1046 = vpop.permute.xlu0 %1045
        %s1048 = sor.u32 256, 16
        %1049 = vbcast.lane.b32.xlu0 %v1039, %s1048
        %v1050 = vpop.permute.xlu0 %1049
        %v1051 = vlaneseq
        %v1052 = vshrl.u32 %v1051, 7
        %v1053 = vsub.s32 2, %v1052
        %v1054 = vrot.slane %v441, %v1053
        %1056 = vbcast.lane.b32.xlu0 %v1054, 256
        %v1057 = vpop.permute.xlu0 %1056
        %s1059 = sor.u32 256, 8
        %1060 = vbcast.lane.b32.xlu0 %v1054, %s1059
        %v1061 = vpop.permute.xlu0 %1060
        %s1063 = sor.u32 256, 16
        %1064 = vbcast.lane.b32.xlu0 %v1054, %s1063
        %v1065 = vpop.permute.xlu0 %1064
        %v1066 = vlaneseq
        %v1067 = vshrl.u32 %v1066, 7
        %v1068 = vsub.s32 3, %v1067
        %v1069 = vrot.slane %v441, %v1068
        %1071 = vbcast.lane.b32.xlu0 %v1069, 256
        %v1072 = vpop.permute.xlu0 %1071
        %s1074 = sor.u32 256, 8
        %1075 = vbcast.lane.b32.xlu0 %v1069, %s1074
        %v1076 = vpop.permute.xlu0 %1075
        %s1078 = sor.u32 256, 16
        %1079 = vbcast.lane.b32.xlu0 %v1069, %s1078
        %v1080 = vpop.permute.xlu0 %1079
        %v1081 = vlaneseq
        %v1082 = vshrl.u32 %v1081, 7
        %v1083 = vsub.s32 4, %v1082
        %v1084 = vrot.slane %v441, %v1083
        %1086 = vbcast.lane.b32.xlu0 %v1084, 256
        %v1087 = vpop.permute.xlu0 %1086
        %s1089 = sor.u32 256, 8
        %1090 = vbcast.lane.b32.xlu0 %v1084, %s1089
        %v1091 = vpop.permute.xlu0 %1090
        %s1093 = sor.u32 256, 16
        %1094 = vbcast.lane.b32.xlu0 %v1084, %s1093
        %v1095 = vpop.permute.xlu0 %1094
        %v1096 = vlaneseq
        %v1097 = vshrl.u32 %v1096, 7
        %v1098 = vsub.s32 5, %v1097
        %v1099 = vrot.slane %v441, %v1098
        %1101 = vbcast.lane.b32.xlu0 %v1099, 256
        %v1102 = vpop.permute.xlu0 %1101
        %s1104 = sor.u32 256, 8
        %1105 = vbcast.lane.b32.xlu0 %v1099, %s1104
        %v1106 = vpop.permute.xlu0 %1105
        %s1108 = sor.u32 256, 16
        %1109 = vbcast.lane.b32.xlu0 %v1099, %s1108
        %v1110 = vpop.permute.xlu0 %1109
        %v1111 = vlaneseq
        %v1112 = vshrl.u32 %v1111, 7
        %v1113 = vsub.s32 6, %v1112
        %v1114 = vrot.slane %v441, %v1113
        %1116 = vbcast.lane.b32.xlu0 %v1114, 256
        %v1117 = vpop.permute.xlu0 %1116
        %s1119 = sor.u32 256, 8
        %1120 = vbcast.lane.b32.xlu0 %v1114, %s1119
        %v1121 = vpop.permute.xlu0 %1120
        %s1123 = sor.u32 256, 16
        %1124 = vbcast.lane.b32.xlu0 %v1114, %s1123
        %v1125 = vpop.permute.xlu0 %1124
        %v1126 = vlaneseq
        %v1127 = vshrl.u32 %v1126, 7
        %v1128 = vsub.s32 7, %v1127
        %v1129 = vrot.slane %v441, %v1128
        %1131 = vbcast.lane.b32.xlu0 %v1129, 256
        %v1132 = vpop.permute.xlu0 %1131
        %s1134 = sor.u32 256, 8
        %1135 = vbcast.lane.b32.xlu0 %v1129, %s1134
        %v1136 = vpop.permute.xlu0 %1135
        %s1138 = sor.u32 256, 16
        %1139 = vbcast.lane.b32.xlu0 %v1129, %s1138
        %v1140 = vpop.permute.xlu0 %1139
        %v1141 = vlaneseq
        %v1142 = vshrl.u32 %v1141, 7
        %v1143 = vsub.s32 0, %v1142
        %v1144 = vrot.slane %v446, %v1143
        %1146 = vbcast.lane.b32.xlu0 %v1144, 256
        %v1147 = vpop.permute.xlu0 %1146
        %s1149 = sor.u32 256, 8
        %1150 = vbcast.lane.b32.xlu0 %v1144, %s1149
        %v1151 = vpop.permute.xlu0 %1150
        %s1153 = sor.u32 256, 16
        %1154 = vbcast.lane.b32.xlu0 %v1144, %s1153
        %v1155 = vpop.permute.xlu0 %1154
        %v1156 = vlaneseq
        %v1157 = vshrl.u32 %v1156, 7
        %v1158 = vsub.s32 1, %v1157
        %v1159 = vrot.slane %v446, %v1158
        %1161 = vbcast.lane.b32.xlu0 %v1159, 256
        %v1162 = vpop.permute.xlu0 %1161
        %s1164 = sor.u32 256, 8
        %1165 = vbcast.lane.b32.xlu0 %v1159, %s1164
        %v1166 = vpop.permute.xlu0 %1165
        %s1168 = sor.u32 256, 16
        %1169 = vbcast.lane.b32.xlu0 %v1159, %s1168
        %v1170 = vpop.permute.xlu0 %1169
        %v1171 = vlaneseq
        %v1172 = vshrl.u32 %v1171, 7
        %v1173 = vsub.s32 2, %v1172
        %v1174 = vrot.slane %v446, %v1173
        %1176 = vbcast.lane.b32.xlu0 %v1174, 256
        %v1177 = vpop.permute.xlu0 %1176
        %s1179 = sor.u32 256, 8
        %1180 = vbcast.lane.b32.xlu0 %v1174, %s1179
        %v1181 = vpop.permute.xlu0 %1180
        %s1183 = sor.u32 256, 16
        %1184 = vbcast.lane.b32.xlu0 %v1174, %s1183
        %v1185 = vpop.permute.xlu0 %1184
        %v1186 = vlaneseq
        %v1187 = vshrl.u32 %v1186, 7
        %v1188 = vsub.s32 3, %v1187
        %v1189 = vrot.slane %v446, %v1188
        %1191 = vbcast.lane.b32.xlu0 %v1189, 256
        %v1192 = vpop.permute.xlu0 %1191
        %s1194 = sor.u32 256, 8
        %1195 = vbcast.lane.b32.xlu0 %v1189, %s1194
        %v1196 = vpop.permute.xlu0 %1195
        %s1198 = sor.u32 256, 16
        %1199 = vbcast.lane.b32.xlu0 %v1189, %s1198
        %v1200 = vpop.permute.xlu0 %1199
        %v1201 = vlaneseq
        %v1202 = vshrl.u32 %v1201, 7
        %v1203 = vsub.s32 4, %v1202
        %v1204 = vrot.slane %v446, %v1203
        %1206 = vbcast.lane.b32.xlu0 %v1204, 256
        %v1207 = vpop.permute.xlu0 %1206
        %s1209 = sor.u32 256, 8
        %1210 = vbcast.lane.b32.xlu0 %v1204, %s1209
        %v1211 = vpop.permute.xlu0 %1210
        %s1213 = sor.u32 256, 16
        %1214 = vbcast.lane.b32.xlu0 %v1204, %s1213
        %v1215 = vpop.permute.xlu0 %1214
        %v1216 = vlaneseq
        %v1217 = vshrl.u32 %v1216, 7
        %v1218 = vsub.s32 5, %v1217
        %v1219 = vrot.slane %v446, %v1218
        %1221 = vbcast.lane.b32.xlu0 %v1219, 256
        %v1222 = vpop.permute.xlu0 %1221
        %s1224 = sor.u32 256, 8
        %1225 = vbcast.lane.b32.xlu0 %v1219, %s1224
        %v1226 = vpop.permute.xlu0 %1225
        %s1228 = sor.u32 256, 16
        %1229 = vbcast.lane.b32.xlu0 %v1219, %s1228
        %v1230 = vpop.permute.xlu0 %1229
        %v1231 = vlaneseq
        %v1232 = vshrl.u32 %v1231, 7
        %v1233 = vsub.s32 6, %v1232
        %v1234 = vrot.slane %v446, %v1233
        %1236 = vbcast.lane.b32.xlu0 %v1234, 256
        %v1237 = vpop.permute.xlu0 %1236
        %s1239 = sor.u32 256, 8
        %1240 = vbcast.lane.b32.xlu0 %v1234, %s1239
        %v1241 = vpop.permute.xlu0 %1240
        %s1243 = sor.u32 256, 16
        %1244 = vbcast.lane.b32.xlu0 %v1234, %s1243
        %v1245 = vpop.permute.xlu0 %1244
        %v1246 = vlaneseq
        %v1247 = vshrl.u32 %v1246, 7
        %v1248 = vsub.s32 7, %v1247
        %v1249 = vrot.slane %v446, %v1248
        %1251 = vbcast.lane.b32.xlu0 %v1249, 256
        %v1252 = vpop.permute.xlu0 %1251
        %s1254 = sor.u32 256, 8
        %1255 = vbcast.lane.b32.xlu0 %v1249, %s1254
        %v1256 = vpop.permute.xlu0 %1255
        %s1258 = sor.u32 256, 16
        %1259 = vbcast.lane.b32.xlu0 %v1249, %s1258
        %v1260 = vpop.permute.xlu0 %1259
        %v1261 = vlaneseq
        %v1262 = vshrl.u32 %v1261, 7
        %v1263 = vsub.s32 0, %v1262
        %v1264 = vrot.slane %v451, %v1263
        %1266 = vbcast.lane.b32.xlu0 %v1264, 256
        %v1267 = vpop.permute.xlu0 %1266
        %s1269 = sor.u32 256, 8
        %1270 = vbcast.lane.b32.xlu0 %v1264, %s1269
        %v1271 = vpop.permute.xlu0 %1270
        %s1273 = sor.u32 256, 16
        %1274 = vbcast.lane.b32.xlu0 %v1264, %s1273
        %v1275 = vpop.permute.xlu0 %1274
        %v1276 = vlaneseq
        %v1277 = vshrl.u32 %v1276, 7
        %v1278 = vsub.s32 1, %v1277
        %v1279 = vrot.slane %v451, %v1278
        %1281 = vbcast.lane.b32.xlu0 %v1279, 256
        %v1282 = vpop.permute.xlu0 %1281
        %s1284 = sor.u32 256, 8
        %1285 = vbcast.lane.b32.xlu0 %v1279, %s1284
        %v1286 = vpop.permute.xlu0 %1285
        %s1288 = sor.u32 256, 16
        %1289 = vbcast.lane.b32.xlu0 %v1279, %s1288
        %v1290 = vpop.permute.xlu0 %1289
        %v1291 = vlaneseq
        %v1292 = vshrl.u32 %v1291, 7
        %v1293 = vsub.s32 0, %v1292
        %v1294 = vrot.slane %v612, %v1293
        %1296 = vbcast.lane.b32.xlu0 %v1294, 256
        %v1297 = vpop.permute.xlu0 %1296
        %s1299 = sor.u32 256, 8
        %1300 = vbcast.lane.b32.xlu0 %v1294, %s1299
        %v1301 = vpop.permute.xlu0 %1300
        %s1303 = sor.u32 256, 16
        %1304 = vbcast.lane.b32.xlu0 %v1294, %s1303
        %v1305 = vpop.permute.xlu0 %1304
        %v1306 = vlaneseq
        %v1307 = vshrl.u32 %v1306, 7
        %v1308 = vsub.s32 1, %v1307
        %v1309 = vrot.slane %v612, %v1308
        %1311 = vbcast.lane.b32.xlu0 %v1309, 256
        %v1312 = vpop.permute.xlu0 %1311
        %s1314 = sor.u32 256, 8
        %1315 = vbcast.lane.b32.xlu0 %v1309, %s1314
        %v1316 = vpop.permute.xlu0 %1315
        %s1318 = sor.u32 256, 16
        %1319 = vbcast.lane.b32.xlu0 %v1309, %s1318
        %v1320 = vpop.permute.xlu0 %1319
        %v1321 = vlaneseq
        %v1322 = vshrl.u32 %v1321, 7
        %v1323 = vsub.s32 2, %v1322
        %v1324 = vrot.slane %v612, %v1323
        %1326 = vbcast.lane.b32.xlu0 %v1324, 256
        %v1327 = vpop.permute.xlu0 %1326
        %s1329 = sor.u32 256, 8
        %1330 = vbcast.lane.b32.xlu0 %v1324, %s1329
        %v1331 = vpop.permute.xlu0 %1330
        %s1333 = sor.u32 256, 16
        %1334 = vbcast.lane.b32.xlu0 %v1324, %s1333
        %v1335 = vpop.permute.xlu0 %1334
        %v1336 = vlaneseq
        %v1337 = vshrl.u32 %v1336, 7
        %v1338 = vsub.s32 3, %v1337
        %v1339 = vrot.slane %v612, %v1338
        %1341 = vbcast.lane.b32.xlu0 %v1339, 256
        %v1342 = vpop.permute.xlu0 %1341
        %s1344 = sor.u32 256, 8
        %1345 = vbcast.lane.b32.xlu0 %v1339, %s1344
        %v1346 = vpop.permute.xlu0 %1345
        %s1348 = sor.u32 256, 16
        %1349 = vbcast.lane.b32.xlu0 %v1339, %s1348
        %v1350 = vpop.permute.xlu0 %1349
        %v1351 = vlaneseq
        %v1352 = vshrl.u32 %v1351, 7
        %v1353 = vsub.s32 4, %v1352
        %v1354 = vrot.slane %v612, %v1353
        %1356 = vbcast.lane.b32.xlu0 %v1354, 256
        %v1357 = vpop.permute.xlu0 %1356
        %s1359 = sor.u32 256, 8
        %1360 = vbcast.lane.b32.xlu0 %v1354, %s1359
        %v1361 = vpop.permute.xlu0 %1360
        %s1363 = sor.u32 256, 16
        %1364 = vbcast.lane.b32.xlu0 %v1354, %s1363
        %v1365 = vpop.permute.xlu0 %1364
        %v1366 = vlaneseq
        %v1367 = vshrl.u32 %v1366, 7
        %v1368 = vsub.s32 5, %v1367
        %v1369 = vrot.slane %v612, %v1368
        %1371 = vbcast.lane.b32.xlu0 %v1369, 256
        %v1372 = vpop.permute.xlu0 %1371
        %s1374 = sor.u32 256, 8
        %1375 = vbcast.lane.b32.xlu0 %v1369, %s1374
        %v1376 = vpop.permute.xlu0 %1375
        %s1378 = sor.u32 256, 16
        %1379 = vbcast.lane.b32.xlu0 %v1369, %s1378
        %v1380 = vpop.permute.xlu0 %1379
        %v1381 = vlaneseq
        %v1382 = vshrl.u32 %v1381, 7
        %v1383 = vsub.s32 6, %v1382
        %v1384 = vrot.slane %v612, %v1383
        %1386 = vbcast.lane.b32.xlu0 %v1384, 256
        %v1387 = vpop.permute.xlu0 %1386
        %s1389 = sor.u32 256, 8
        %1390 = vbcast.lane.b32.xlu0 %v1384, %s1389
        %v1391 = vpop.permute.xlu0 %1390
        %s1393 = sor.u32 256, 16
        %1394 = vbcast.lane.b32.xlu0 %v1384, %s1393
        %v1395 = vpop.permute.xlu0 %1394
        %v1396 = vlaneseq
        %v1397 = vshrl.u32 %v1396, 7
        %v1398 = vsub.s32 7, %v1397
        %v1399 = vrot.slane %v612, %v1398
        %1401 = vbcast.lane.b32.xlu0 %v1399, 256
        %v1402 = vpop.permute.xlu0 %1401
        %s1404 = sor.u32 256, 8
        %1405 = vbcast.lane.b32.xlu0 %v1399, %s1404
        %v1406 = vpop.permute.xlu0 %1405
        %s1408 = sor.u32 256, 16
        %1409 = vbcast.lane.b32.xlu0 %v1399, %s1408
        %v1410 = vpop.permute.xlu0 %1409
        %v1411 = vlaneseq
        %v1412 = vshrl.u32 %v1411, 7
        %v1413 = vsub.s32 0, %v1412
        %v1414 = vrot.slane %v617, %v1413
        %1416 = vbcast.lane.b32.xlu0 %v1414, 256
        %v1417 = vpop.permute.xlu0 %1416
        %s1419 = sor.u32 256, 8
        %1420 = vbcast.lane.b32.xlu0 %v1414, %s1419
        %v1421 = vpop.permute.xlu0 %1420
        %s1423 = sor.u32 256, 16
        %1424 = vbcast.lane.b32.xlu0 %v1414, %s1423
        %v1425 = vpop.permute.xlu0 %1424
        %v1426 = vlaneseq
        %v1427 = vshrl.u32 %v1426, 7
        %v1428 = vsub.s32 1, %v1427
        %v1429 = vrot.slane %v617, %v1428
        %1431 = vbcast.lane.b32.xlu0 %v1429, 256
        %v1432 = vpop.permute.xlu0 %1431
        %s1434 = sor.u32 256, 8
        %1435 = vbcast.lane.b32.xlu0 %v1429, %s1434
        %v1436 = vpop.permute.xlu0 %1435
        %s1438 = sor.u32 256, 16
        %1439 = vbcast.lane.b32.xlu0 %v1429, %s1438
        %v1440 = vpop.permute.xlu0 %1439
        %v1441 = vlaneseq
        %v1442 = vshrl.u32 %v1441, 7
        %v1443 = vsub.s32 2, %v1442
        %v1444 = vrot.slane %v617, %v1443
        %1446 = vbcast.lane.b32.xlu0 %v1444, 256
        %v1447 = vpop.permute.xlu0 %1446
        %s1449 = sor.u32 256, 8
        %1450 = vbcast.lane.b32.xlu0 %v1444, %s1449
        %v1451 = vpop.permute.xlu0 %1450
        %s1453 = sor.u32 256, 16
        %1454 = vbcast.lane.b32.xlu0 %v1444, %s1453
        %v1455 = vpop.permute.xlu0 %1454
        %v1456 = vlaneseq
        %v1457 = vshrl.u32 %v1456, 7
        %v1458 = vsub.s32 3, %v1457
        %v1459 = vrot.slane %v617, %v1458
        %1461 = vbcast.lane.b32.xlu0 %v1459, 256
        %v1462 = vpop.permute.xlu0 %1461
        %s1464 = sor.u32 256, 8
        %1465 = vbcast.lane.b32.xlu0 %v1459, %s1464
        %v1466 = vpop.permute.xlu0 %1465
        %s1468 = sor.u32 256, 16
        %1469 = vbcast.lane.b32.xlu0 %v1459, %s1468
        %v1470 = vpop.permute.xlu0 %1469
        %v1471 = vlaneseq
        %v1472 = vshrl.u32 %v1471, 7
        %v1473 = vsub.s32 4, %v1472
        %v1474 = vrot.slane %v617, %v1473
        %1476 = vbcast.lane.b32.xlu0 %v1474, 256
        %v1477 = vpop.permute.xlu0 %1476
        %s1479 = sor.u32 256, 8
        %1480 = vbcast.lane.b32.xlu0 %v1474, %s1479
        %v1481 = vpop.permute.xlu0 %1480
        %s1483 = sor.u32 256, 16
        %1484 = vbcast.lane.b32.xlu0 %v1474, %s1483
        %v1485 = vpop.permute.xlu0 %1484
        %v1486 = vlaneseq
        %v1487 = vshrl.u32 %v1486, 7
        %v1488 = vsub.s32 5, %v1487
        %v1489 = vrot.slane %v617, %v1488
        %1491 = vbcast.lane.b32.xlu0 %v1489, 256
        %v1492 = vpop.permute.xlu0 %1491
        %s1494 = sor.u32 256, 8
        %1495 = vbcast.lane.b32.xlu0 %v1489, %s1494
        %v1496 = vpop.permute.xlu0 %1495
        %s1498 = sor.u32 256, 16
        %1499 = vbcast.lane.b32.xlu0 %v1489, %s1498
        %v1500 = vpop.permute.xlu0 %1499
        %v1501 = vlaneseq
        %v1502 = vshrl.u32 %v1501, 7
        %v1503 = vsub.s32 6, %v1502
        %v1504 = vrot.slane %v617, %v1503
        %1506 = vbcast.lane.b32.xlu0 %v1504, 256
        %v1507 = vpop.permute.xlu0 %1506
        %s1509 = sor.u32 256, 8
        %1510 = vbcast.lane.b32.xlu0 %v1504, %s1509
        %v1511 = vpop.permute.xlu0 %1510
        %s1513 = sor.u32 256, 16
        %1514 = vbcast.lane.b32.xlu0 %v1504, %s1513
        %v1515 = vpop.permute.xlu0 %1514
        %v1516 = vlaneseq
        %v1517 = vshrl.u32 %v1516, 7
        %v1518 = vsub.s32 7, %v1517
        %v1519 = vrot.slane %v617, %v1518
        %1521 = vbcast.lane.b32.xlu0 %v1519, 256
        %v1522 = vpop.permute.xlu0 %1521
        %s1524 = sor.u32 256, 8
        %1525 = vbcast.lane.b32.xlu0 %v1519, %s1524
        %v1526 = vpop.permute.xlu0 %1525
        %s1528 = sor.u32 256, 16
        %1529 = vbcast.lane.b32.xlu0 %v1519, %s1528
        %v1530 = vpop.permute.xlu0 %1529
        %v1531 = vlaneseq
        %v1532 = vshrl.u32 %v1531, 7
        %v1533 = vsub.s32 0, %v1532
        %v1534 = vrot.slane %v622, %v1533
        %1536 = vbcast.lane.b32.xlu0 %v1534, 256
        %v1537 = vpop.permute.xlu0 %1536
        %s1539 = sor.u32 256, 8
        %1540 = vbcast.lane.b32.xlu0 %v1534, %s1539
        %v1541 = vpop.permute.xlu0 %1540
        %s1543 = sor.u32 256, 16
        %1544 = vbcast.lane.b32.xlu0 %v1534, %s1543
        %v1545 = vpop.permute.xlu0 %1544
        %v1546 = vlaneseq
        %v1547 = vshrl.u32 %v1546, 7
        %v1548 = vsub.s32 1, %v1547
        %v1549 = vrot.slane %v622, %v1548
        %1551 = vbcast.lane.b32.xlu0 %v1549, 256
        %v1552 = vpop.permute.xlu0 %1551
        %s1554 = sor.u32 256, 8
        %1555 = vbcast.lane.b32.xlu0 %v1549, %s1554
        %v1556 = vpop.permute.xlu0 %1555
        %s1558 = sor.u32 256, 16
        %1559 = vbcast.lane.b32.xlu0 %v1549, %s1558
        %v1560 = vpop.permute.xlu0 %1559
        %v1561 = vlaneseq
        %v1562 = vshrl.u32 %v1561, 7
        %v1563 = vsub.s32 0, %v1562
        %v1564 = vrot.slane %v783, %v1563
        %1566 = vbcast.lane.b32.xlu0 %v1564, 256
        %v1567 = vpop.permute.xlu0 %1566
        %s1569 = sor.u32 256, 8
        %1570 = vbcast.lane.b32.xlu0 %v1564, %s1569
        %v1571 = vpop.permute.xlu0 %1570
        %s1573 = sor.u32 256, 16
        %1574 = vbcast.lane.b32.xlu0 %v1564, %s1573
        %v1575 = vpop.permute.xlu0 %1574
        %v1576 = vlaneseq
        %v1577 = vshrl.u32 %v1576, 7
        %v1578 = vsub.s32 1, %v1577
        %v1579 = vrot.slane %v783, %v1578
        %1581 = vbcast.lane.b32.xlu0 %v1579, 256
        %v1582 = vpop.permute.xlu0 %1581
        %s1584 = sor.u32 256, 8
        %1585 = vbcast.lane.b32.xlu0 %v1579, %s1584
        %v1586 = vpop.permute.xlu0 %1585
        %s1588 = sor.u32 256, 16
        %1589 = vbcast.lane.b32.xlu0 %v1579, %s1588
        %v1590 = vpop.permute.xlu0 %1589
        %v1591 = vlaneseq
        %v1592 = vshrl.u32 %v1591, 7
        %v1593 = vsub.s32 2, %v1592
        %v1594 = vrot.slane %v783, %v1593
        %1596 = vbcast.lane.b32.xlu0 %v1594, 256
        %v1597 = vpop.permute.xlu0 %1596
        %s1599 = sor.u32 256, 8
        %1600 = vbcast.lane.b32.xlu0 %v1594, %s1599
        %v1601 = vpop.permute.xlu0 %1600
        %s1603 = sor.u32 256, 16
        %1604 = vbcast.lane.b32.xlu0 %v1594, %s1603
        %v1605 = vpop.permute.xlu0 %1604
        %v1606 = vlaneseq
        %v1607 = vshrl.u32 %v1606, 7
        %v1608 = vsub.s32 3, %v1607
        %v1609 = vrot.slane %v783, %v1608
        %1611 = vbcast.lane.b32.xlu0 %v1609, 256
        %v1612 = vpop.permute.xlu0 %1611
        %s1614 = sor.u32 256, 8
        %1615 = vbcast.lane.b32.xlu0 %v1609, %s1614
        %v1616 = vpop.permute.xlu0 %1615
        %s1618 = sor.u32 256, 16
        %1619 = vbcast.lane.b32.xlu0 %v1609, %s1618
        %v1620 = vpop.permute.xlu0 %1619
        %v1621 = vlaneseq
        %v1622 = vshrl.u32 %v1621, 7
        %v1623 = vsub.s32 4, %v1622
        %v1624 = vrot.slane %v783, %v1623
        %1626 = vbcast.lane.b32.xlu0 %v1624, 256
        %v1627 = vpop.permute.xlu0 %1626
        %s1629 = sor.u32 256, 8
        %1630 = vbcast.lane.b32.xlu0 %v1624, %s1629
        %v1631 = vpop.permute.xlu0 %1630
        %s1633 = sor.u32 256, 16
        %1634 = vbcast.lane.b32.xlu0 %v1624, %s1633
        %v1635 = vpop.permute.xlu0 %1634
        %v1636 = vlaneseq
        %v1637 = vshrl.u32 %v1636, 7
        %v1638 = vsub.s32 5, %v1637
        %v1639 = vrot.slane %v783, %v1638
        %1641 = vbcast.lane.b32.xlu0 %v1639, 256
        %v1642 = vpop.permute.xlu0 %1641
        %s1644 = sor.u32 256, 8
        %1645 = vbcast.lane.b32.xlu0 %v1639, %s1644
        %v1646 = vpop.permute.xlu0 %1645
        %s1648 = sor.u32 256, 16
        %1649 = vbcast.lane.b32.xlu0 %v1639, %s1648
        %v1650 = vpop.permute.xlu0 %1649
        %v1651 = vlaneseq
        %v1652 = vshrl.u32 %v1651, 7
        %v1653 = vsub.s32 6, %v1652
        %v1654 = vrot.slane %v783, %v1653
        %1656 = vbcast.lane.b32.xlu0 %v1654, 256
        %v1657 = vpop.permute.xlu0 %1656
        %s1659 = sor.u32 256, 8
        %1660 = vbcast.lane.b32.xlu0 %v1654, %s1659
        %v1661 = vpop.permute.xlu0 %1660
        %s1663 = sor.u32 256, 16
        %1664 = vbcast.lane.b32.xlu0 %v1654, %s1663
        %v1665 = vpop.permute.xlu0 %1664
        %v1666 = vlaneseq
        %v1667 = vshrl.u32 %v1666, 7
        %v1668 = vsub.s32 7, %v1667
        %v1669 = vrot.slane %v783, %v1668
        %1671 = vbcast.lane.b32.xlu0 %v1669, 256
        %v1672 = vpop.permute.xlu0 %1671
        %s1674 = sor.u32 256, 8
        %1675 = vbcast.lane.b32.xlu0 %v1669, %s1674
        %v1676 = vpop.permute.xlu0 %1675
        %s1678 = sor.u32 256, 16
        %1679 = vbcast.lane.b32.xlu0 %v1669, %s1678
        %v1680 = vpop.permute.xlu0 %1679
        %v1681 = vlaneseq
        %v1682 = vshrl.u32 %v1681, 7
        %v1683 = vsub.s32 0, %v1682
        %v1684 = vrot.slane %v788, %v1683
        %1686 = vbcast.lane.b32.xlu0 %v1684, 256
        %v1687 = vpop.permute.xlu0 %1686
        %s1689 = sor.u32 256, 8
        %1690 = vbcast.lane.b32.xlu0 %v1684, %s1689
        %v1691 = vpop.permute.xlu0 %1690
        %s1693 = sor.u32 256, 16
        %1694 = vbcast.lane.b32.xlu0 %v1684, %s1693
        %v1695 = vpop.permute.xlu0 %1694
        %v1696 = vlaneseq
        %v1697 = vshrl.u32 %v1696, 7
        %v1698 = vsub.s32 1, %v1697
        %v1699 = vrot.slane %v788, %v1698
        %1701 = vbcast.lane.b32.xlu0 %v1699, 256
        %v1702 = vpop.permute.xlu0 %1701
        %s1704 = sor.u32 256, 8
        %1705 = vbcast.lane.b32.xlu0 %v1699, %s1704
        %v1706 = vpop.permute.xlu0 %1705
        %s1708 = sor.u32 256, 16
        %1709 = vbcast.lane.b32.xlu0 %v1699, %s1708
        %v1710 = vpop.permute.xlu0 %1709
        %v1711 = vlaneseq
        %v1712 = vshrl.u32 %v1711, 7
        %v1713 = vsub.s32 2, %v1712
        %v1714 = vrot.slane %v788, %v1713
        %1716 = vbcast.lane.b32.xlu0 %v1714, 256
        %v1717 = vpop.permute.xlu0 %1716
        %s1719 = sor.u32 256, 8
        %1720 = vbcast.lane.b32.xlu0 %v1714, %s1719
        %v1721 = vpop.permute.xlu0 %1720
        %s1723 = sor.u32 256, 16
        %1724 = vbcast.lane.b32.xlu0 %v1714, %s1723
        %v1725 = vpop.permute.xlu0 %1724
        %v1726 = vlaneseq
        %v1727 = vshrl.u32 %v1726, 7
        %v1728 = vsub.s32 3, %v1727
        %v1729 = vrot.slane %v788, %v1728
        %1731 = vbcast.lane.b32.xlu0 %v1729, 256
        %v1732 = vpop.permute.xlu0 %1731
        %s1734 = sor.u32 256, 8
        %1735 = vbcast.lane.b32.xlu0 %v1729, %s1734
        %v1736 = vpop.permute.xlu0 %1735
        %s1738 = sor.u32 256, 16
        %1739 = vbcast.lane.b32.xlu0 %v1729, %s1738
        %v1740 = vpop.permute.xlu0 %1739
        %v1741 = vlaneseq
        %v1742 = vshrl.u32 %v1741, 7
        %v1743 = vsub.s32 4, %v1742
        %v1744 = vrot.slane %v788, %v1743
        %1746 = vbcast.lane.b32.xlu0 %v1744, 256
        %v1747 = vpop.permute.xlu0 %1746
        %s1749 = sor.u32 256, 8
        %1750 = vbcast.lane.b32.xlu0 %v1744, %s1749
        %v1751 = vpop.permute.xlu0 %1750
        %s1753 = sor.u32 256, 16
        %1754 = vbcast.lane.b32.xlu0 %v1744, %s1753
        %v1755 = vpop.permute.xlu0 %1754
        %v1756 = vlaneseq
        %v1757 = vshrl.u32 %v1756, 7
        %v1758 = vsub.s32 5, %v1757
        %v1759 = vrot.slane %v788, %v1758
        %1761 = vbcast.lane.b32.xlu0 %v1759, 256
        %v1762 = vpop.permute.xlu0 %1761
        %s1764 = sor.u32 256, 8
        %1765 = vbcast.lane.b32.xlu0 %v1759, %s1764
        %v1766 = vpop.permute.xlu0 %1765
        %s1768 = sor.u32 256, 16
        %1769 = vbcast.lane.b32.xlu0 %v1759, %s1768
        %v1770 = vpop.permute.xlu0 %1769
        %v1771 = vlaneseq
        %v1772 = vshrl.u32 %v1771, 7
        %v1773 = vsub.s32 6, %v1772
        %v1774 = vrot.slane %v788, %v1773
        %1776 = vbcast.lane.b32.xlu0 %v1774, 256
        %v1777 = vpop.permute.xlu0 %1776
        %s1779 = sor.u32 256, 8
        %1780 = vbcast.lane.b32.xlu0 %v1774, %s1779
        %v1781 = vpop.permute.xlu0 %1780
        %s1783 = sor.u32 256, 16
        %1784 = vbcast.lane.b32.xlu0 %v1774, %s1783
        %v1785 = vpop.permute.xlu0 %1784
        %v1786 = vlaneseq
        %v1787 = vshrl.u32 %v1786, 7
        %v1788 = vsub.s32 7, %v1787
        %v1789 = vrot.slane %v788, %v1788
        %1791 = vbcast.lane.b32.xlu0 %v1789, 256
        %v1792 = vpop.permute.xlu0 %1791
        %s1794 = sor.u32 256, 8
        %1795 = vbcast.lane.b32.xlu0 %v1789, %s1794
        %v1796 = vpop.permute.xlu0 %1795
        %s1798 = sor.u32 256, 16
        %1799 = vbcast.lane.b32.xlu0 %v1789, %s1798
        %v1800 = vpop.permute.xlu0 %1799
        %v1801 = vlaneseq
        %v1802 = vshrl.u32 %v1801, 7
        %v1803 = vsub.s32 0, %v1802
        %v1804 = vrot.slane %v793, %v1803
        %1806 = vbcast.lane.b32.xlu0 %v1804, 256
        %v1807 = vpop.permute.xlu0 %1806
        %s1809 = sor.u32 256, 8
        %1810 = vbcast.lane.b32.xlu0 %v1804, %s1809
        %v1811 = vpop.permute.xlu0 %1810
        %s1813 = sor.u32 256, 16
        %1814 = vbcast.lane.b32.xlu0 %v1804, %s1813
        %v1815 = vpop.permute.xlu0 %1814
        %v1816 = vlaneseq
        %v1817 = vshrl.u32 %v1816, 7
        %v1818 = vsub.s32 1, %v1817
        %v1819 = vrot.slane %v793, %v1818
        %1821 = vbcast.lane.b32.xlu0 %v1819, 256
        %v1822 = vpop.permute.xlu0 %1821
        %s1824 = sor.u32 256, 8
        %1825 = vbcast.lane.b32.xlu0 %v1819, %s1824
        %v1826 = vpop.permute.xlu0 %1825
        %s1828 = sor.u32 256, 16
        %1829 = vbcast.lane.b32.xlu0 %v1819, %s1828
        %v1830 = vpop.permute.xlu0 %1829
        %v1831 = vlaneseq
        %v1832 = vshrl.u32 %v1831, 7
        %v1833 = vsub.s32 0, %v1832
        %v1834 = vrot.slane %v954, %v1833
        %1836 = vbcast.lane.b32.xlu0 %v1834, 256
        %v1837 = vpop.permute.xlu0 %1836
        %s1839 = sor.u32 256, 8
        %1840 = vbcast.lane.b32.xlu0 %v1834, %s1839
        %v1841 = vpop.permute.xlu0 %1840
        %s1843 = sor.u32 256, 16
        %1844 = vbcast.lane.b32.xlu0 %v1834, %s1843
        %v1845 = vpop.permute.xlu0 %1844
        %v1846 = vlaneseq
        %v1847 = vshrl.u32 %v1846, 7
        %v1848 = vsub.s32 1, %v1847
        %v1849 = vrot.slane %v954, %v1848
        %1851 = vbcast.lane.b32.xlu0 %v1849, 256
        %v1852 = vpop.permute.xlu0 %1851
        %s1854 = sor.u32 256, 8
        %1855 = vbcast.lane.b32.xlu0 %v1849, %s1854
        %v1856 = vpop.permute.xlu0 %1855
        %s1858 = sor.u32 256, 16
        %1859 = vbcast.lane.b32.xlu0 %v1849, %s1858
        %v1860 = vpop.permute.xlu0 %1859
        %v1861 = vlaneseq
        %v1862 = vshrl.u32 %v1861, 7
        %v1863 = vsub.s32 2, %v1862
        %v1864 = vrot.slane %v954, %v1863
        %1866 = vbcast.lane.b32.xlu0 %v1864, 256
        %v1867 = vpop.permute.xlu0 %1866
        %s1869 = sor.u32 256, 8
        %1870 = vbcast.lane.b32.xlu0 %v1864, %s1869
        %v1871 = vpop.permute.xlu0 %1870
        %s1873 = sor.u32 256, 16
        %1874 = vbcast.lane.b32.xlu0 %v1864, %s1873
        %v1875 = vpop.permute.xlu0 %1874
        %v1876 = vlaneseq
        %v1877 = vshrl.u32 %v1876, 7
        %v1878 = vsub.s32 3, %v1877
        %v1879 = vrot.slane %v954, %v1878
        %1881 = vbcast.lane.b32.xlu0 %v1879, 256
        %v1882 = vpop.permute.xlu0 %1881
        %s1884 = sor.u32 256, 8
        %1885 = vbcast.lane.b32.xlu0 %v1879, %s1884
        %v1886 = vpop.permute.xlu0 %1885
        %s1888 = sor.u32 256, 16
        %1889 = vbcast.lane.b32.xlu0 %v1879, %s1888
        %v1890 = vpop.permute.xlu0 %1889
        %v1891 = vlaneseq
        %v1892 = vshrl.u32 %v1891, 7
        %v1893 = vsub.s32 4, %v1892
        %v1894 = vrot.slane %v954, %v1893
        %1896 = vbcast.lane.b32.xlu0 %v1894, 256
        %v1897 = vpop.permute.xlu0 %1896
        %s1899 = sor.u32 256, 8
        %1900 = vbcast.lane.b32.xlu0 %v1894, %s1899
        %v1901 = vpop.permute.xlu0 %1900
        %s1903 = sor.u32 256, 16
        %1904 = vbcast.lane.b32.xlu0 %v1894, %s1903
        %v1905 = vpop.permute.xlu0 %1904
        %v1906 = vlaneseq
        %v1907 = vshrl.u32 %v1906, 7
        %v1908 = vsub.s32 5, %v1907
        %v1909 = vrot.slane %v954, %v1908
        %1911 = vbcast.lane.b32.xlu0 %v1909, 256
        %v1912 = vpop.permute.xlu0 %1911
        %s1914 = sor.u32 256, 8
        %1915 = vbcast.lane.b32.xlu0 %v1909, %s1914
        %v1916 = vpop.permute.xlu0 %1915
        %s1918 = sor.u32 256, 16
        %1919 = vbcast.lane.b32.xlu0 %v1909, %s1918
        %v1920 = vpop.permute.xlu0 %1919
        %v1921 = vlaneseq
        %v1922 = vshrl.u32 %v1921, 7
        %v1923 = vsub.s32 6, %v1922
        %v1924 = vrot.slane %v954, %v1923
        %1926 = vbcast.lane.b32.xlu0 %v1924, 256
        %v1927 = vpop.permute.xlu0 %1926
        %s1929 = sor.u32 256, 8
        %1930 = vbcast.lane.b32.xlu0 %v1924, %s1929
        %v1931 = vpop.permute.xlu0 %1930
        %s1933 = sor.u32 256, 16
        %1934 = vbcast.lane.b32.xlu0 %v1924, %s1933
        %v1935 = vpop.permute.xlu0 %1934
        %v1936 = vlaneseq
        %v1937 = vshrl.u32 %v1936, 7
        %v1938 = vsub.s32 7, %v1937
        %v1939 = vrot.slane %v954, %v1938
        %1941 = vbcast.lane.b32.xlu0 %v1939, 256
        %v1942 = vpop.permute.xlu0 %1941
        %s1944 = sor.u32 256, 8
        %1945 = vbcast.lane.b32.xlu0 %v1939, %s1944
        %v1946 = vpop.permute.xlu0 %1945
        %s1948 = sor.u32 256, 16
        %1949 = vbcast.lane.b32.xlu0 %v1939, %s1948
        %v1950 = vpop.permute.xlu0 %1949
        %v1951 = vlaneseq
        %v1952 = vshrl.u32 %v1951, 7
        %v1953 = vsub.s32 0, %v1952
        %v1954 = vrot.slane %v959, %v1953
        %1956 = vbcast.lane.b32.xlu0 %v1954, 256
        %v1957 = vpop.permute.xlu0 %1956
        %s1959 = sor.u32 256, 8
        %1960 = vbcast.lane.b32.xlu0 %v1954, %s1959
        %v1961 = vpop.permute.xlu0 %1960
        %s1963 = sor.u32 256, 16
        %1964 = vbcast.lane.b32.xlu0 %v1954, %s1963
        %v1965 = vpop.permute.xlu0 %1964
        %v1966 = vlaneseq
        %v1967 = vshrl.u32 %v1966, 7
        %v1968 = vsub.s32 1, %v1967
        %v1969 = vrot.slane %v959, %v1968
        %1971 = vbcast.lane.b32.xlu0 %v1969, 256
        %v1972 = vpop.permute.xlu0 %1971
        %s1974 = sor.u32 256, 8
        %1975 = vbcast.lane.b32.xlu0 %v1969, %s1974
        %v1976 = vpop.permute.xlu0 %1975
        %s1978 = sor.u32 256, 16
        %1979 = vbcast.lane.b32.xlu0 %v1969, %s1978
        %v1980 = vpop.permute.xlu0 %1979
        %v1981 = vlaneseq
        %v1982 = vshrl.u32 %v1981, 7
        %v1983 = vsub.s32 2, %v1982
        %v1984 = vrot.slane %v959, %v1983
        %1986 = vbcast.lane.b32.xlu0 %v1984, 256
        %v1987 = vpop.permute.xlu0 %1986
        %s1989 = sor.u32 256, 8
        %1990 = vbcast.lane.b32.xlu0 %v1984, %s1989
        %v1991 = vpop.permute.xlu0 %1990
        %s1993 = sor.u32 256, 16
        %1994 = vbcast.lane.b32.xlu0 %v1984, %s1993
        %v1995 = vpop.permute.xlu0 %1994
        %v1996 = vlaneseq
        %v1997 = vshrl.u32 %v1996, 7
        %v1998 = vsub.s32 3, %v1997
        %v1999 = vrot.slane %v959, %v1998
        %2001 = vbcast.lane.b32.xlu0 %v1999, 256
        %v2002 = vpop.permute.xlu0 %2001
        %s2004 = sor.u32 256, 8
        %2005 = vbcast.lane.b32.xlu0 %v1999, %s2004
        %v2006 = vpop.permute.xlu0 %2005
        %s2008 = sor.u32 256, 16
        %2009 = vbcast.lane.b32.xlu0 %v1999, %s2008
        %v2010 = vpop.permute.xlu0 %2009
        %v2011 = vlaneseq
        %v2012 = vshrl.u32 %v2011, 7
        %v2013 = vsub.s32 4, %v2012
        %v2014 = vrot.slane %v959, %v2013
        %2016 = vbcast.lane.b32.xlu0 %v2014, 256
        %v2017 = vpop.permute.xlu0 %2016
        %s2019 = sor.u32 256, 8
        %2020 = vbcast.lane.b32.xlu0 %v2014, %s2019
        %v2021 = vpop.permute.xlu0 %2020
        %s2023 = sor.u32 256, 16
        %2024 = vbcast.lane.b32.xlu0 %v2014, %s2023
        %v2025 = vpop.permute.xlu0 %2024
        %v2026 = vlaneseq
        %v2027 = vshrl.u32 %v2026, 7
        %v2028 = vsub.s32 5, %v2027
        %v2029 = vrot.slane %v959, %v2028
        %2031 = vbcast.lane.b32.xlu0 %v2029, 256
        %v2032 = vpop.permute.xlu0 %2031
        %s2034 = sor.u32 256, 8
        %2035 = vbcast.lane.b32.xlu0 %v2029, %s2034
        %v2036 = vpop.permute.xlu0 %2035
        %s2038 = sor.u32 256, 16
        %2039 = vbcast.lane.b32.xlu0 %v2029, %s2038
        %v2040 = vpop.permute.xlu0 %2039
        %v2041 = vlaneseq
        %v2042 = vshrl.u32 %v2041, 7
        %v2043 = vsub.s32 6, %v2042
        %v2044 = vrot.slane %v959, %v2043
        %2046 = vbcast.lane.b32.xlu0 %v2044, 256
        %v2047 = vpop.permute.xlu0 %2046
        %s2049 = sor.u32 256, 8
        %2050 = vbcast.lane.b32.xlu0 %v2044, %s2049
        %v2051 = vpop.permute.xlu0 %2050
        %s2053 = sor.u32 256, 16
        %2054 = vbcast.lane.b32.xlu0 %v2044, %s2053
        %v2055 = vpop.permute.xlu0 %2054
        %v2056 = vlaneseq
        %v2057 = vshrl.u32 %v2056, 7
        %v2058 = vsub.s32 7, %v2057
        %v2059 = vrot.slane %v959, %v2058
        %2061 = vbcast.lane.b32.xlu0 %v2059, 256
        %v2062 = vpop.permute.xlu0 %2061
        %s2064 = sor.u32 256, 8
        %2065 = vbcast.lane.b32.xlu0 %v2059, %s2064
        %v2066 = vpop.permute.xlu0 %2065
        %s2068 = sor.u32 256, 16
        %2069 = vbcast.lane.b32.xlu0 %v2059, %s2068
        %v2070 = vpop.permute.xlu0 %2069
        %v2071 = vlaneseq
        %v2072 = vshrl.u32 %v2071, 7
        %v2073 = vsub.s32 0, %v2072
        %v2074 = vrot.slane %v964, %v2073
        %2076 = vbcast.lane.b32.xlu0 %v2074, 256
        %v2077 = vpop.permute.xlu0 %2076
        %s2079 = sor.u32 256, 8
        %2080 = vbcast.lane.b32.xlu0 %v2074, %s2079
        %v2081 = vpop.permute.xlu0 %2080
        %s2083 = sor.u32 256, 16
        %2084 = vbcast.lane.b32.xlu0 %v2074, %s2083
        %v2085 = vpop.permute.xlu0 %2084
        %v2086 = vlaneseq
        %v2087 = vshrl.u32 %v2086, 7
        %v2088 = vsub.s32 1, %v2087
        %v2089 = vrot.slane %v964, %v2088
        %2091 = vbcast.lane.b32.xlu0 %v2089, 256
        %v2092 = vpop.permute.xlu0 %2091
        %s2094 = sor.u32 256, 8
        %2095 = vbcast.lane.b32.xlu0 %v2089, %s2094
        %v2096 = vpop.permute.xlu0 %2095
        %s2098 = sor.u32 256, 16
        %2099 = vbcast.lane.b32.xlu0 %v2089, %s2098
        %v2100 = vpop.permute.xlu0 %2099
        %vm2101 = vcmask 31744
        %v2102 = vsel %vm2101, %v967, %v1027
        %v2103 = vsel %vm2101, %v968, %v1031
        %v2104 = vsel %vm2101, %v969, %v1035
        %v2105 = vsel %vm2101, %v970, %v1042
        %v2106 = vsel %vm2101, %v971, %v1046
        %v2107 = vsel %vm2101, %v972, %v1050
        %v2108 = vsel %vm2101, %v973, %v1057
        %v2109 = vsel %vm2101, %v974, %v1061
        %v2110 = vsel %vm2101, %v975, %v1065
        %v2111 = vsel %vm2101, %v976, %v1072
        %v2112 = vsel %vm2101, %v977, %v1076
        %v2113 = vsel %vm2101, %v978, %v1080
        %v2114 = vsel %vm2101, %v979, %v1087
        %v2115 = vsel %vm2101, %v980, %v1091
        %v2116 = vsel %vm2101, %v981, %v1095
        %v2117 = vsel %vm2101, %v982, %v1102
        %v2118 = vsel %vm2101, %v983, %v1106
        %v2119 = vsel %vm2101, %v984, %v1110
        %v2120 = vsel %vm2101, %v985, %v1117
        %v2121 = vsel %vm2101, %v986, %v1121
        %v2122 = vsel %vm2101, %v987, %v1125
        %v2123 = vsel %vm2101, %v988, %v1132
        %v2124 = vsel %vm2101, %v989, %v1136
        %v2125 = vsel %vm2101, %v990, %v1140
        %v2126 = vsel %vm2101, %v991, %v1147
        %v2127 = vsel %vm2101, %v992, %v1151
        %v2128 = vsel %vm2101, %v993, %v1155
        %v2129 = vsel %vm2101, %v994, %v1162
        %v2130 = vsel %vm2101, %v995, %v1166
        %v2131 = vsel %vm2101, %v996, %v1170
        %v2132 = vsel %vm2101, %v997, %v1177
        %v2133 = vsel %vm2101, %v998, %v1181
        %v2134 = vsel %vm2101, %v999, %v1185
        %v2135 = vsel %vm2101, %v1000, %v1192
        %v2136 = vsel %vm2101, %v1001, %v1196
        %v2137 = vsel %vm2101, %v1002, %v1200
        %v2138 = vsel %vm2101, %v1003, %v1207
        %v2139 = vsel %vm2101, %v1004, %v1211
        %v2140 = vsel %vm2101, %v1005, %v1215
        %v2141 = vsel %vm2101, %v1006, %v1222
        %v2142 = vsel %vm2101, %v1007, %v1226
        %v2143 = vsel %vm2101, %v1008, %v1230
        %v2144 = vsel %vm2101, %v1009, %v1237
        %v2145 = vsel %vm2101, %v1010, %v1241
        %v2146 = vsel %vm2101, %v1011, %v1245
        %v2147 = vsel %vm2101, %v1012, %v1252
        %v2148 = vsel %vm2101, %v1013, %v1256
        %v2149 = vsel %vm2101, %v1014, %v1260
        %v2150 = vsel %vm2101, %v1015, %v1267
        %v2151 = vsel %vm2101, %v1016, %v1271
        %v2152 = vsel %vm2101, %v1017, %v1275
        %v2153 = vsel %vm2101, %v1018, %v1282
        %v2154 = vsel %vm2101, %v1019, %v1286
        %v2155 = vsel %vm2101, %v1020, %v1290
        %vm2156 = vcmask 39936
        %v2157 = vsel %vm2156, %v2102, %v1297
        %v2158 = vsel %vm2156, %v2103, %v1301
        %v2159 = vsel %vm2156, %v2104, %v1305
        %v2160 = vsel %vm2156, %v2105, %v1312
        %v2161 = vsel %vm2156, %v2106, %v1316
        %v2162 = vsel %vm2156, %v2107, %v1320
        %v2163 = vsel %vm2156, %v2108, %v1327
        %v2164 = vsel %vm2156, %v2109, %v1331
        %v2165 = vsel %vm2156, %v2110, %v1335
        %v2166 = vsel %vm2156, %v2111, %v1342
        %v2167 = vsel %vm2156, %v2112, %v1346
        %v2168 = vsel %vm2156, %v2113, %v1350
        %v2169 = vsel %vm2156, %v2114, %v1357
        %v2170 = vsel %vm2156, %v2115, %v1361
        %v2171 = vsel %vm2156, %v2116, %v1365
        %v2172 = vsel %vm2156, %v2117, %v1372
        %v2173 = vsel %vm2156, %v2118, %v1376
        %v2174 = vsel %vm2156, %v2119, %v1380
        %v2175 = vsel %vm2156, %v2120, %v1387
        %v2176 = vsel %vm2156, %v2121, %v1391
        %v2177 = vsel %vm2156, %v2122, %v1395
        %v2178 = vsel %vm2156, %v2123, %v1402
        %v2179 = vsel %vm2156, %v2124, %v1406
        %v2180 = vsel %vm2156, %v2125, %v1410
        %v2181 = vsel %vm2156, %v2126, %v1417
        %v2182 = vsel %vm2156, %v2127, %v1421
        %v2183 = vsel %vm2156, %v2128, %v1425
        %v2184 = vsel %vm2156, %v2129, %v1432
        %v2185 = vsel %vm2156, %v2130, %v1436
        %v2186 = vsel %vm2156, %v2131, %v1440
        %v2187 = vsel %vm2156, %v2132, %v1447
        %v2188 = vsel %vm2156, %v2133, %v1451
        %v2189 = vsel %vm2156, %v2134, %v1455
        %v2190 = vsel %vm2156, %v2135, %v1462
        %v2191 = vsel %vm2156, %v2136, %v1466
        %v2192 = vsel %vm2156, %v2137, %v1470
        %v2193 = vsel %vm2156, %v2138, %v1477
        %v2194 = vsel %vm2156, %v2139, %v1481
        %v2195 = vsel %vm2156, %v2140, %v1485
        %v2196 = vsel %vm2156, %v2141, %v1492
        %v2197 = vsel %vm2156, %v2142, %v1496
        %v2198 = vsel %vm2156, %v2143, %v1500
        %v2199 = vsel %vm2156, %v2144, %v1507
        %v2200 = vsel %vm2156, %v2145, %v1511
        %v2201 = vsel %vm2156, %v2146, %v1515
        %v2202 = vsel %vm2156, %v2147, %v1522
        %v2203 = vsel %vm2156, %v2148, %v1526
        %v2204 = vsel %vm2156, %v2149, %v1530
        %v2205 = vsel %vm2156, %v2150, %v1537
        %v2206 = vsel %vm2156, %v2151, %v1541
        %v2207 = vsel %vm2156, %v2152, %v1545
        %v2208 = vsel %vm2156, %v2153, %v1552
        %v2209 = vsel %vm2156, %v2154, %v1556
        %v2210 = vsel %vm2156, %v2155, %v1560
        %vm2211 = vcmask 48128
        %v2212 = vsel %vm2211, %v2157, %v1567
        %v2213 = vsel %vm2211, %v2158, %v1571
        %v2214 = vsel %vm2211, %v2159, %v1575
        %v2215 = vsel %vm2211, %v2160, %v1582
        %v2216 = vsel %vm2211, %v2161, %v1586
        %v2217 = vsel %vm2211, %v2162, %v1590
        %v2218 = vsel %vm2211, %v2163, %v1597
        %v2219 = vsel %vm2211, %v2164, %v1601
        %v2220 = vsel %vm2211, %v2165, %v1605
        %v2221 = vsel %vm2211, %v2166, %v1612
        %v2222 = vsel %vm2211, %v2167, %v1616
        %v2223 = vsel %vm2211, %v2168, %v1620
        %v2224 = vsel %vm2211, %v2169, %v1627
        %v2225 = vsel %vm2211, %v2170, %v1631
        %v2226 = vsel %vm2211, %v2171, %v1635
        %v2227 = vsel %vm2211, %v2172, %v1642
        %v2228 = vsel %vm2211, %v2173, %v1646
        %v2229 = vsel %vm2211, %v2174, %v1650
        %v2230 = vsel %vm2211, %v2175, %v1657
        %v2231 = vsel %vm2211, %v2176, %v1661
        %v2232 = vsel %vm2211, %v2177, %v1665
        %v2233 = vsel %vm2211, %v2178, %v1672
        %v2234 = vsel %vm2211, %v2179, %v1676
        %v2235 = vsel %vm2211, %v2180, %v1680
        %v2236 = vsel %vm2211, %v2181, %v1687
        %v2237 = vsel %vm2211, %v2182, %v1691
        %v2238 = vsel %vm2211, %v2183, %v1695
        %v2239 = vsel %vm2211, %v2184, %v1702
        %v2240 = vsel %vm2211, %v2185, %v1706
        %v2241 = vsel %vm2211, %v2186, %v1710
        %v2242 = vsel %vm2211, %v2187, %v1717
        %v2243 = vsel %vm2211, %v2188, %v1721
        %v2244 = vsel %vm2211, %v2189, %v1725
        %v2245 = vsel %vm2211, %v2190, %v1732
        %v2246 = vsel %vm2211, %v2191, %v1736
        %v2247 = vsel %vm2211, %v2192, %v1740
        %v2248 = vsel %vm2211, %v2193, %v1747
        %v2249 = vsel %vm2211, %v2194, %v1751
        %v2250 = vsel %vm2211, %v2195, %v1755
        %v2251 = vsel %vm2211, %v2196, %v1762
        %v2252 = vsel %vm2211, %v2197, %v1766
        %v2253 = vsel %vm2211, %v2198, %v1770
        %v2254 = vsel %vm2211, %v2199, %v1777
        %v2255 = vsel %vm2211, %v2200, %v1781
        %v2256 = vsel %vm2211, %v2201, %v1785
        %v2257 = vsel %vm2211, %v2202, %v1792
        %v2258 = vsel %vm2211, %v2203, %v1796
        %v2259 = vsel %vm2211, %v2204, %v1800
        %v2260 = vsel %vm2211, %v2205, %v1807
        %v2261 = vsel %vm2211, %v2206, %v1811
        %v2262 = vsel %vm2211, %v2207, %v1815
        %v2263 = vsel %vm2211, %v2208, %v1822
        %v2264 = vsel %vm2211, %v2209, %v1826
        %v2265 = vsel %vm2211, %v2210, %v1830
        %vm2266 = vcmask 56320
        %v2267 = vsel %vm2266, %v2212, %v1837
        %v2268 = vsel %vm2266, %v2213, %v1841
        %v2269 = vsel %vm2266, %v2214, %v1845
        %v2270 = vsel %vm2266, %v2215, %v1852
        %v2271 = vsel %vm2266, %v2216, %v1856
        %v2272 = vsel %vm2266, %v2217, %v1860
        %v2273 = vsel %vm2266, %v2218, %v1867
        %v2274 = vsel %vm2266, %v2219, %v1871
        %v2275 = vsel %vm2266, %v2220, %v1875
        %v2276 = vsel %vm2266, %v2221, %v1882
        %v2277 = vsel %vm2266, %v2222, %v1886
        %v2278 = vsel %vm2266, %v2223, %v1890
        %v2279 = vsel %vm2266, %v2224, %v1897
        %v2280 = vsel %vm2266, %v2225, %v1901
        %v2281 = vsel %vm2266, %v2226, %v1905
        %v2282 = vsel %vm2266, %v2227, %v1912
        %v2283 = vsel %vm2266, %v2228, %v1916
        %v2284 = vsel %vm2266, %v2229, %v1920
        %v2285 = vsel %vm2266, %v2230, %v1927
        %v2286 = vsel %vm2266, %v2231, %v1931
        %v2287 = vsel %vm2266, %v2232, %v1935
        %v2288 = vsel %vm2266, %v2233, %v1942
        %v2289 = vsel %vm2266, %v2234, %v1946
        %v2290 = vsel %vm2266, %v2235, %v1950
        %v2291 = vsel %vm2266, %v2236, %v1957
        %v2292 = vsel %vm2266, %v2237, %v1961
        %v2293 = vsel %vm2266, %v2238, %v1965
        %v2294 = vsel %vm2266, %v2239, %v1972
        %v2295 = vsel %vm2266, %v2240, %v1976
        %v2296 = vsel %vm2266, %v2241, %v1980
        %v2297 = vsel %vm2266, %v2242, %v1987
        %v2298 = vsel %vm2266, %v2243, %v1991
        %v2299 = vsel %vm2266, %v2244, %v1995
        %v2300 = vsel %vm2266, %v2245, %v2002
        %v2301 = vsel %vm2266, %v2246, %v2006
        %v2302 = vsel %vm2266, %v2247, %v2010
        %v2303 = vsel %vm2266, %v2248, %v2017
        %v2304 = vsel %vm2266, %v2249, %v2021
        %v2305 = vsel %vm2266, %v2250, %v2025
        %v2306 = vsel %vm2266, %v2251, %v2032
        %v2307 = vsel %vm2266, %v2252, %v2036
        %v2308 = vsel %vm2266, %v2253, %v2040
        %v2309 = vsel %vm2266, %v2254, %v2047
        %v2310 = vsel %vm2266, %v2255, %v2051
        %v2311 = vsel %vm2266, %v2256, %v2055
        %v2312 = vsel %vm2266, %v2257, %v2062
        %v2313 = vsel %vm2266, %v2258, %v2066
        %v2314 = vsel %vm2266, %v2259, %v2070
        %v2315 = vsel %vm2266, %v2260, %v2077
        %v2316 = vsel %vm2266, %v2261, %v2081
        %v2317 = vsel %vm2266, %v2262, %v2085
        %v2318 = vsel %vm2266, %v2263, %v2092
        %v2319 = vsel %vm2266, %v2264, %v2096
        %v2320 = vsel %vm2266, %v2265, %v2100
        %vm2369 = vcmask 1046528
        %v2370 = vrot.slane %v2267, 1
        %v2371 = vrot.slane %v2268, 1
        %v2372 = vsel %vm2369, %v2370, %v2371
        %v2373 = vrot.slane %v2269, 1
        %v2374 = vsel %vm2369, %v2371, %v2373
        %v2375 = vrot.slane %v2270, 1
        %v2376 = vrot.slane %v2271, 1
        %v2377 = vsel %vm2369, %v2375, %v2376
        %v2378 = vrot.slane %v2272, 1
        %v2379 = vsel %vm2369, %v2376, %v2378
        %v2380 = vrot.slane %v2273, 1
        %v2381 = vrot.slane %v2274, 1
        %v2382 = vsel %vm2369, %v2380, %v2381
        %v2383 = vrot.slane %v2275, 1
        %v2384 = vsel %vm2369, %v2381, %v2383
        %v2385 = vrot.slane %v2276, 1
        %v2386 = vrot.slane %v2277, 1
        %v2387 = vsel %vm2369, %v2385, %v2386
        %v2388 = vrot.slane %v2278, 1
        %v2389 = vsel %vm2369, %v2386, %v2388
        %v2390 = vrot.slane %v2279, 1
        %v2391 = vrot.slane %v2280, 1
        %v2392 = vsel %vm2369, %v2390, %v2391
        %v2393 = vrot.slane %v2281, 1
        %v2394 = vsel %vm2369, %v2391, %v2393
        %v2395 = vrot.slane %v2282, 1
        %v2396 = vrot.slane %v2283, 1
        %v2397 = vsel %vm2369, %v2395, %v2396
        %v2398 = vrot.slane %v2284, 1
        %v2399 = vsel %vm2369, %v2396, %v2398
        %v2400 = vrot.slane %v2285, 1
        %v2401 = vrot.slane %v2286, 1
        %v2402 = vsel %vm2369, %v2400, %v2401
        %v2403 = vrot.slane %v2287, 1
        %v2404 = vsel %vm2369, %v2401, %v2403
        %v2405 = vrot.slane %v2288, 1
        %v2406 = vrot.slane %v2289, 1
        %v2407 = vsel %vm2369, %v2405, %v2406
        %v2408 = vrot.slane %v2290, 1
        %v2409 = vsel %vm2369, %v2406, %v2408
        %v2410 = vrot.slane %v2291, 1
        %v2411 = vrot.slane %v2292, 1
        %v2412 = vsel %vm2369, %v2410, %v2411
        %v2413 = vrot.slane %v2293, 1
        %v2414 = vsel %vm2369, %v2411, %v2413
        %v2415 = vrot.slane %v2294, 1
        %v2416 = vrot.slane %v2295, 1
        %v2417 = vsel %vm2369, %v2415, %v2416
        %v2418 = vrot.slane %v2296, 1
        %v2419 = vsel %vm2369, %v2416, %v2418
        %v2420 = vrot.slane %v2297, 1
        %v2421 = vrot.slane %v2298, 1
        %v2422 = vsel %vm2369, %v2420, %v2421
        %v2423 = vrot.slane %v2299, 1
        %v2424 = vsel %vm2369, %v2421, %v2423
        %v2425 = vrot.slane %v2300, 1
        %v2426 = vrot.slane %v2301, 1
        %v2427 = vsel %vm2369, %v2425, %v2426
        %v2428 = vrot.slane %v2302, 1
        %v2429 = vsel %vm2369, %v2426, %v2428
        %v2430 = vrot.slane %v2303, 1
        %v2431 = vrot.slane %v2304, 1
        %v2432 = vsel %vm2369, %v2430, %v2431
        %v2433 = vrot.slane %v2305, 1
        %v2434 = vsel %vm2369, %v2431, %v2433
        %v2435 = vrot.slane %v2306, 1
        %v2436 = vrot.slane %v2307, 1
        %v2437 = vsel %vm2369, %v2435, %v2436
        %v2438 = vrot.slane %v2308, 1
        %v2439 = vsel %vm2369, %v2436, %v2438
        %v2440 = vrot.slane %v2309, 1
        %v2441 = vrot.slane %v2310, 1
        %v2442 = vsel %vm2369, %v2440, %v2441
        %v2443 = vrot.slane %v2311, 1
        %v2444 = vsel %vm2369, %v2441, %v2443
        %v2445 = vrot.slane %v2312, 1
        %v2446 = vrot.slane %v2313, 1
        %v2447 = vsel %vm2369, %v2445, %v2446
        %v2448 = vrot.slane %v2314, 1
        %v2449 = vsel %vm2369, %v2446, %v2448
        %vm2450 = vcmask 1045504
        %v2451 = vrot.slane %v2267, 2
        %v2452 = vrot.slane %v2268, 2
        %v2453 = vsel %vm2450, %v2451, %v2452
        %v2454 = vrot.slane %v2269, 2
        %v2455 = vsel %vm2450, %v2452, %v2454
        %v2456 = vrot.slane %v2270, 2
        %v2457 = vrot.slane %v2271, 2
        %v2458 = vsel %vm2450, %v2456, %v2457
        %v2459 = vrot.slane %v2272, 2
        %v2460 = vsel %vm2450, %v2457, %v2459
        %v2461 = vrot.slane %v2273, 2
        %v2462 = vrot.slane %v2274, 2
        %v2463 = vsel %vm2450, %v2461, %v2462
        %v2464 = vrot.slane %v2275, 2
        %v2465 = vsel %vm2450, %v2462, %v2464
        %v2466 = vrot.slane %v2276, 2
        %v2467 = vrot.slane %v2277, 2
        %v2468 = vsel %vm2450, %v2466, %v2467
        %v2469 = vrot.slane %v2278, 2
        %v2470 = vsel %vm2450, %v2467, %v2469
        %v2471 = vrot.slane %v2279, 2
        %v2472 = vrot.slane %v2280, 2
        %v2473 = vsel %vm2450, %v2471, %v2472
        %v2474 = vrot.slane %v2281, 2
        %v2475 = vsel %vm2450, %v2472, %v2474
        %v2476 = vrot.slane %v2282, 2
        %v2477 = vrot.slane %v2283, 2
        %v2478 = vsel %vm2450, %v2476, %v2477
        %v2479 = vrot.slane %v2284, 2
        %v2480 = vsel %vm2450, %v2477, %v2479
        %v2481 = vrot.slane %v2285, 2
        %v2482 = vrot.slane %v2286, 2
        %v2483 = vsel %vm2450, %v2481, %v2482
        %v2484 = vrot.slane %v2287, 2
        %v2485 = vsel %vm2450, %v2482, %v2484
        %v2486 = vrot.slane %v2288, 2
        %v2487 = vrot.slane %v2289, 2
        %v2488 = vsel %vm2450, %v2486, %v2487
        %v2489 = vrot.slane %v2290, 2
        %v2490 = vsel %vm2450, %v2487, %v2489
        %v2491 = vrot.slane %v2291, 2
        %v2492 = vrot.slane %v2292, 2
        %v2493 = vsel %vm2450, %v2491, %v2492
        %v2494 = vrot.slane %v2293, 2
        %v2495 = vsel %vm2450, %v2492, %v2494
        %v2496 = vrot.slane %v2294, 2
        %v2497 = vrot.slane %v2295, 2
        %v2498 = vsel %vm2450, %v2496, %v2497
        %v2499 = vrot.slane %v2296, 2
        %v2500 = vsel %vm2450, %v2497, %v2499
        %v2501 = vrot.slane %v2297, 2
        %v2502 = vrot.slane %v2298, 2
        %v2503 = vsel %vm2450, %v2501, %v2502
        %v2504 = vrot.slane %v2299, 2
        %v2505 = vsel %vm2450, %v2502, %v2504
        %v2506 = vrot.slane %v2300, 2
        %v2507 = vrot.slane %v2301, 2
        %v2508 = vsel %vm2450, %v2506, %v2507
        %v2509 = vrot.slane %v2302, 2
        %v2510 = vsel %vm2450, %v2507, %v2509
        %v2511 = vrot.slane %v2303, 2
        %v2512 = vrot.slane %v2304, 2
        %v2513 = vsel %vm2450, %v2511, %v2512
        %v2514 = vrot.slane %v2305, 2
        %v2515 = vsel %vm2450, %v2512, %v2514
        %v2516 = vrot.slane %v2306, 2
        %v2517 = vrot.slane %v2307, 2
        %v2518 = vsel %vm2450, %v2516, %v2517
        %v2519 = vrot.slane %v2308, 2
        %v2520 = vsel %vm2450, %v2517, %v2519
        %v2521 = vrot.slane %v2309, 2
        %v2522 = vrot.slane %v2310, 2
        %v2523 = vsel %vm2450, %v2521, %v2522
        %v2524 = vrot.slane %v2311, 2
        %v2525 = vsel %vm2450, %v2522, %v2524
        %v2526 = vrot.slane %v2312, 2
        %v2527 = vrot.slane %v2313, 2
        %v2528 = vsel %vm2450, %v2526, %v2527
        %v2529 = vrot.slane %v2314, 2
        %v2530 = vsel %vm2450, %v2527, %v2529
        %v2534 = vrot.slane %v2315, 1
        %v2535 = vrot.slane %v2316, 1
        %v2536 = vsel %vm2369, %v2534, %v2535
        %v2537 = vrot.slane %v2317, 1
        %v2538 = vsel %vm2369, %v2535, %v2537
        %v2539 = vrot.slane %v2315, 2
        %v2540 = vrot.slane %v2316, 2
        %v2541 = vsel %vm2450, %v2539, %v2540
        %v2542 = vrot.slane %v2317, 2
        %v2543 = vsel %vm2450, %v2540, %v2542
        %v2547 = vrot.slane %v2318, 1
        %v2548 = vrot.slane %v2319, 1
        %v2549 = vsel %vm2369, %v2547, %v2548
        %v2550 = vrot.slane %v2320, 1
        %v2551 = vsel %vm2369, %v2548, %v2550
        %v2552 = vrot.slane %v2318, 2
        %v2553 = vrot.slane %v2319, 2
        %v2554 = vsel %vm2450, %v2552, %v2553
        %v2555 = vrot.slane %v2320, 2
        %v2556 = vsel %vm2450, %v2553, %v2555
        %2557 = vrot.lane.b32.xlu0 %v2372, 8
        %v2558 = vpop.permute.xlu0 %2557
        %2559 = vrot.lane.b32.xlu0 %v2374, 8
        %v2560 = vpop.permute.xlu0 %2559
        %2561 = vrot.lane.b32.xlu0 %v2377, 8
        %v2562 = vpop.permute.xlu0 %2561
        %2563 = vrot.lane.b32.xlu0 %v2379, 8
        %v2564 = vpop.permute.xlu0 %2563
        %2565 = vrot.lane.b32.xlu0 %v2382, 8
        %v2566 = vpop.permute.xlu0 %2565
        %2567 = vrot.lane.b32.xlu0 %v2384, 8
        %v2568 = vpop.permute.xlu0 %2567
        %2569 = vrot.lane.b32.xlu0 %v2387, 8
        %v2570 = vpop.permute.xlu0 %2569
        %2571 = vrot.lane.b32.xlu0 %v2389, 8
        %v2572 = vpop.permute.xlu0 %2571
        %2573 = vrot.lane.b32.xlu0 %v2392, 8
        %v2574 = vpop.permute.xlu0 %2573
        %2575 = vrot.lane.b32.xlu0 %v2394, 8
        %v2576 = vpop.permute.xlu0 %2575
        %2577 = vrot.lane.b32.xlu0 %v2397, 8
        %v2578 = vpop.permute.xlu0 %2577
        %2579 = vrot.lane.b32.xlu0 %v2399, 8
        %v2580 = vpop.permute.xlu0 %2579
        %2581 = vrot.lane.b32.xlu0 %v2402, 8
        %v2582 = vpop.permute.xlu0 %2581
        %2583 = vrot.lane.b32.xlu0 %v2404, 8
        %v2584 = vpop.permute.xlu0 %2583
        %2585 = vrot.lane.b32.xlu0 %v2407, 8
        %v2586 = vpop.permute.xlu0 %2585
        %2587 = vrot.lane.b32.xlu0 %v2409, 8
        %v2588 = vpop.permute.xlu0 %2587
        %2589 = vrot.lane.b32.xlu0 %v2412, 8
        %v2590 = vpop.permute.xlu0 %2589
        %2591 = vrot.lane.b32.xlu0 %v2414, 8
        %v2592 = vpop.permute.xlu0 %2591
        %2593 = vrot.lane.b32.xlu0 %v2417, 8
        %v2594 = vpop.permute.xlu0 %2593
        %2595 = vrot.lane.b32.xlu0 %v2419, 8
        %v2596 = vpop.permute.xlu0 %2595
        %2597 = vrot.lane.b32.xlu0 %v2422, 8
        %v2598 = vpop.permute.xlu0 %2597
        %2599 = vrot.lane.b32.xlu0 %v2424, 8
        %v2600 = vpop.permute.xlu0 %2599
        %2601 = vrot.lane.b32.xlu0 %v2427, 8
        %v2602 = vpop.permute.xlu0 %2601
        %2603 = vrot.lane.b32.xlu0 %v2429, 8
        %v2604 = vpop.permute.xlu0 %2603
        %2605 = vrot.lane.b32.xlu0 %v2432, 8
        %v2606 = vpop.permute.xlu0 %2605
        %2607 = vrot.lane.b32.xlu0 %v2434, 8
        %v2608 = vpop.permute.xlu0 %2607
        %2609 = vrot.lane.b32.xlu0 %v2437, 8
        %v2610 = vpop.permute.xlu0 %2609
        %2611 = vrot.lane.b32.xlu0 %v2439, 8
        %v2612 = vpop.permute.xlu0 %2611
        %2613 = vrot.lane.b32.xlu0 %v2442, 8
        %v2614 = vpop.permute.xlu0 %2613
        %2615 = vrot.lane.b32.xlu0 %v2444, 8
        %v2616 = vpop.permute.xlu0 %2615
        %2617 = vrot.lane.b32.xlu0 %v2447, 8
        %v2618 = vpop.permute.xlu0 %2617
        %2619 = vrot.lane.b32.xlu0 %v2449, 8
        %v2620 = vpop.permute.xlu0 %2619
        %2653 = vrot.lane.b32.xlu0 %v2453, 16
        %v2654 = vpop.permute.xlu0 %2653
        %2655 = vrot.lane.b32.xlu0 %v2455, 16
        %v2656 = vpop.permute.xlu0 %2655
        %2657 = vrot.lane.b32.xlu0 %v2458, 16
        %v2658 = vpop.permute.xlu0 %2657
        %2659 = vrot.lane.b32.xlu0 %v2460, 16
        %v2660 = vpop.permute.xlu0 %2659
        %2661 = vrot.lane.b32.xlu0 %v2463, 16
        %v2662 = vpop.permute.xlu0 %2661
        %2663 = vrot.lane.b32.xlu0 %v2465, 16
        %v2664 = vpop.permute.xlu0 %2663
        %2665 = vrot.lane.b32.xlu0 %v2468, 16
        %v2666 = vpop.permute.xlu0 %2665
        %2667 = vrot.lane.b32.xlu0 %v2470, 16
        %v2668 = vpop.permute.xlu0 %2667
        %2669 = vrot.lane.b32.xlu0 %v2473, 16
        %v2670 = vpop.permute.xlu0 %2669
        %2671 = vrot.lane.b32.xlu0 %v2475, 16
        %v2672 = vpop.permute.xlu0 %2671
        %2673 = vrot.lane.b32.xlu0 %v2478, 16
        %v2674 = vpop.permute.xlu0 %2673
        %2675 = vrot.lane.b32.xlu0 %v2480, 16
        %v2676 = vpop.permute.xlu0 %2675
        %2677 = vrot.lane.b32.xlu0 %v2483, 16
        %v2678 = vpop.permute.xlu0 %2677
        %2679 = vrot.lane.b32.xlu0 %v2485, 16
        %v2680 = vpop.permute.xlu0 %2679
        %2681 = vrot.lane.b32.xlu0 %v2488, 16
        %v2682 = vpop.permute.xlu0 %2681
        %2683 = vrot.lane.b32.xlu0 %v2490, 16
        %v2684 = vpop.permute.xlu0 %2683
        %2685 = vrot.lane.b32.xlu0 %v2493, 16
        %v2686 = vpop.permute.xlu0 %2685
        %2687 = vrot.lane.b32.xlu0 %v2495, 16
        %v2688 = vpop.permute.xlu0 %2687
        %2689 = vrot.lane.b32.xlu0 %v2498, 16
        %v2690 = vpop.permute.xlu0 %2689
        %2691 = vrot.lane.b32.xlu0 %v2500, 16
        %v2692 = vpop.permute.xlu0 %2691
        %2693 = vrot.lane.b32.xlu0 %v2503, 16
        %v2694 = vpop.permute.xlu0 %2693
        %2695 = vrot.lane.b32.xlu0 %v2505, 16
        %v2696 = vpop.permute.xlu0 %2695
        %2697 = vrot.lane.b32.xlu0 %v2508, 16
        %v2698 = vpop.permute.xlu0 %2697
        %2699 = vrot.lane.b32.xlu0 %v2510, 16
        %v2700 = vpop.permute.xlu0 %2699
        %2701 = vrot.lane.b32.xlu0 %v2513, 16
        %v2702 = vpop.permute.xlu0 %2701
        %2703 = vrot.lane.b32.xlu0 %v2515, 16
        %v2704 = vpop.permute.xlu0 %2703
        %2705 = vrot.lane.b32.xlu0 %v2518, 16
        %v2706 = vpop.permute.xlu0 %2705
        %2707 = vrot.lane.b32.xlu0 %v2520, 16
        %v2708 = vpop.permute.xlu0 %2707
        %2709 = vrot.lane.b32.xlu0 %v2523, 16
        %v2710 = vpop.permute.xlu0 %2709
        %2711 = vrot.lane.b32.xlu0 %v2525, 16
        %v2712 = vpop.permute.xlu0 %2711
        %2713 = vrot.lane.b32.xlu0 %v2528, 16
        %v2714 = vpop.permute.xlu0 %2713
        %2715 = vrot.lane.b32.xlu0 %v2530, 16
        %v2716 = vpop.permute.xlu0 %2715
        %2749 = vrot.lane.b32.xlu0 %v2270, 24
        %v2750 = vpop.permute.xlu0 %2749
        %2751 = vrot.lane.b32.xlu0 %v2271, 24
        %v2752 = vpop.permute.xlu0 %2751
        %2753 = vrot.lane.b32.xlu0 %v2273, 24
        %v2754 = vpop.permute.xlu0 %2753
        %2755 = vrot.lane.b32.xlu0 %v2274, 24
        %v2756 = vpop.permute.xlu0 %2755
        %2757 = vrot.lane.b32.xlu0 %v2276, 24
        %v2758 = vpop.permute.xlu0 %2757
        %2759 = vrot.lane.b32.xlu0 %v2277, 24
        %v2760 = vpop.permute.xlu0 %2759
        %2761 = vrot.lane.b32.xlu0 %v2279, 24
        %v2762 = vpop.permute.xlu0 %2761
        %2763 = vrot.lane.b32.xlu0 %v2280, 24
        %v2764 = vpop.permute.xlu0 %2763
        %2765 = vrot.lane.b32.xlu0 %v2282, 24
        %v2766 = vpop.permute.xlu0 %2765
        %2767 = vrot.lane.b32.xlu0 %v2283, 24
        %v2768 = vpop.permute.xlu0 %2767
        %2769 = vrot.lane.b32.xlu0 %v2285, 24
        %v2770 = vpop.permute.xlu0 %2769
        %2771 = vrot.lane.b32.xlu0 %v2286, 24
        %v2772 = vpop.permute.xlu0 %2771
        %2773 = vrot.lane.b32.xlu0 %v2288, 24
        %v2774 = vpop.permute.xlu0 %2773
        %2775 = vrot.lane.b32.xlu0 %v2289, 24
        %v2776 = vpop.permute.xlu0 %2775
        %2777 = vrot.lane.b32.xlu0 %v2291, 24
        %v2778 = vpop.permute.xlu0 %2777
        %2779 = vrot.lane.b32.xlu0 %v2292, 24
        %v2780 = vpop.permute.xlu0 %2779
        %2781 = vrot.lane.b32.xlu0 %v2294, 24
        %v2782 = vpop.permute.xlu0 %2781
        %2783 = vrot.lane.b32.xlu0 %v2295, 24
        %v2784 = vpop.permute.xlu0 %2783
        %2785 = vrot.lane.b32.xlu0 %v2297, 24
        %v2786 = vpop.permute.xlu0 %2785
        %2787 = vrot.lane.b32.xlu0 %v2298, 24
        %v2788 = vpop.permute.xlu0 %2787
        %2789 = vrot.lane.b32.xlu0 %v2300, 24
        %v2790 = vpop.permute.xlu0 %2789
        %2791 = vrot.lane.b32.xlu0 %v2301, 24
        %v2792 = vpop.permute.xlu0 %2791
        %2793 = vrot.lane.b32.xlu0 %v2303, 24
        %v2794 = vpop.permute.xlu0 %2793
        %2795 = vrot.lane.b32.xlu0 %v2304, 24
        %v2796 = vpop.permute.xlu0 %2795
        %2797 = vrot.lane.b32.xlu0 %v2306, 24
        %v2798 = vpop.permute.xlu0 %2797
        %2799 = vrot.lane.b32.xlu0 %v2307, 24
        %v2800 = vpop.permute.xlu0 %2799
        %2801 = vrot.lane.b32.xlu0 %v2309, 24
        %v2802 = vpop.permute.xlu0 %2801
        %2803 = vrot.lane.b32.xlu0 %v2310, 24
        %v2804 = vpop.permute.xlu0 %2803
        %2805 = vrot.lane.b32.xlu0 %v2312, 24
        %v2806 = vpop.permute.xlu0 %2805
        %2807 = vrot.lane.b32.xlu0 %v2313, 24
        %v2808 = vpop.permute.xlu0 %2807
        %2809 = vrot.lane.b32.xlu0 %v2315, 24
        %v2810 = vpop.permute.xlu0 %2809
        %2811 = vrot.lane.b32.xlu0 %v2316, 24
        %v2812 = vpop.permute.xlu0 %2811
        %2845 = vrot.lane.b32.xlu0 %v2377, 32
        %v2846 = vpop.permute.xlu0 %2845
        %2847 = vrot.lane.b32.xlu0 %v2379, 32
        %v2848 = vpop.permute.xlu0 %2847
        %2849 = vrot.lane.b32.xlu0 %v2382, 32
        %v2850 = vpop.permute.xlu0 %2849
        %2851 = vrot.lane.b32.xlu0 %v2384, 32
        %v2852 = vpop.permute.xlu0 %2851
        %2853 = vrot.lane.b32.xlu0 %v2387, 32
        %v2854 = vpop.permute.xlu0 %2853
        %2855 = vrot.lane.b32.xlu0 %v2389, 32
        %v2856 = vpop.permute.xlu0 %2855
        %2857 = vrot.lane.b32.xlu0 %v2392, 32
        %v2858 = vpop.permute.xlu0 %2857
        %2859 = vrot.lane.b32.xlu0 %v2394, 32
        %v2860 = vpop.permute.xlu0 %2859
        %2861 = vrot.lane.b32.xlu0 %v2397, 32
        %v2862 = vpop.permute.xlu0 %2861
        %2863 = vrot.lane.b32.xlu0 %v2399, 32
        %v2864 = vpop.permute.xlu0 %2863
        %2865 = vrot.lane.b32.xlu0 %v2402, 32
        %v2866 = vpop.permute.xlu0 %2865
        %2867 = vrot.lane.b32.xlu0 %v2404, 32
        %v2868 = vpop.permute.xlu0 %2867
        %2869 = vrot.lane.b32.xlu0 %v2407, 32
        %v2870 = vpop.permute.xlu0 %2869
        %2871 = vrot.lane.b32.xlu0 %v2409, 32
        %v2872 = vpop.permute.xlu0 %2871
        %2873 = vrot.lane.b32.xlu0 %v2412, 32
        %v2874 = vpop.permute.xlu0 %2873
        %2875 = vrot.lane.b32.xlu0 %v2414, 32
        %v2876 = vpop.permute.xlu0 %2875
        %2877 = vrot.lane.b32.xlu0 %v2417, 32
        %v2878 = vpop.permute.xlu0 %2877
        %2879 = vrot.lane.b32.xlu0 %v2419, 32
        %v2880 = vpop.permute.xlu0 %2879
        %2881 = vrot.lane.b32.xlu0 %v2422, 32
        %v2882 = vpop.permute.xlu0 %2881
        %2883 = vrot.lane.b32.xlu0 %v2424, 32
        %v2884 = vpop.permute.xlu0 %2883
        %2885 = vrot.lane.b32.xlu0 %v2427, 32
        %v2886 = vpop.permute.xlu0 %2885
        %2887 = vrot.lane.b32.xlu0 %v2429, 32
        %v2888 = vpop.permute.xlu0 %2887
        %2889 = vrot.lane.b32.xlu0 %v2432, 32
        %v2890 = vpop.permute.xlu0 %2889
        %2891 = vrot.lane.b32.xlu0 %v2434, 32
        %v2892 = vpop.permute.xlu0 %2891
        %2893 = vrot.lane.b32.xlu0 %v2437, 32
        %v2894 = vpop.permute.xlu0 %2893
        %2895 = vrot.lane.b32.xlu0 %v2439, 32
        %v2896 = vpop.permute.xlu0 %2895
        %2897 = vrot.lane.b32.xlu0 %v2442, 32
        %v2898 = vpop.permute.xlu0 %2897
        %2899 = vrot.lane.b32.xlu0 %v2444, 32
        %v2900 = vpop.permute.xlu0 %2899
        %2901 = vrot.lane.b32.xlu0 %v2447, 32
        %v2902 = vpop.permute.xlu0 %2901
        %2903 = vrot.lane.b32.xlu0 %v2449, 32
        %v2904 = vpop.permute.xlu0 %2903
        %2905 = vrot.lane.b32.xlu0 %v2536, 32
        %v2906 = vpop.permute.xlu0 %2905
        %2907 = vrot.lane.b32.xlu0 %v2538, 32
        %v2908 = vpop.permute.xlu0 %2907
        %2941 = vrot.lane.b32.xlu0 %v2458, 40
        %v2942 = vpop.permute.xlu0 %2941
        %2943 = vrot.lane.b32.xlu0 %v2460, 40
        %v2944 = vpop.permute.xlu0 %2943
        %2945 = vrot.lane.b32.xlu0 %v2463, 40
        %v2946 = vpop.permute.xlu0 %2945
        %2947 = vrot.lane.b32.xlu0 %v2465, 40
        %v2948 = vpop.permute.xlu0 %2947
        %2949 = vrot.lane.b32.xlu0 %v2468, 40
        %v2950 = vpop.permute.xlu0 %2949
        %2951 = vrot.lane.b32.xlu0 %v2470, 40
        %v2952 = vpop.permute.xlu0 %2951
        %2953 = vrot.lane.b32.xlu0 %v2473, 40
        %v2954 = vpop.permute.xlu0 %2953
        %2955 = vrot.lane.b32.xlu0 %v2475, 40
        %v2956 = vpop.permute.xlu0 %2955
        %2957 = vrot.lane.b32.xlu0 %v2478, 40
        %v2958 = vpop.permute.xlu0 %2957
        %2959 = vrot.lane.b32.xlu0 %v2480, 40
        %v2960 = vpop.permute.xlu0 %2959
        %2961 = vrot.lane.b32.xlu0 %v2483, 40
        %v2962 = vpop.permute.xlu0 %2961
        %2963 = vrot.lane.b32.xlu0 %v2485, 40
        %v2964 = vpop.permute.xlu0 %2963
        %2965 = vrot.lane.b32.xlu0 %v2488, 40
        %v2966 = vpop.permute.xlu0 %2965
        %2967 = vrot.lane.b32.xlu0 %v2490, 40
        %v2968 = vpop.permute.xlu0 %2967
        %2969 = vrot.lane.b32.xlu0 %v2493, 40
        %v2970 = vpop.permute.xlu0 %2969
        %2971 = vrot.lane.b32.xlu0 %v2495, 40
        %v2972 = vpop.permute.xlu0 %2971
        %2973 = vrot.lane.b32.xlu0 %v2498, 40
        %v2974 = vpop.permute.xlu0 %2973
        %2975 = vrot.lane.b32.xlu0 %v2500, 40
        %v2976 = vpop.permute.xlu0 %2975
        %2977 = vrot.lane.b32.xlu0 %v2503, 40
        %v2978 = vpop.permute.xlu0 %2977
        %2979 = vrot.lane.b32.xlu0 %v2505, 40
        %v2980 = vpop.permute.xlu0 %2979
        %2981 = vrot.lane.b32.xlu0 %v2508, 40
        %v2982 = vpop.permute.xlu0 %2981
        %2983 = vrot.lane.b32.xlu0 %v2510, 40
        %v2984 = vpop.permute.xlu0 %2983
        %2985 = vrot.lane.b32.xlu0 %v2513, 40
        %v2986 = vpop.permute.xlu0 %2985
        %2987 = vrot.lane.b32.xlu0 %v2515, 40
        %v2988 = vpop.permute.xlu0 %2987
        %2989 = vrot.lane.b32.xlu0 %v2518, 40
        %v2990 = vpop.permute.xlu0 %2989
        %2991 = vrot.lane.b32.xlu0 %v2520, 40
        %v2992 = vpop.permute.xlu0 %2991
        %2993 = vrot.lane.b32.xlu0 %v2523, 40
        %v2994 = vpop.permute.xlu0 %2993
        %2995 = vrot.lane.b32.xlu0 %v2525, 40
        %v2996 = vpop.permute.xlu0 %2995
        %2997 = vrot.lane.b32.xlu0 %v2528, 40
        %v2998 = vpop.permute.xlu0 %2997
        %2999 = vrot.lane.b32.xlu0 %v2530, 40
        %v3000 = vpop.permute.xlu0 %2999
        %3001 = vrot.lane.b32.xlu0 %v2541, 40
        %v3002 = vpop.permute.xlu0 %3001
        %3003 = vrot.lane.b32.xlu0 %v2543, 40
        %v3004 = vpop.permute.xlu0 %3003
        %3037 = vrot.lane.b32.xlu0 %v2273, 48
        %v3038 = vpop.permute.xlu0 %3037
        %3039 = vrot.lane.b32.xlu0 %v2274, 48
        %v3040 = vpop.permute.xlu0 %3039
        %3041 = vrot.lane.b32.xlu0 %v2276, 48
        %v3042 = vpop.permute.xlu0 %3041
        %3043 = vrot.lane.b32.xlu0 %v2277, 48
        %v3044 = vpop.permute.xlu0 %3043
        %3045 = vrot.lane.b32.xlu0 %v2279, 48
        %v3046 = vpop.permute.xlu0 %3045
        %3047 = vrot.lane.b32.xlu0 %v2280, 48
        %v3048 = vpop.permute.xlu0 %3047
        %3049 = vrot.lane.b32.xlu0 %v2282, 48
        %v3050 = vpop.permute.xlu0 %3049
        %3051 = vrot.lane.b32.xlu0 %v2283, 48
        %v3052 = vpop.permute.xlu0 %3051
        %3053 = vrot.lane.b32.xlu0 %v2285, 48
        %v3054 = vpop.permute.xlu0 %3053
        %3055 = vrot.lane.b32.xlu0 %v2286, 48
        %v3056 = vpop.permute.xlu0 %3055
        %3057 = vrot.lane.b32.xlu0 %v2288, 48
        %v3058 = vpop.permute.xlu0 %3057
        %3059 = vrot.lane.b32.xlu0 %v2289, 48
        %v3060 = vpop.permute.xlu0 %3059
        %3061 = vrot.lane.b32.xlu0 %v2291, 48
        %v3062 = vpop.permute.xlu0 %3061
        %3063 = vrot.lane.b32.xlu0 %v2292, 48
        %v3064 = vpop.permute.xlu0 %3063
        %3065 = vrot.lane.b32.xlu0 %v2294, 48
        %v3066 = vpop.permute.xlu0 %3065
        %3067 = vrot.lane.b32.xlu0 %v2295, 48
        %v3068 = vpop.permute.xlu0 %3067
        %3069 = vrot.lane.b32.xlu0 %v2297, 48
        %v3070 = vpop.permute.xlu0 %3069
        %3071 = vrot.lane.b32.xlu0 %v2298, 48
        %v3072 = vpop.permute.xlu0 %3071
        %3073 = vrot.lane.b32.xlu0 %v2300, 48
        %v3074 = vpop.permute.xlu0 %3073
        %3075 = vrot.lane.b32.xlu0 %v2301, 48
        %v3076 = vpop.permute.xlu0 %3075
        %3077 = vrot.lane.b32.xlu0 %v2303, 48
        %v3078 = vpop.permute.xlu0 %3077
        %3079 = vrot.lane.b32.xlu0 %v2304, 48
        %v3080 = vpop.permute.xlu0 %3079
        %3081 = vrot.lane.b32.xlu0 %v2306, 48
        %v3082 = vpop.permute.xlu0 %3081
        %3083 = vrot.lane.b32.xlu0 %v2307, 48
        %v3084 = vpop.permute.xlu0 %3083
        %3085 = vrot.lane.b32.xlu0 %v2309, 48
        %v3086 = vpop.permute.xlu0 %3085
        %3087 = vrot.lane.b32.xlu0 %v2310, 48
        %v3088 = vpop.permute.xlu0 %3087
        %3089 = vrot.lane.b32.xlu0 %v2312, 48
        %v3090 = vpop.permute.xlu0 %3089
        %3091 = vrot.lane.b32.xlu0 %v2313, 48
        %v3092 = vpop.permute.xlu0 %3091
        %3093 = vrot.lane.b32.xlu0 %v2315, 48
        %v3094 = vpop.permute.xlu0 %3093
        %3095 = vrot.lane.b32.xlu0 %v2316, 48
        %v3096 = vpop.permute.xlu0 %3095
        %3097 = vrot.lane.b32.xlu0 %v2318, 48
        %v3098 = vpop.permute.xlu0 %3097
        %3099 = vrot.lane.b32.xlu0 %v2319, 48
        %v3100 = vpop.permute.xlu0 %3099
        %3133 = vrot.lane.b32.xlu0 %v2382, 56
        %v3134 = vpop.permute.xlu0 %3133
        %3135 = vrot.lane.b32.xlu0 %v2384, 56
        %v3136 = vpop.permute.xlu0 %3135
        %3137 = vrot.lane.b32.xlu0 %v2387, 56
        %v3138 = vpop.permute.xlu0 %3137
        %3139 = vrot.lane.b32.xlu0 %v2389, 56
        %v3140 = vpop.permute.xlu0 %3139
        %3141 = vrot.lane.b32.xlu0 %v2392, 56
        %v3142 = vpop.permute.xlu0 %3141
        %3143 = vrot.lane.b32.xlu0 %v2394, 56
        %v3144 = vpop.permute.xlu0 %3143
        %3145 = vrot.lane.b32.xlu0 %v2397, 56
        %v3146 = vpop.permute.xlu0 %3145
        %3147 = vrot.lane.b32.xlu0 %v2399, 56
        %v3148 = vpop.permute.xlu0 %3147
        %3149 = vrot.lane.b32.xlu0 %v2402, 56
        %v3150 = vpop.permute.xlu0 %3149
        %3151 = vrot.lane.b32.xlu0 %v2404, 56
        %v3152 = vpop.permute.xlu0 %3151
        %3153 = vrot.lane.b32.xlu0 %v2407, 56
        %v3154 = vpop.permute.xlu0 %3153
        %3155 = vrot.lane.b32.xlu0 %v2409, 56
        %v3156 = vpop.permute.xlu0 %3155
        %3157 = vrot.lane.b32.xlu0 %v2412, 56
        %v3158 = vpop.permute.xlu0 %3157
        %3159 = vrot.lane.b32.xlu0 %v2414, 56
        %v3160 = vpop.permute.xlu0 %3159
        %3161 = vrot.lane.b32.xlu0 %v2417, 56
        %v3162 = vpop.permute.xlu0 %3161
        %3163 = vrot.lane.b32.xlu0 %v2419, 56
        %v3164 = vpop.permute.xlu0 %3163
        %3165 = vrot.lane.b32.xlu0 %v2422, 56
        %v3166 = vpop.permute.xlu0 %3165
        %3167 = vrot.lane.b32.xlu0 %v2424, 56
        %v3168 = vpop.permute.xlu0 %3167
        %3169 = vrot.lane.b32.xlu0 %v2427, 56
        %v3170 = vpop.permute.xlu0 %3169
        %3171 = vrot.lane.b32.xlu0 %v2429, 56
        %v3172 = vpop.permute.xlu0 %3171
        %3173 = vrot.lane.b32.xlu0 %v2432, 56
        %v3174 = vpop.permute.xlu0 %3173
        %3175 = vrot.lane.b32.xlu0 %v2434, 56
        %v3176 = vpop.permute.xlu0 %3175
        %3177 = vrot.lane.b32.xlu0 %v2437, 56
        %v3178 = vpop.permute.xlu0 %3177
        %3179 = vrot.lane.b32.xlu0 %v2439, 56
        %v3180 = vpop.permute.xlu0 %3179
        %3181 = vrot.lane.b32.xlu0 %v2442, 56
        %v3182 = vpop.permute.xlu0 %3181
        %3183 = vrot.lane.b32.xlu0 %v2444, 56
        %v3184 = vpop.permute.xlu0 %3183
        %3185 = vrot.lane.b32.xlu0 %v2447, 56
        %v3186 = vpop.permute.xlu0 %3185
        %3187 = vrot.lane.b32.xlu0 %v2449, 56
        %v3188 = vpop.permute.xlu0 %3187
        %3189 = vrot.lane.b32.xlu0 %v2536, 56
        %v3190 = vpop.permute.xlu0 %3189
        %3191 = vrot.lane.b32.xlu0 %v2538, 56
        %v3192 = vpop.permute.xlu0 %3191
        %3193 = vrot.lane.b32.xlu0 %v2549, 56
        %v3194 = vpop.permute.xlu0 %3193
        %3195 = vrot.lane.b32.xlu0 %v2551, 56
        %v3196 = vpop.permute.xlu0 %3195
        %3229 = vrot.lane.b32.xlu0 %v2463, 64
        %v3230 = vpop.permute.xlu0 %3229
        %3231 = vrot.lane.b32.xlu0 %v2465, 64
        %v3232 = vpop.permute.xlu0 %3231
        %3233 = vrot.lane.b32.xlu0 %v2468, 64
        %v3234 = vpop.permute.xlu0 %3233
        %3235 = vrot.lane.b32.xlu0 %v2470, 64
        %v3236 = vpop.permute.xlu0 %3235
        %3237 = vrot.lane.b32.xlu0 %v2473, 64
        %v3238 = vpop.permute.xlu0 %3237
        %3239 = vrot.lane.b32.xlu0 %v2475, 64
        %v3240 = vpop.permute.xlu0 %3239
        %3241 = vrot.lane.b32.xlu0 %v2478, 64
        %v3242 = vpop.permute.xlu0 %3241
        %3243 = vrot.lane.b32.xlu0 %v2480, 64
        %v3244 = vpop.permute.xlu0 %3243
        %3245 = vrot.lane.b32.xlu0 %v2483, 64
        %v3246 = vpop.permute.xlu0 %3245
        %3247 = vrot.lane.b32.xlu0 %v2485, 64
        %v3248 = vpop.permute.xlu0 %3247
        %3249 = vrot.lane.b32.xlu0 %v2488, 64
        %v3250 = vpop.permute.xlu0 %3249
        %3251 = vrot.lane.b32.xlu0 %v2490, 64
        %v3252 = vpop.permute.xlu0 %3251
        %3253 = vrot.lane.b32.xlu0 %v2493, 64
        %v3254 = vpop.permute.xlu0 %3253
        %3255 = vrot.lane.b32.xlu0 %v2495, 64
        %v3256 = vpop.permute.xlu0 %3255
        %3257 = vrot.lane.b32.xlu0 %v2498, 64
        %v3258 = vpop.permute.xlu0 %3257
        %3259 = vrot.lane.b32.xlu0 %v2500, 64
        %v3260 = vpop.permute.xlu0 %3259
        %3261 = vrot.lane.b32.xlu0 %v2503, 64
        %v3262 = vpop.permute.xlu0 %3261
        %3263 = vrot.lane.b32.xlu0 %v2505, 64
        %v3264 = vpop.permute.xlu0 %3263
        %3265 = vrot.lane.b32.xlu0 %v2508, 64
        %v3266 = vpop.permute.xlu0 %3265
        %3267 = vrot.lane.b32.xlu0 %v2510, 64
        %v3268 = vpop.permute.xlu0 %3267
        %3269 = vrot.lane.b32.xlu0 %v2513, 64
        %v3270 = vpop.permute.xlu0 %3269
        %3271 = vrot.lane.b32.xlu0 %v2515, 64
        %v3272 = vpop.permute.xlu0 %3271
        %3273 = vrot.lane.b32.xlu0 %v2518, 64
        %v3274 = vpop.permute.xlu0 %3273
        %3275 = vrot.lane.b32.xlu0 %v2520, 64
        %v3276 = vpop.permute.xlu0 %3275
        %3277 = vrot.lane.b32.xlu0 %v2523, 64
        %v3278 = vpop.permute.xlu0 %3277
        %3279 = vrot.lane.b32.xlu0 %v2525, 64
        %v3280 = vpop.permute.xlu0 %3279
        %3281 = vrot.lane.b32.xlu0 %v2528, 64
        %v3282 = vpop.permute.xlu0 %3281
        %3283 = vrot.lane.b32.xlu0 %v2530, 64
        %v3284 = vpop.permute.xlu0 %3283
        %3285 = vrot.lane.b32.xlu0 %v2541, 64
        %v3286 = vpop.permute.xlu0 %3285
        %3287 = vrot.lane.b32.xlu0 %v2543, 64
        %v3288 = vpop.permute.xlu0 %3287
        %3289 = vrot.lane.b32.xlu0 %v2554, 64
        %v3290 = vpop.permute.xlu0 %3289
        %3291 = vrot.lane.b32.xlu0 %v2556, 64
        %v3292 = vpop.permute.xlu0 %3291
        %v3325 = vsel %vm275, %v2267, %v2558
        %v3326 = vsel %vm275, %v2268, %v2560
        %v3327 = vsel %vm275, %v2270, %v2562
        %v3328 = vsel %vm275, %v2271, %v2564
        %v3329 = vsel %vm275, %v2273, %v2566
        %v3330 = vsel %vm275, %v2274, %v2568
        %v3331 = vsel %vm275, %v2276, %v2570
        %v3332 = vsel %vm275, %v2277, %v2572
        %v3333 = vsel %vm275, %v2279, %v2574
        %v3334 = vsel %vm275, %v2280, %v2576
        %v3335 = vsel %vm275, %v2282, %v2578
        %v3336 = vsel %vm275, %v2283, %v2580
        %v3337 = vsel %vm275, %v2285, %v2582
        %v3338 = vsel %vm275, %v2286, %v2584
        %v3339 = vsel %vm275, %v2288, %v2586
        %v3340 = vsel %vm275, %v2289, %v2588
        %v3341 = vsel %vm275, %v2291, %v2590
        %v3342 = vsel %vm275, %v2292, %v2592
        %v3343 = vsel %vm275, %v2294, %v2594
        %v3344 = vsel %vm275, %v2295, %v2596
        %v3345 = vsel %vm275, %v2297, %v2598
        %v3346 = vsel %vm275, %v2298, %v2600
        %v3347 = vsel %vm275, %v2300, %v2602
        %v3348 = vsel %vm275, %v2301, %v2604
        %v3349 = vsel %vm275, %v2303, %v2606
        %v3350 = vsel %vm275, %v2304, %v2608
        %v3351 = vsel %vm275, %v2306, %v2610
        %v3352 = vsel %vm275, %v2307, %v2612
        %v3353 = vsel %vm275, %v2309, %v2614
        %v3354 = vsel %vm275, %v2310, %v2616
        %v3355 = vsel %vm275, %v2312, %v2618
        %v3356 = vsel %vm275, %v2313, %v2620
        %vm3357 = vcmask 130048
        %v3358 = vsel %vm3357, %v3325, %v2654
        %v3359 = vsel %vm3357, %v3326, %v2656
        %v3360 = vsel %vm3357, %v3327, %v2658
        %v3361 = vsel %vm3357, %v3328, %v2660
        %v3362 = vsel %vm3357, %v3329, %v2662
        %v3363 = vsel %vm3357, %v3330, %v2664
        %v3364 = vsel %vm3357, %v3331, %v2666
        %v3365 = vsel %vm3357, %v3332, %v2668
        %v3366 = vsel %vm3357, %v3333, %v2670
        %v3367 = vsel %vm3357, %v3334, %v2672
        %v3368 = vsel %vm3357, %v3335, %v2674
        %v3369 = vsel %vm3357, %v3336, %v2676
        %v3370 = vsel %vm3357, %v3337, %v2678
        %v3371 = vsel %vm3357, %v3338, %v2680
        %v3372 = vsel %vm3357, %v3339, %v2682
        %v3373 = vsel %vm3357, %v3340, %v2684
        %v3374 = vsel %vm3357, %v3341, %v2686
        %v3375 = vsel %vm3357, %v3342, %v2688
        %v3376 = vsel %vm3357, %v3343, %v2690
        %v3377 = vsel %vm3357, %v3344, %v2692
        %v3378 = vsel %vm3357, %v3345, %v2694
        %v3379 = vsel %vm3357, %v3346, %v2696
        %v3380 = vsel %vm3357, %v3347, %v2698
        %v3381 = vsel %vm3357, %v3348, %v2700
        %v3382 = vsel %vm3357, %v3349, %v2702
        %v3383 = vsel %vm3357, %v3350, %v2704
        %v3384 = vsel %vm3357, %v3351, %v2706
        %v3385 = vsel %vm3357, %v3352, %v2708
        %v3386 = vsel %vm3357, %v3353, %v2710
        %v3387 = vsel %vm3357, %v3354, %v2712
        %v3388 = vsel %vm3357, %v3355, %v2714
        %v3389 = vsel %vm3357, %v3356, %v2716
        %vm3390 = vcmask 195584
        %v3391 = vsel %vm3390, %v3358, %v2750
        %v3392 = vsel %vm3390, %v3359, %v2752
        %v3393 = vsel %vm3390, %v3360, %v2754
        %v3394 = vsel %vm3390, %v3361, %v2756
        %v3395 = vsel %vm3390, %v3362, %v2758
        %v3396 = vsel %vm3390, %v3363, %v2760
        %v3397 = vsel %vm3390, %v3364, %v2762
        %v3398 = vsel %vm3390, %v3365, %v2764
        %v3399 = vsel %vm3390, %v3366, %v2766
        %v3400 = vsel %vm3390, %v3367, %v2768
        %v3401 = vsel %vm3390, %v3368, %v2770
        %v3402 = vsel %vm3390, %v3369, %v2772
        %v3403 = vsel %vm3390, %v3370, %v2774
        %v3404 = vsel %vm3390, %v3371, %v2776
        %v3405 = vsel %vm3390, %v3372, %v2778
        %v3406 = vsel %vm3390, %v3373, %v2780
        %v3407 = vsel %vm3390, %v3374, %v2782
        %v3408 = vsel %vm3390, %v3375, %v2784
        %v3409 = vsel %vm3390, %v3376, %v2786
        %v3410 = vsel %vm3390, %v3377, %v2788
        %v3411 = vsel %vm3390, %v3378, %v2790
        %v3412 = vsel %vm3390, %v3379, %v2792
        %v3413 = vsel %vm3390, %v3380, %v2794
        %v3414 = vsel %vm3390, %v3381, %v2796
        %v3415 = vsel %vm3390, %v3382, %v2798
        %v3416 = vsel %vm3390, %v3383, %v2800
        %v3417 = vsel %vm3390, %v3384, %v2802
        %v3418 = vsel %vm3390, %v3385, %v2804
        %v3419 = vsel %vm3390, %v3386, %v2806
        %v3420 = vsel %vm3390, %v3387, %v2808
        %v3421 = vsel %vm3390, %v3388, %v2810
        %v3422 = vsel %vm3390, %v3389, %v2812
        %vm3423 = vcmask 261120
        %v3424 = vsel %vm3423, %v3391, %v2846
        %v3425 = vsel %vm3423, %v3392, %v2848
        %v3426 = vsel %vm3423, %v3393, %v2850
        %v3427 = vsel %vm3423, %v3394, %v2852
        %v3428 = vsel %vm3423, %v3395, %v2854
        %v3429 = vsel %vm3423, %v3396, %v2856
        %v3430 = vsel %vm3423, %v3397, %v2858
        %v3431 = vsel %vm3423, %v3398, %v2860
        %v3432 = vsel %vm3423, %v3399, %v2862
        %v3433 = vsel %vm3423, %v3400, %v2864
        %v3434 = vsel %vm3423, %v3401, %v2866
        %v3435 = vsel %vm3423, %v3402, %v2868
        %v3436 = vsel %vm3423, %v3403, %v2870
        %v3437 = vsel %vm3423, %v3404, %v2872
        %v3438 = vsel %vm3423, %v3405, %v2874
        %v3439 = vsel %vm3423, %v3406, %v2876
        %v3440 = vsel %vm3423, %v3407, %v2878
        %v3441 = vsel %vm3423, %v3408, %v2880
        %v3442 = vsel %vm3423, %v3409, %v2882
        %v3443 = vsel %vm3423, %v3410, %v2884
        %v3444 = vsel %vm3423, %v3411, %v2886
        %v3445 = vsel %vm3423, %v3412, %v2888
        %v3446 = vsel %vm3423, %v3413, %v2890
        %v3447 = vsel %vm3423, %v3414, %v2892
        %v3448 = vsel %vm3423, %v3415, %v2894
        %v3449 = vsel %vm3423, %v3416, %v2896
        %v3450 = vsel %vm3423, %v3417, %v2898
        %v3451 = vsel %vm3423, %v3418, %v2900
        %v3452 = vsel %vm3423, %v3419, %v2902
        %v3453 = vsel %vm3423, %v3420, %v2904
        %v3454 = vsel %vm3423, %v3421, %v2906
        %v3455 = vsel %vm3423, %v3422, %v2908
        %vm3456 = vcmask 326656
        %v3457 = vsel %vm3456, %v3424, %v2942
        %v3458 = vsel %vm3456, %v3425, %v2944
        %v3459 = vsel %vm3456, %v3426, %v2946
        %v3460 = vsel %vm3456, %v3427, %v2948
        %v3461 = vsel %vm3456, %v3428, %v2950
        %v3462 = vsel %vm3456, %v3429, %v2952
        %v3463 = vsel %vm3456, %v3430, %v2954
        %v3464 = vsel %vm3456, %v3431, %v2956
        %v3465 = vsel %vm3456, %v3432, %v2958
        %v3466 = vsel %vm3456, %v3433, %v2960
        %v3467 = vsel %vm3456, %v3434, %v2962
        %v3468 = vsel %vm3456, %v3435, %v2964
        %v3469 = vsel %vm3456, %v3436, %v2966
        %v3470 = vsel %vm3456, %v3437, %v2968
        %v3471 = vsel %vm3456, %v3438, %v2970
        %v3472 = vsel %vm3456, %v3439, %v2972
        %v3473 = vsel %vm3456, %v3440, %v2974
        %v3474 = vsel %vm3456, %v3441, %v2976
        %v3475 = vsel %vm3456, %v3442, %v2978
        %v3476 = vsel %vm3456, %v3443, %v2980
        %v3477 = vsel %vm3456, %v3444, %v2982
        %v3478 = vsel %vm3456, %v3445, %v2984
        %v3479 = vsel %vm3456, %v3446, %v2986
        %v3480 = vsel %vm3456, %v3447, %v2988
        %v3481 = vsel %vm3456, %v3448, %v2990
        %v3482 = vsel %vm3456, %v3449, %v2992
        %v3483 = vsel %vm3456, %v3450, %v2994
        %v3484 = vsel %vm3456, %v3451, %v2996
        %v3485 = vsel %vm3456, %v3452, %v2998
        %v3486 = vsel %vm3456, %v3453, %v3000
        %v3487 = vsel %vm3456, %v3454, %v3002
        %v3488 = vsel %vm3456, %v3455, %v3004
        %vm3489 = vcmask 392192
        %v3490 = vsel %vm3489, %v3457, %v3038
        %v3491 = vsel %vm3489, %v3458, %v3040
        %v3492 = vsel %vm3489, %v3459, %v3042
        %v3493 = vsel %vm3489, %v3460, %v3044
        %v3494 = vsel %vm3489, %v3461, %v3046
        %v3495 = vsel %vm3489, %v3462, %v3048
        %v3496 = vsel %vm3489, %v3463, %v3050
        %v3497 = vsel %vm3489, %v3464, %v3052
        %v3498 = vsel %vm3489, %v3465, %v3054
        %v3499 = vsel %vm3489, %v3466, %v3056
        %v3500 = vsel %vm3489, %v3467, %v3058
        %v3501 = vsel %vm3489, %v3468, %v3060
        %v3502 = vsel %vm3489, %v3469, %v3062
        %v3503 = vsel %vm3489, %v3470, %v3064
        %v3504 = vsel %vm3489, %v3471, %v3066
        %v3505 = vsel %vm3489, %v3472, %v3068
        %v3506 = vsel %vm3489, %v3473, %v3070
        %v3507 = vsel %vm3489, %v3474, %v3072
        %v3508 = vsel %vm3489, %v3475, %v3074
        %v3509 = vsel %vm3489, %v3476, %v3076
        %v3510 = vsel %vm3489, %v3477, %v3078
        %v3511 = vsel %vm3489, %v3478, %v3080
        %v3512 = vsel %vm3489, %v3479, %v3082
        %v3513 = vsel %vm3489, %v3480, %v3084
        %v3514 = vsel %vm3489, %v3481, %v3086
        %v3515 = vsel %vm3489, %v3482, %v3088
        %v3516 = vsel %vm3489, %v3483, %v3090
        %v3517 = vsel %vm3489, %v3484, %v3092
        %v3518 = vsel %vm3489, %v3485, %v3094
        %v3519 = vsel %vm3489, %v3486, %v3096
        %v3520 = vsel %vm3489, %v3487, %v3098
        %v3521 = vsel %vm3489, %v3488, %v3100
        %vm3522 = vcmask 457728
        %v3523 = vsel %vm3522, %v3490, %v3134
        %v3524 = vsel %vm3522, %v3491, %v3136
        %v3525 = vsel %vm3522, %v3492, %v3138
        %v3526 = vsel %vm3522, %v3493, %v3140
        %v3527 = vsel %vm3522, %v3494, %v3142
        %v3528 = vsel %vm3522, %v3495, %v3144
        %v3529 = vsel %vm3522, %v3496, %v3146
        %v3530 = vsel %vm3522, %v3497, %v3148
        %v3531 = vsel %vm3522, %v3498, %v3150
        %v3532 = vsel %vm3522, %v3499, %v3152
        %v3533 = vsel %vm3522, %v3500, %v3154
        %v3534 = vsel %vm3522, %v3501, %v3156
        %v3535 = vsel %vm3522, %v3502, %v3158
        %v3536 = vsel %vm3522, %v3503, %v3160
        %v3537 = vsel %vm3522, %v3504, %v3162
        %v3538 = vsel %vm3522, %v3505, %v3164
        %v3539 = vsel %vm3522, %v3506, %v3166
        %v3540 = vsel %vm3522, %v3507, %v3168
        %v3541 = vsel %vm3522, %v3508, %v3170
        %v3542 = vsel %vm3522, %v3509, %v3172
        %v3543 = vsel %vm3522, %v3510, %v3174
        %v3544 = vsel %vm3522, %v3511, %v3176
        %v3545 = vsel %vm3522, %v3512, %v3178
        %v3546 = vsel %vm3522, %v3513, %v3180
        %v3547 = vsel %vm3522, %v3514, %v3182
        %v3548 = vsel %vm3522, %v3515, %v3184
        %v3549 = vsel %vm3522, %v3516, %v3186
        %v3550 = vsel %vm3522, %v3517, %v3188
        %v3551 = vsel %vm3522, %v3518, %v3190
        %v3552 = vsel %vm3522, %v3519, %v3192
        %v3553 = vsel %vm3522, %v3520, %v3194
        %v3554 = vsel %vm3522, %v3521, %v3196
        %vm3555 = vcmask 523264
        %v3556 = vsel %vm3555, %v3523, %v3230
        %v3557 = vsel %vm3555, %v3524, %v3232
        %v3558 = vsel %vm3555, %v3525, %v3234
        %v3559 = vsel %vm3555, %v3526, %v3236
        %v3560 = vsel %vm3555, %v3527, %v3238
        %v3561 = vsel %vm3555, %v3528, %v3240
        %v3562 = vsel %vm3555, %v3529, %v3242
        %v3563 = vsel %vm3555, %v3530, %v3244
        %v3564 = vsel %vm3555, %v3531, %v3246
        %v3565 = vsel %vm3555, %v3532, %v3248
        %v3566 = vsel %vm3555, %v3533, %v3250
        %v3567 = vsel %vm3555, %v3534, %v3252
        %v3568 = vsel %vm3555, %v3535, %v3254
        %v3569 = vsel %vm3555, %v3536, %v3256
        %v3570 = vsel %vm3555, %v3537, %v3258
        %v3571 = vsel %vm3555, %v3538, %v3260
        %v3572 = vsel %vm3555, %v3539, %v3262
        %v3573 = vsel %vm3555, %v3540, %v3264
        %v3574 = vsel %vm3555, %v3541, %v3266
        %v3575 = vsel %vm3555, %v3542, %v3268
        %v3576 = vsel %vm3555, %v3543, %v3270
        %v3577 = vsel %vm3555, %v3544, %v3272
        %v3578 = vsel %vm3555, %v3545, %v3274
        %v3579 = vsel %vm3555, %v3546, %v3276
        %v3580 = vsel %vm3555, %v3547, %v3278
        %v3581 = vsel %vm3555, %v3548, %v3280
        %v3582 = vsel %vm3555, %v3549, %v3282
        %v3583 = vsel %vm3555, %v3550, %v3284
        %v3584 = vsel %vm3555, %v3551, %v3286
        %v3585 = vsel %vm3555, %v3552, %v3288
        %v3586 = vsel %vm3555, %v3553, %v3290
        %v3587 = vsel %vm3555, %v3554, %v3292
        %v3588 = vld [vmem:[%s4] sm:$0xff]
        %v3589 = vld [vmem:[%s4 + $0x8] sm:$0xff]
        %v3590 = vld [vmem:[%s4 + $0x10] sm:$0xff]
        %v3591 = vld [vmem:[%s4 + $0x18] sm:$0xff]
        %v3592 = vld [vmem:[%s4 + $0x20] sm:$0xff]
        %v3593 = vld [vmem:[%s4 + $0x28] sm:$0xff]
        %v3594 = vld [vmem:[%s4 + $0x30] sm:$0xff]
        %v3595 = vld [vmem:[%s4 + $0x38] sm:$0xff]
        %v3596 = vld [vmem:[%s4 + $0x40] sm:$0xff]
        %vm3597 = vcmask 588800
        %v3599 = vsel %vm3597, %v3556, 0
        %v3602 = vsel %vm3597, %v3557, 0
        %v3605 = vsel %vm3597, %v3558, 0
        %v3608 = vsel %vm3597, %v3559, 0
        %v3611 = vsel %vm3597, %v3560, 0
        %v3614 = vsel %vm3597, %v3561, 0
        %v3617 = vsel %vm3597, %v3562, 0
        %v3620 = vsel %vm3597, %v3563, 0
        %v3623 = vsel %vm3597, %v3564, 0
        %v3626 = vsel %vm3597, %v3565, 0
        %v3629 = vsel %vm3597, %v3566, 0
        %v3632 = vsel %vm3597, %v3567, 0
        %v3635 = vsel %vm3597, %v3568, 0
        %v3638 = vsel %vm3597, %v3569, 0
        %v3641 = vsel %vm3597, %v3570, 0
        %v3644 = vsel %vm3597, %v3571, 0
        %v3647 = vsel %vm3597, %v3572, 0
        %v3650 = vsel %vm3597, %v3573, 0
        %v3653 = vsel %vm3597, %v3574, 0
        %v3656 = vsel %vm3597, %v3575, 0
        %v3659 = vsel %vm3597, %v3576, 0
        %v3662 = vsel %vm3597, %v3577, 0
        %v3665 = vsel %vm3597, %v3578, 0
        %v3668 = vsel %vm3597, %v3579, 0
        %v3671 = vsel %vm3597, %v3580, 0
        %v3674 = vsel %vm3597, %v3581, 0
        %v3677 = vsel %vm3597, %v3582, 0
        %v3680 = vsel %vm3597, %v3583, 0
        %v3683 = vsel %vm3597, %v3584, 0
        %v3686 = vsel %vm3597, %v3585, 0
        %v3689 = vsel %vm3597, %v3586, 0
        %v3692 = vsel %vm3597, %v3587, 0
        %3694 = vmatprep.subr.mxu0 0.0
        %3695 = vmatpush1.msra.mxu0 0.0
        %3696 = vmatprep.subr.mxu0 0.0
        %3697 = vmatpush1.msra.mxu0 0.0
        %3698 = vmatprep.subr.mxu0 0.0
        %3699 = vmatpush1.msra.mxu0 0.0
        %3700 = vmatprep.subr.mxu0 0.0
        %3701 = vmatpush1.msra.mxu0 0.0
        %3702 = vmatprep.subr.mxu0 0.0
        %3703 = vmatpush1.msra.mxu0 0.0
        %3704 = vmatprep.subr.mxu0 0.0
        %3705 = vmatpush1.msra.mxu0 0.0
        %3706 = vmatprep.subr.mxu0 0.0
        %3707 = vmatpush1.msra.mxu0 0.0
        %3708 = vmatprep.subr.mxu0 0.0
        %3709 = vmatpush1.msra.mxu0 %v3596
        %3710 = vmatprep.subr.mxu0 0.0
        %3711 = vmatpush1.msra.mxu0 %v3595
        %3712 = vmatprep.subr.mxu0 0.0
        %3713 = vmatpush1.msra.mxu0 %v3594
        %3714 = vmatprep.subr.mxu0 0.0
        %3715 = vmatpush1.msra.mxu0 %v3593
        %3716 = vmatprep.subr.mxu0 0.0
        %3717 = vmatpush1.msra.mxu0 %v3592
        %3718 = vmatprep.subr.mxu0 0.0
        %3719 = vmatpush1.msra.mxu0 %v3591
        %3720 = vmatprep.subr.mxu0 0.0
        %3721 = vmatpush1.msra.mxu0 %v3590
        %3722 = vmatprep.subr.mxu0 0.0
        %3723 = vmatpush1.msra.mxu0 %v3589
        %3724 = vmatprep.subr.mxu0 0.0
        %3725 = vmatpush1.msra.mxu0 %v3588
        %3726 = vmatprep.subr.mxu0 0.0
        %3727 = vmatpush2.msra.mxu0 0.0
        %3728 = vmatprep.subr.mxu0 0.0
        %3729 = vmatpush2.msra.mxu0 0.0
        %3730 = vmatprep.subr.mxu0 0.0
        %3731 = vmatpush2.msra.mxu0 0.0
        %3732 = vmatprep.subr.mxu0 0.0
        %3733 = vmatpush2.msra.mxu0 0.0
        %3734 = vmatprep.subr.mxu0 0.0
        %3735 = vmatpush2.msra.mxu0 0.0
        %3736 = vmatprep.subr.mxu0 0.0
        %3737 = vmatpush2.msra.mxu0 0.0
        %3738 = vmatprep.subr.mxu0 0.0
        %3739 = vmatpush2.msra.mxu0 0.0
        %3740 = vmatprep.subr.mxu0 0.0
        %3741 = vmatpush2.msra.mxu0 0.0
        %3742 = vmatprep.subr.mxu0 0.0
        %3743 = vmatpush2.msra.mxu0 0.0
        %3744 = vmatprep.subr.mxu0 0.0
        %3745 = vmatpush2.msra.mxu0 0.0
        %3746 = vmatprep.subr.mxu0 0.0
        %3747 = vmatpush2.msra.mxu0 0.0
        %3748 = vmatprep.subr.mxu0 0.0
        %3749 = vmatpush2.msra.mxu0 0.0
        %3750 = vmatprep.subr.mxu0 0.0
        %3751 = vmatpush2.msra.mxu0 0.0
        %3752 = vmatprep.subr.mxu0 0.0
        %3753 = vmatpush2.msra.mxu0 0.0
        %3754 = vmatprep.subr.mxu0 0.0
        %3755 = vmatpush2.msra.mxu0 0.0
        %3756 = vmatprep.subr.mxu0 0.0
        %3757 = vmatpush2.msra.mxu0 0.0
        %3758 = vmatprep.mubr.f32.mxu0 0.0
        %3759 = vmatmul.mubr.f32.gmra.mxu0 %v3599
        %v3760 = vpop.f32.mrf.mxu0
        %v3761 = vadd.f32 0.0, %v3760
        %v3762 = vpop.f32.mrf.mxu0
        %3763 = vmatprep.mubr.f32.mxu0 0.0
        %3764 = vmatmul.mubr.f32.gmra.mxu0 %v3602
        %v3765 = vpop.f32.mrf.mxu0
        %v3766 = vadd.f32 0.0, %v3765
        %v3767 = vpop.f32.mrf.mxu0
        %3768 = vmatprep.mubr.f32.mxu0 0.0
        %3769 = vmatmul.mubr.f32.gmra.mxu0 %v3605
        %v3770 = vpop.f32.mrf.mxu0
        %v3771 = vadd.f32 0.0, %v3770
        %v3772 = vpop.f32.mrf.mxu0
        %3773 = vmatprep.mubr.f32.mxu0 0.0
        %3774 = vmatmul.mubr.f32.gmra.mxu0 %v3608
        %v3775 = vpop.f32.mrf.mxu0
        %v3776 = vadd.f32 0.0, %v3775
        %v3777 = vpop.f32.mrf.mxu0
        %3778 = vmatprep.mubr.f32.mxu0 0.0
        %3779 = vmatmul.mubr.f32.gmra.mxu0 %v3611
        %v3780 = vpop.f32.mrf.mxu0
        %v3781 = vadd.f32 0.0, %v3780
        %v3782 = vpop.f32.mrf.mxu0
        %3783 = vmatprep.mubr.f32.mxu0 0.0
        %3784 = vmatmul.mubr.f32.gmra.mxu0 %v3614
        %v3785 = vpop.f32.mrf.mxu0
        %v3786 = vadd.f32 0.0, %v3785
        %v3787 = vpop.f32.mrf.mxu0
        %3788 = vmatprep.mubr.f32.mxu0 0.0
        %3789 = vmatmul.mubr.f32.gmra.mxu0 %v3617
        %v3790 = vpop.f32.mrf.mxu0
        %v3791 = vadd.f32 0.0, %v3790
        %v3792 = vpop.f32.mrf.mxu0
        %3793 = vmatprep.mubr.f32.mxu0 0.0
        %3794 = vmatmul.mubr.f32.gmra.mxu0 %v3620
        %v3795 = vpop.f32.mrf.mxu0
        %v3796 = vadd.f32 0.0, %v3795
        %v3797 = vpop.f32.mrf.mxu0
        %3798 = vmatprep.mubr.f32.mxu0 0.0
        %3799 = vmatmul.mubr.f32.gmra.mxu0 %v3623
        %v3800 = vpop.f32.mrf.mxu0
        %v3801 = vadd.f32 0.0, %v3800
        %v3802 = vpop.f32.mrf.mxu0
        %3803 = vmatprep.mubr.f32.mxu0 0.0
        %3804 = vmatmul.mubr.f32.gmra.mxu0 %v3626
        %v3805 = vpop.f32.mrf.mxu0
        %v3806 = vadd.f32 0.0, %v3805
        %v3807 = vpop.f32.mrf.mxu0
        %3808 = vmatprep.mubr.f32.mxu0 0.0
        %3809 = vmatmul.mubr.f32.gmra.mxu0 %v3629
        %v3810 = vpop.f32.mrf.mxu0
        %v3811 = vadd.f32 0.0, %v3810
        %v3812 = vpop.f32.mrf.mxu0
        %3813 = vmatprep.mubr.f32.mxu0 0.0
        %3814 = vmatmul.mubr.f32.gmra.mxu0 %v3632
        %v3815 = vpop.f32.mrf.mxu0
        %v3816 = vadd.f32 0.0, %v3815
        %v3817 = vpop.f32.mrf.mxu0
        %3818 = vmatprep.mubr.f32.mxu0 0.0
        %3819 = vmatmul.mubr.f32.gmra.mxu0 %v3635
        %v3820 = vpop.f32.mrf.mxu0
        %v3821 = vadd.f32 0.0, %v3820
        %v3822 = vpop.f32.mrf.mxu0
        %3823 = vmatprep.mubr.f32.mxu0 0.0
        %3824 = vmatmul.mubr.f32.gmra.mxu0 %v3638
        %v3825 = vpop.f32.mrf.mxu0
        %v3826 = vadd.f32 0.0, %v3825
        %v3827 = vpop.f32.mrf.mxu0
        %3828 = vmatprep.mubr.f32.mxu0 0.0
        %3829 = vmatmul.mubr.f32.gmra.mxu0 %v3641
        %v3830 = vpop.f32.mrf.mxu0
        %v3831 = vadd.f32 0.0, %v3830
        %v3832 = vpop.f32.mrf.mxu0
        %3833 = vmatprep.mubr.f32.mxu0 0.0
        %3834 = vmatmul.mubr.f32.gmra.mxu0 %v3644
        %v3835 = vpop.f32.mrf.mxu0
        %v3836 = vadd.f32 0.0, %v3835
        %v3837 = vpop.f32.mrf.mxu0
        %3838 = vmatprep.mubr.f32.mxu0 0.0
        %3839 = vmatmul.mubr.f32.gmra.mxu0 %v3647
        %v3840 = vpop.f32.mrf.mxu0
        %v3841 = vadd.f32 0.0, %v3840
        %v3842 = vpop.f32.mrf.mxu0
        %3843 = vmatprep.mubr.f32.mxu0 0.0
        %3844 = vmatmul.mubr.f32.gmra.mxu0 %v3650
        %v3845 = vpop.f32.mrf.mxu0
        %v3846 = vadd.f32 0.0, %v3845
        %v3847 = vpop.f32.mrf.mxu0
        %3848 = vmatprep.mubr.f32.mxu0 0.0
        %3849 = vmatmul.mubr.f32.gmra.mxu0 %v3653
        %v3850 = vpop.f32.mrf.mxu0
        %v3851 = vadd.f32 0.0, %v3850
        %v3852 = vpop.f32.mrf.mxu0
        %3853 = vmatprep.mubr.f32.mxu0 0.0
        %3854 = vmatmul.mubr.f32.gmra.mxu0 %v3656
        %v3855 = vpop.f32.mrf.mxu0
        %v3856 = vadd.f32 0.0, %v3855
        %v3857 = vpop.f32.mrf.mxu0
        %3858 = vmatprep.mubr.f32.mxu0 0.0
        %3859 = vmatmul.mubr.f32.gmra.mxu0 %v3659
        %v3860 = vpop.f32.mrf.mxu0
        %v3861 = vadd.f32 0.0, %v3860
        %v3862 = vpop.f32.mrf.mxu0
        %3863 = vmatprep.mubr.f32.mxu0 0.0
        %3864 = vmatmul.mubr.f32.gmra.mxu0 %v3662
        %v3865 = vpop.f32.mrf.mxu0
        %v3866 = vadd.f32 0.0, %v3865
        %v3867 = vpop.f32.mrf.mxu0
        %3868 = vmatprep.mubr.f32.mxu0 0.0
        %3869 = vmatmul.mubr.f32.gmra.mxu0 %v3665
        %v3870 = vpop.f32.mrf.mxu0
        %v3871 = vadd.f32 0.0, %v3870
        %v3872 = vpop.f32.mrf.mxu0
        %3873 = vmatprep.mubr.f32.mxu0 0.0
        %3874 = vmatmul.mubr.f32.gmra.mxu0 %v3668
        %v3875 = vpop.f32.mrf.mxu0
        %v3876 = vadd.f32 0.0, %v3875
        %v3877 = vpop.f32.mrf.mxu0
        %3878 = vmatprep.mubr.f32.mxu0 0.0
        %3879 = vmatmul.mubr.f32.gmra.mxu0 %v3671
        %v3880 = vpop.f32.mrf.mxu0
        %v3881 = vadd.f32 0.0, %v3880
        %v3882 = vpop.f32.mrf.mxu0
        %3883 = vmatprep.mubr.f32.mxu0 0.0
        %3884 = vmatmul.mubr.f32.gmra.mxu0 %v3674
        %v3885 = vpop.f32.mrf.mxu0
        %v3886 = vadd.f32 0.0, %v3885
        %v3887 = vpop.f32.mrf.mxu0
        %3888 = vmatprep.mubr.f32.mxu0 0.0
        %3889 = vmatmul.mubr.f32.gmra.mxu0 %v3677
        %v3890 = vpop.f32.mrf.mxu0
        %v3891 = vadd.f32 0.0, %v3890
        %v3892 = vpop.f32.mrf.mxu0
        %3893 = vmatprep.mubr.f32.mxu0 0.0
        %3894 = vmatmul.mubr.f32.gmra.mxu0 %v3680
        %v3895 = vpop.f32.mrf.mxu0
        %v3896 = vadd.f32 0.0, %v3895
        %v3897 = vpop.f32.mrf.mxu0
        %3898 = vmatprep.mubr.f32.mxu0 0.0
        %3899 = vmatmul.mubr.f32.gmra.mxu0 %v3683
        %v3900 = vpop.f32.mrf.mxu0
        %v3901 = vadd.f32 0.0, %v3900
        %v3902 = vpop.f32.mrf.mxu0
        %3903 = vmatprep.mubr.f32.mxu0 0.0
        %3904 = vmatmul.mubr.f32.gmra.mxu0 %v3686
        %v3905 = vpop.f32.mrf.mxu0
        %v3906 = vadd.f32 0.0, %v3905
        %v3907 = vpop.f32.mrf.mxu0
        %3908 = vmatprep.mubr.f32.mxu0 0.0
        %3909 = vmatmul.mubr.f32.gmra.mxu0 %v3689
        %v3910 = vpop.f32.mrf.mxu0
        %v3911 = vadd.f32 0.0, %v3910
        %v3912 = vpop.f32.mrf.mxu0
        %3913 = vmatprep.mubr.f32.mxu0 0.0
        %3914 = vmatmul.mubr.f32.gmra.mxu0 %v3692
        %v3915 = vpop.f32.mrf.mxu0
        %v3916 = vadd.f32 0.0, %v3915
        %v3917 = vpop.f32.mrf.mxu0
        %3918 = vdwg.mxu0
        %3919 = vxpose.xlu0.b32.start [1/16] %v3761, 128
        %3920 = vxpose.xlu0.b32.cont [2/16] %v3766, 128
        %3921 = vxpose.xlu0.b32.cont [3/16] %v3771, 128
        %3922 = vxpose.xlu0.b32.cont [4/16] %v3776, 128
        %3923 = vxpose.xlu0.b32.cont [5/16] %v3781, 128
        %3924 = vxpose.xlu0.b32.cont [6/16] %v3786, 128
        %3925 = vxpose.xlu0.b32.cont [7/16] %v3791, 128
        %3926 = vxpose.xlu0.b32.cont [8/16] %v3796, 128
        %3927 = vxpose.xlu0.b32.cont [9/16] %v3801, 128
        %3928 = vxpose.xlu0.b32.cont [10/16] %v3806, 128
        %3929 = vxpose.xlu0.b32.cont [11/16] %v3811, 128
        %3930 = vxpose.xlu0.b32.cont [12/16] %v3816, 128
        %3931 = vxpose.xlu0.b32.cont [13/16] %v3821, 128
        %3932 = vxpose.xlu0.b32.cont [14/16] %v3826, 128
        %3933 = vxpose.xlu0.b32.cont [15/16] %v3831, 128
        %3934 = vxpose.xlu0.b32.end [16/16] %v3836, 128
        %v3935 = vpop.trf.xlu0
        %v3936 = vpop.trf.xlu0
        %v3937 = vpop.trf.xlu0
        %v3938 = vpop.trf.xlu0
        %v3939 = vpop.trf.xlu0
        %v3940 = vpop.trf.xlu0
        %v3941 = vpop.trf.xlu0
        %v3942 = vpop.trf.xlu0
        %v3943 = vpop.trf.xlu0
        %v3944 = vpop.trf.xlu0
        %v3945 = vpop.trf.xlu0
        %v3946 = vpop.trf.xlu0
        %v3947 = vpop.trf.xlu0
        %v3948 = vpop.trf.xlu0
        %v3949 = vpop.trf.xlu0
        %v3950 = vpop.trf.xlu0
        %3951 = vxpose.xlu0.b32.start [1/16] %v3841, 128
        %3952 = vxpose.xlu0.b32.cont [2/16] %v3846, 128
        %3953 = vxpose.xlu0.b32.cont [3/16] %v3851, 128
        %3954 = vxpose.xlu0.b32.cont [4/16] %v3856, 128
        %3955 = vxpose.xlu0.b32.cont [5/16] %v3861, 128
        %3956 = vxpose.xlu0.b32.cont [6/16] %v3866, 128
        %3957 = vxpose.xlu0.b32.cont [7/16] %v3871, 128
        %3958 = vxpose.xlu0.b32.cont [8/16] %v3876, 128
        %3959 = vxpose.xlu0.b32.cont [9/16] %v3881, 128
        %3960 = vxpose.xlu0.b32.cont [10/16] %v3886, 128
        %3961 = vxpose.xlu0.b32.cont [11/16] %v3891, 128
        %3962 = vxpose.xlu0.b32.cont [12/16] %v3896, 128
        %3963 = vxpose.xlu0.b32.cont [13/16] %v3901, 128
        %3964 = vxpose.xlu0.b32.cont [14/16] %v3906, 128
        %3965 = vxpose.xlu0.b32.cont [15/16] %v3911, 128
        %3966 = vxpose.xlu0.b32.end [16/16] %v3916, 128
        %v3967 = vpop.trf.xlu0
        %v3968 = vpop.trf.xlu0
        %v3969 = vpop.trf.xlu0
        %v3970 = vpop.trf.xlu0
        %v3971 = vpop.trf.xlu0
        %v3972 = vpop.trf.xlu0
        %v3973 = vpop.trf.xlu0
        %v3974 = vpop.trf.xlu0
        %v3975 = vpop.trf.xlu0
        %v3976 = vpop.trf.xlu0
        %v3977 = vpop.trf.xlu0
        %v3978 = vpop.trf.xlu0
        %v3979 = vpop.trf.xlu0
        %v3980 = vpop.trf.xlu0
        %v3981 = vpop.trf.xlu0
        %v3982 = vpop.trf.xlu0
        %v3983 = vld [vmem:[%s5] sm:$0xf]
        %3985 = vset.pattern.permute.xlu0 0
        %3986 = vperm.xlu0 %3985, %v3983
        %v3987 = vpop.permute.xlu0 %3986
        %v3989 = vadd.f32 %v3935, %v3987
        %v3990 = vadd.f32 %v3967, %v3987
        %v3991 = vmax.f32 %v3989, 0.0
        %v3992 = vmax.f32 %v3990, 0.0
        %v3995 = vcombine.low %v3991, %v3992
        %3997 = vst [vmem:[%s259] sm:$0xff] %v3995
        %s3998 = sand.u32 %s164, 1
        %s3999 = scalar_lea.sflag [#allocation3], %s3998
        %s4000 = sand.u32 %s164, 1
        %s4001 = smul.addr %s4000, 8
        %s4002 = scalar_lea.vmem [#allocation2], %s4001
        // Predicated region
        $region45: #{tpu_custom_call.1} parent=43 // pred_check
          %p4003 = pneg %p174
        $region46: #{tpu_custom_call.1} parent=43 // pred_check_branch
          %4005 = sbr.rel (%p4003) target = $region48
        $region47: #{tpu_custom_call.1} parent=43 // pred_region
          %s4007 = ssub.s32 128, 128
          %4008 = vsyncadd %s3999, %s4007
          %s4009 = smul.addr %s20, 2
          %s4010 = smul.addr %s4009, 64
          %s4011 = scalar_lea.hbm %s6, %s4010
          %s4013 = sshll.u32 %s4002, 4
          %s4014 = int_to_ptr.vmem [resolvable:$true] %s4013
          %4016 = dma.vmem_to_hbm [thread:$0]  %s4014, 128, %s4011, %s3999
        $region48: #{tpu_custom_call.1} parent=43 // pred_fallthru
          _
      $region44: #{tpu_custom_call.1} parent=5 // pred_fallthru
        _
      %p4017 = scmp.le.s32.totalorder 2, %s15
      // Predicated region
      $region49: #{tpu_custom_call.1} parent=5 // pred_check
        %p4018 = pneg %p4017
      $region50: #{tpu_custom_call.1} parent=5 // pred_check_branch
        %4020 = sbr.rel (%p4018) target = $region52
      $region51: #{tpu_custom_call.1} parent=5 // pred_region
        %s4021 = ssub.s32 %s15, 2
        // Predicated region
        $region53: #{tpu_custom_call.1} parent=51 // pred_check
          %p4022 = pneg %p180
        $region54: #{tpu_custom_call.1} parent=51 // pred_check_branch
          %4024 = sbr.rel (%p4022) target = $region56
        $region55: #{tpu_custom_call.1} parent=51 // pred_region
          %s4025 = sand.u32 %s165, 1
          %s4026 = scalar_lea.sflag [#allocation3], %s4025
          %s4027 = sand.u32 %s165, 1
          %s4028 = smul.addr %s4027, 8
          %s4029 = scalar_lea.vmem [#allocation2], %s4028
          %4030 = dma.done %s4026, 128
        $region56: #{tpu_custom_call.1} parent=51 // pred_fallthru
          _
      $region52: #{tpu_custom_call.1} parent=5 // pred_fallthru
        _
    $region6: #{tpu_custom_call.1} parent=1 // loop_footer
      %s19 = sadd.s32 1, %s15
    $region7: #{tpu_custom_call.1} parent=1 // loop_footer_branch
      %14 = sbr.rel target = $region3
    $region8: #{tpu_custom_call.1} parent=1 // loop_exit
      _
    %4031 = vsyncpa [#allocation3], 1
    %s4032 = scalar_lea.sflag [#allocation3], 1
    %4033 = vsyncpa %s4032, 1

</llo_original>
